<compile_context>
chip_gen: v5e
topology: v5e:2x2
jax: 0.10.0
libtpu: 0.0.40
codegen_flags: <defaults>
</compile_context>

<pallas_src>
import numpy as np
import jax
import jax.numpy as jnp
from jax.experimental import pallas as pl
from jax.experimental.pallas import tpu as pltpu


# ----------------------------------------------------------------------------
# Glue: Gaussian (derivative) kernels and dense 1-D conv matrices (boundary
# conditions baked in), so the in-kernel convolutions become MXU matmuls.
# ----------------------------------------------------------------------------
def _gaussian_kernels(sigma, truncate=4.0):
    r = int(truncate * float(sigma) + 0.5)
    k = np.arange(-r, r + 1, dtype=np.float64)
    g = np.exp(-0.5 * (k / float(sigma)) ** 2)
    g /= g.sum()
    dg = k * g
    dg /= np.sum(k * dg)  # exact unit response on a linear ramp
    return g, dg, r


def _conv_matrix(n, ker, r, mode):
    a = np.zeros((n, n), dtype=np.float64)
    rows = np.arange(n)
    for off in range(-r, r + 1):
        idx = rows + off
        if mode == "circular":
            idx = idx % n
        elif mode == "replicate":
            idx = np.clip(idx, 0, n - 1)
        else:
            raise ValueError(mode)
        np.add.at(a, (rows, idx), ker[off + r])
    return a


# ----------------------------------------------------------------------------
# Pallas kernel factory (v_model weights baked in as compile-time constants).
# ----------------------------------------------------------------------------
def _make_kernel(w, Y, X):
    w = np.asarray(w, dtype=np.float64)
    assert w.shape == (2, 5)
    NF = 7  # gradient fields: m00, m01, m10, m11, s, v0, v1
    NO = 5  # output fields:   mdot00, mdot01, mdot10, mdot11, sdot
    f32 = jnp.float32
    bf16 = jnp.bfloat16

    def kernel(y_ref, yflip_ref, l_ref, sxt_ref, dxt_ref, sxtp_ref, ydot_ref,
               vslab, g_ref, dyrows, dxrows, ddy_ref, ddx_ref, pslab, prows):

        def mm(a, b):
            # DEFAULT MXU precision: bf16 operands, f32 accumulation.
            return jnp.dot(a, b, preferred_element_type=f32)

        def ych(c):    # channel c of y, promoted to f32 (VPU math stays f32)
            return y_ref[:, c * X:(c + 1) * X].astype(f32)

        def yfch(c):   # channel c of the DV-flipped state
            return yflip_ref[:, c * X:(c + 1) * X].astype(f32)

        # ---- v_model (1x1 channel mix, VPU) + get_velocity DV symmetrization ----
        # flip_DV(v)[i] = sum_c w[i,c] * flip_DV(y)[c]  (flip folded through the
        # pointwise-linear v_model; flipped state is an input, no in-kernel reverse).
        v0 = None
        v1 = None
        for c in range(5):
            a = ych(c)
            b = yfch(c)
            t0 = (0.5 * float(w[0, c])) * (a - b)   # DV component: 0.5*(v - flip(v))
            t1 = (0.5 * float(w[1, c])) * (a + b)   # AP component: 0.5*(v + flip(v))
            v0 = t0 if v0 is None else v0 + t0
            v1 = t1 if v1 is None else v1 + t1
        vslab[:, :X] = v0.astype(bf16)
        vslab[:, X:] = v1.astype(bf16)

        # ---- CovariantEmbryoGradient, batched over 7 fields ----
        # left stage: two matmuls straight off the lane-stacked slabs (no copy fill)
        g_ref[:, :5 * X] = mm(l_ref[...], y_ref[...]).astype(bf16)   # [Dy;Sy]@[m,s]
        g_ref[:, 5 * X:] = mm(l_ref[...], vslab[...]).astype(bf16)   # [Dy;Sy]@[v0,v1]

        # relayout lane-stacked -> row-stacked, interleaved with the right matmuls
        for k in range(NF):
            dyrows[k * Y:(k + 1) * Y, :] = g_ref[:Y, k * X:(k + 1) * X]   # Dy@f_k
        ddy_ref[...] = mm(dyrows[...], sxt_ref[...])                      # d/dy field_k
        for k in range(NF):                                               # overlaps ddy
            dxrows[k * Y:(k + 1) * Y, :] = g_ref[Y:, k * X:(k + 1) * X]   # Sy@f_k
        ddx_ref[...] = mm(dxrows[...], dxt_ref[...])                      # d/dx field_k

        def gy(k):
            return ddy_ref[k * Y:(k + 1) * Y, :]

        def gx(k):
            return ddx_ref[k * Y:(k + 1) * Y, :]

        # ---- strain-rate trace and vorticity (O antisymmetric: diag 0, O01 = -O10) ----
        trE = gy(5) + gx(6)                 # d_y v0 + d_x v1
        wv = -0.5 * (gx(5) - gy(6))         # O[0][1]

        # ---- rhs_WT coefficients (gamma_dv = [[1,0],[0,0]]) ----
        s = ych(4)
        trm = ych(0) + ych(3)
        rhs_c = (-(0.066 - 0.061 * s)
                 + (0.489 + 0.318 * s) * trE
                 + (0.564 - 0.393 * s) * trm)
        k3trm = (0.047 - 0.037 * s) * trm   # only enters the (0,0) component

        # ---- mdot_ij = -(advection + corotation) + rhs ; fields re-read from slabs ----
        v0 = vslab[:, :X].astype(f32)
        v1 = vslab[:, X:].astype(f32)

        com00 = wv * (ych(1) + ych(2))                     # O.m - m.O, (0,0) block
        md = -(v0 * gy(0) + v1 * gx(0) + com00) + rhs_c * ych(0) + k3trm
        pslab[:, 0:X] = md.astype(bf16)

        com01 = wv * (ych(3) - ych(0))                     # (0,1) and (1,0) blocks
        md = -(v0 * gy(1) + v1 * gx(1) + com01) + rhs_c * ych(1)
        pslab[:, X:2 * X] = md.astype(bf16)
        md = -(v0 * gy(2) + v1 * gx(2) + com01) + rhs_c * ych(2)
        pslab[:, 2 * X:3 * X] = md.astype(bf16)

        md = -(v0 * gy(3) + v1 * gx(3) - com00) + rhs_c * ych(3)   # (1,1): com = -com00
        pslab[:, 3 * X:4 * X] = md.astype(bf16)

        sdot = -(v0 * gy(4) + v1 * gx(4))                  # sdot = -v . grad(s)
        pslab[:, 4 * X:5 * X] = sdot.astype(bf16)

        # ---- postprocess: pole mask folded into SxT_post (mask-then-smooth) ----
        pslab[...] = mm(l_ref[Y:, :], pslab[...]).astype(bf16)   # Sy @ outputs (reuse pslab)
        for k in range(NO):
            prows[k * Y:(k + 1) * Y, :] = pslab[:, k * X:(k + 1) * X]
        ydot_ref[...] = mm(prows[...], sxtp_ref[...])            # (5Y, X) f32

    return kernel


# ----------------------------------------------------------------------------
# Wrapper
# ----------------------------------------------------------------------------
def closed_fly_loop_forward(t, y, w_vmodel, sigma=3,
                            dv_mode="circular", ap_mode="replicate", ap_cut=15):
    del t  # synthetic v_model is time-independent
    c, Y, X = y.shape
    assert c == 5, "state layout: 4 myosin tensor channels + 1 scalar channel"
    assert Y % 16 == 0 and X % 128 == 0, "DV dim multiple of 16 (bf16 tiles), AP dim multiple of 128"

    g, dg, r = _gaussian_kernels(sigma)
    Dy = _conv_matrix(Y, dg, r, dv_mode)       # d/dy (circular)
    Sy = _conv_matrix(Y, g, r, dv_mode)        # smooth y
    DxT = _conv_matrix(X, dg, r, ap_mode).T    # d/dx (replicate), pre-transposed
    SxT = _conv_matrix(X, g, r, ap_mode).T     # smooth x, pre-transposed

    # pole mask folded into the postprocess smoothing matrix: (f*mask) @ SxT = f @ (diag(mask)@SxT)
    mask = np.ones((X,), dtype=np.float64)
    mask[:ap_cut] = 0.0
    mask[X - ap_cut:] = 0.0
    SxT_post = mask[:, None] * SxT

    bf16 = jnp.bfloat16
    f32 = jnp.float32
    Lmat = jnp.asarray(np.concatenate([Dy, Sy], axis=0), bf16)   # (2Y, Y)
    SxT_b = jnp.asarray(SxT, bf16)
    DxT_b = jnp.asarray(DxT, bf16)
    SxTp_b = jnp.asarray(SxT_post, bf16)

    # lane-stacked state slabs (Y, 5X): slab[:, c*X:(c+1)*X] = y[c]  (wrapper-side layout plumbing)
    y_bf = y.astype(bf16)
    y_slab = jnp.transpose(y_bf, (1, 0, 2)).reshape(Y, 5 * X)
    yflip_slab = jnp.transpose(y_bf[:, ::-1, :], (1, 0, 2)).reshape(Y, 5 * X)

    kernel = _make_kernel(np.asarray(jax.device_get(w_vmodel)), Y, X)

    YX = Y * X
    # flops: 2 left matmuls + 2 right matmuls + postprocess Sy + final SxT_post
    flops = (2 * (2 * Y) * Y * (5 * X) + 2 * (2 * Y) * Y * (2 * X)
             + 2 * (2 * (7 * Y) * X * X)
             + 2 * Y * Y * (5 * X) + 2 * (5 * Y) * X * X)
    bytes_accessed = (2 * 5 * YX + 2 * Y * Y + 3 * X * X) * 2 + 5 * YX * 4
    cost = pl.CostEstimate(flops=flops, transcendentals=0, bytes_accessed=bytes_accessed)

    # scratch bytes: vslab 4 + g 28 + dyrows 14 + dxrows 14 + ddy 28 + ddx 28 + pslab 10 + prows 10 (per Y*X)
    scratch_bytes = 136 * YX
    vmem_limit = int(2 * (scratch_bytes + bytes_accessed)) + (4 << 20)

    vmem = pl.BlockSpec(memory_space=pltpu.MemorySpace.VMEM)
    out = pl.pallas_call(
        kernel,
        out_shape=jax.ShapeDtypeStruct((5 * Y, X), f32),
        in_specs=[vmem] * 6,
        out_specs=vmem,
        scratch_shapes=[
            pltpu.VMEM((Y, 2 * X), bf16),       # vslab : v0|v1, lane-stacked
            pltpu.VMEM((2 * Y, 7 * X), bf16),   # g_ref : [Dy;Sy] @ fields
            pltpu.VMEM((7 * Y, X), bf16),       # dyrows: Dy@f_k, row-stacked
            pltpu.VMEM((7 * Y, X), bf16),       # dxrows: Sy@f_k, row-stacked
            pltpu.VMEM((7 * Y, X), f32),        # ddy   : d/dy of each field (VPU math in f32)
            pltpu.VMEM((7 * Y, X), f32),        # ddx   : d/dx of each field
            pltpu.VMEM((Y, 5 * X), bf16),       # pslab : mdot/sdot, reused for Sy-smoothed result
            pltpu.VMEM((5 * Y, X), bf16),       # prows : row-stacked smoothed outputs
        ],
        compiler_params=pltpu.CompilerParams(vmem_limit_bytes=vmem_limit),
        cost_estimate=cost,
    )(y_slab, yflip_slab, Lmat, SxT_b, DxT_b, SxTp_b)
    return out.reshape(5, Y, X)


if __name__ == "__main__":
    key = jax.random.PRNGKey(0)
    ky, kw = jax.random.split(key)
    C, Y, X = 5, 64, 128
    y0 = 0.1 * jax.random.normal(ky, (C, Y, X), dtype=jnp.float32)
    w_vmodel = 0.05 * jax.random.normal(kw, (2, C), dtype=jnp.float32)
    t = jnp.float32(0.0)

    ydot = closed_fly_loop_forward(t, y0, w_vmodel)
    ydot = jax.block_until_ready(ydot)

    assert ydot.shape == (C, Y, X) and ydot.dtype == jnp.float32
    assert bool(jnp.all(jnp.isfinite(ydot)))
    print("KERNEL_OK")
</pallas_src>

<mosaic_0001>
module attributes {stable_mosaic.version = 11 : i64} {
  func.func @kernel(%arg0: memref<64x640xbf16, #tpu.memory_space<vmem>>, %arg1: memref<64x640xbf16, #tpu.memory_space<vmem>>, %arg2: memref<128x64xbf16, #tpu.memory_space<vmem>>, %arg3: memref<128x128xbf16, #tpu.memory_space<vmem>>, %arg4: memref<128x128xbf16, #tpu.memory_space<vmem>>, %arg5: memref<128x128xbf16, #tpu.memory_space<vmem>>, %arg6: memref<320x128xf32, #tpu.memory_space<vmem>>, %arg7: memref<64x256xbf16, #tpu.memory_space<vmem>>, %arg8: memref<128x896xbf16, #tpu.memory_space<vmem>>, %arg9: memref<448x128xbf16, #tpu.memory_space<vmem>>, %arg10: memref<448x128xbf16, #tpu.memory_space<vmem>>, %arg11: memref<448x128xf32, #tpu.memory_space<vmem>>, %arg12: memref<448x128xf32, #tpu.memory_space<vmem>>, %arg13: memref<64x640xbf16, #tpu.memory_space<vmem>>, %arg14: memref<320x128xbf16, #tpu.memory_space<vmem>>) attributes {dimension_semantics = [], scalar_prefetch = 0 : i64, scratch_operands = 8 : i64, tpu.core_type = #tpu.core_type<tc>} {
    %c0 = arith.constant 0 : index
    %c0_0 = arith.constant 0 : index
    %0 = vector.load %arg0[%c0, %c0_0] : memref<64x640xbf16, #tpu.memory_space<vmem>>, vector<64x128xbf16>
    %1 = arith.extf %0 : vector<64x128xbf16> to vector<64x128xf32>
    %c0_1 = arith.constant 0 : index
    %c0_2 = arith.constant 0 : index
    %2 = vector.load %arg1[%c0_1, %c0_2] : memref<64x640xbf16, #tpu.memory_space<vmem>>, vector<64x128xbf16>
    %3 = arith.extf %2 : vector<64x128xbf16> to vector<64x128xf32>
    %4 = arith.subf %1, %3 : vector<64x128xf32>
    %cst = arith.constant -0.0610613935 : f32
    %5 = vector.broadcast %cst : f32 to vector<64x128xf32>
    %6 = arith.mulf %5, %4 : vector<64x128xf32>
    %7 = arith.addf %1, %3 : vector<64x128xf32>
    %cst_3 = arith.constant -0.0294637959 : f32
    %8 = vector.broadcast %cst_3 : f32 to vector<64x128xf32>
    %9 = arith.mulf %8, %7 : vector<64x128xf32>
    %c0_4 = arith.constant 0 : index
    %c128 = arith.constant 128 : index
    %10 = vector.load %arg0[%c0_4, %c128] : memref<64x640xbf16, #tpu.memory_space<vmem>>, vector<64x128xbf16>
    %11 = arith.extf %10 : vector<64x128xbf16> to vector<64x128xf32>
    %c0_5 = arith.constant 0 : index
    %c128_6 = arith.constant 128 : index
    %12 = vector.load %arg1[%c0_5, %c128_6] : memref<64x640xbf16, #tpu.memory_space<vmem>>, vector<64x128xbf16>
    %13 = arith.extf %12 : vector<64x128xbf16> to vector<64x128xf32>
    %14 = arith.subf %11, %13 : vector<64x128xf32>
    %cst_7 = arith.constant -0.0508920141 : f32
    %15 = vector.broadcast %cst_7 : f32 to vector<64x128xf32>
    %16 = arith.mulf %15, %14 : vector<64x128xf32>
    %17 = arith.addf %11, %13 : vector<64x128xf32>
    %cst_8 = arith.constant -0.0287054908 : f32
    %18 = vector.broadcast %cst_8 : f32 to vector<64x128xf32>
    %19 = arith.mulf %18, %17 : vector<64x128xf32>
    %20 = arith.addf %6, %16 : vector<64x128xf32>
    %21 = arith.addf %9, %19 : vector<64x128xf32>
    %c0_9 = arith.constant 0 : index
    %c256 = arith.constant 256 : index
    %22 = vector.load %arg0[%c0_9, %c256] : memref<64x640xbf16, #tpu.memory_space<vmem>>, vector<64x128xbf16>
    %23 = arith.extf %22 : vector<64x128xbf16> to vector<64x128xf32>
    %c0_10 = arith.constant 0 : index
    %c256_11 = arith.constant 256 : index
    %24 = vector.load %arg1[%c0_10, %c256_11] : memref<64x640xbf16, #tpu.memory_space<vmem>>, vector<64x128xbf16>
    %25 = arith.extf %24 : vector<64x128xbf16> to vector<64x128xf32>
    %26 = arith.subf %23, %25 : vector<64x128xf32>
    %cst_12 = arith.constant 0.00513860583 : f32
    %27 = vector.broadcast %cst_12 : f32 to vector<64x128xf32>
    %28 = arith.mulf %27, %26 : vector<64x128xf32>
    %29 = arith.addf %23, %25 : vector<64x128xf32>
    %cst_13 = arith.constant 0.00742914481 : f32
    %30 = vector.broadcast %cst_13 : f32 to vector<64x128xf32>
    %31 = arith.mulf %30, %29 : vector<64x128xf32>
    %32 = arith.addf %20, %28 : vector<64x128xf32>
    %33 = arith.addf %21, %31 : vector<64x128xf32>
    %c0_14 = arith.constant 0 : index
    %c384 = arith.constant 384 : index
    %34 = vector.load %arg0[%c0_14, %c384] : memref<64x640xbf16, #tpu.memory_space<vmem>>, vector<64x128xbf16>
    %35 = arith.extf %34 : vector<64x128xbf16> to vector<64x128xf32>
    %c0_15 = arith.constant 0 : index
    %c384_16 = arith.constant 384 : index
    %36 = vector.load %arg1[%c0_15, %c384_16] : memref<64x640xbf16, #tpu.memory_space<vmem>>, vector<64x128xbf16>
    %37 = arith.extf %36 : vector<64x128xbf16> to vector<64x128xf32>
    %38 = arith.subf %35, %37 : vector<64x128xf32>
    %cst_17 = arith.constant -0.00883875508 : f32
    %39 = vector.broadcast %cst_17 : f32 to vector<64x128xf32>
    %40 = arith.mulf %39, %38 : vector<64x128xf32>
    %41 = arith.addf %35, %37 : vector<64x128xf32>
    %cst_18 = arith.constant -3.276340e-02 : f32
    %42 = vector.broadcast %cst_18 : f32 to vector<64x128xf32>
    %43 = arith.mulf %42, %41 : vector<64x128xf32>
    %44 = arith.addf %32, %40 : vector<64x128xf32>
    %45 = arith.addf %33, %43 : vector<64x128xf32>
    %c0_19 = arith.constant 0 : index
    %c512 = arith.constant 512 : index
    %46 = vector.load %arg0[%c0_19, %c512] : memref<64x640xbf16, #tpu.memory_space<vmem>>, vector<64x128xbf16>
    %47 = arith.extf %46 : vector<64x128xbf16> to vector<64x128xf32>
    %c0_20 = arith.constant 0 : index
    %c512_21 = arith.constant 512 : index
    %48 = vector.load %arg1[%c0_20, %c512_21] : memref<64x640xbf16, #tpu.memory_space<vmem>>, vector<64x128xbf16>
    %49 = arith.extf %48 : vector<64x128xbf16> to vector<64x128xf32>
    %50 = arith.subf %47, %49 : vector<64x128xf32>
    %cst_22 = arith.constant -0.019049352 : f32
    %51 = vector.broadcast %cst_22 : f32 to vector<64x128xf32>
    %52 = arith.mulf %51, %50 : vector<64x128xf32>
    %53 = arith.addf %47, %49 : vector<64x128xf32>
    %cst_23 = arith.constant 0.0532550626 : f32
    %54 = vector.broadcast %cst_23 : f32 to vector<64x128xf32>
    %55 = arith.mulf %54, %53 : vector<64x128xf32>
    %56 = arith.addf %44, %52 : vector<64x128xf32>
    %57 = arith.addf %45, %55 : vector<64x128xf32>
    %58 = arith.truncf %56 : vector<64x128xf32> to vector<64x128xbf16>
    %c0_24 = arith.constant 0 : index
    %c0_25 = arith.constant 0 : index
    %59 = vector.load %arg7[%c0_24, %c0_25] : memref<64x256xbf16, #tpu.memory_space<vmem>>, vector<64x128xbf16>
    tpu.vector_store %arg7[%c0_24, %c0_25], %58 {strides = array<i32>} : memref<64x256xbf16, #tpu.memory_space<vmem>>, vector<64x128xbf16>,
    %60 = arith.truncf %57 : vector<64x128xf32> to vector<64x128xbf16>
    %c0_26 = arith.constant 0 : index
    %c128_27 = arith.constant 128 : index
    %61 = vector.load %arg7[%c0_26, %c128_27] : memref<64x256xbf16, #tpu.memory_space<vmem>>, vector<64x128xbf16>
    tpu.vector_store %arg7[%c0_26, %c128_27], %60 {strides = array<i32>} : memref<64x256xbf16, #tpu.memory_space<vmem>>, vector<64x128xbf16>,
    %c0_28 = arith.constant 0 : index
    %c0_29 = arith.constant 0 : index
    %62 = vector.load %arg2[%c0_28, %c0_29] : memref<128x64xbf16, #tpu.memory_space<vmem>>, vector<128x64xbf16>
    %c0_30 = arith.constant 0 : index
    %c0_31 = arith.constant 0 : index
    %63 = vector.load %arg0[%c0_30, %c0_31] : memref<64x640xbf16, #tpu.memory_space<vmem>>, vector<64x640xbf16>
    %cst_32 = arith.constant dense<0.000000e+00> : vector<128x640xf32>
    %64 = tpu.matmul %62, %63, %cst_32 {dimension_numbers = #tpu.dot_dimension_numbers<[1], [0], [0], [1], [0, 0, 1, 1], [], []>} : vector<128x64xbf16>, vector<64x640xbf16>, vector<128x640xf32> -> vector<128x640xf32>
    %65 = arith.truncf %64 : vector<128x640xf32> to vector<128x640xbf16>
    %c0_33 = arith.constant 0 : index
    %c0_34 = arith.constant 0 : index
    %66 = vector.load %arg8[%c0_33, %c0_34] : memref<128x896xbf16, #tpu.memory_space<vmem>>, vector<128x640xbf16>
    tpu.vector_store %arg8[%c0_33, %c0_34], %65 {strides = array<i32>} : memref<128x896xbf16, #tpu.memory_space<vmem>>, vector<128x640xbf16>,
    %c0_35 = arith.constant 0 : index
    %c0_36 = arith.constant 0 : index
    %67 = vector.load %arg2[%c0_35, %c0_36] : memref<128x64xbf16, #tpu.memory_space<vmem>>, vector<128x64xbf16>
    %c0_37 = arith.constant 0 : index
    %c0_38 = arith.constant 0 : index
    %68 = vector.load %arg7[%c0_37, %c0_38] : memref<64x256xbf16, #tpu.memory_space<vmem>>, vector<64x256xbf16>
    %cst_39 = arith.constant dense<0.000000e+00> : vector<128x256xf32>
    %69 = tpu.matmul %67, %68, %cst_39 {dimension_numbers = #tpu.dot_dimension_numbers<[1], [0], [0], [1], [0, 0, 1, 1], [], []>} : vector<128x64xbf16>, vector<64x256xbf16>, vector<128x256xf32> -> vector<128x256xf32>
    %70 = arith.truncf %69 : vector<128x256xf32> to vector<128x256xbf16>
    %c0_40 = arith.constant 0 : index
    %c640 = arith.constant 640 : index
    %71 = vector.load %arg8[%c0_40, %c640] : memref<128x896xbf16, #tpu.memory_space<vmem>>, vector<128x256xbf16>
    tpu.vector_store %arg8[%c0_40, %c640], %70 {strides = array<i32>} : memref<128x896xbf16, #tpu.memory_space<vmem>>, vector<128x256xbf16>,
    %c0_41 = arith.constant 0 : index
    %c0_42 = arith.constant 0 : index
    %72 = vector.load %arg8[%c0_41, %c0_42] : memref<128x896xbf16, #tpu.memory_space<vmem>>, vector<64x128xbf16>
    %c0_43 = arith.constant 0 : index
    %c0_44 = arith.constant 0 : index
    %73 = vector.load %arg9[%c0_43, %c0_44] : memref<448x128xbf16, #tpu.memory_space<vmem>>, vector<64x128xbf16>
    tpu.vector_store %arg9[%c0_43, %c0_44], %72 {strides = array<i32>} : memref<448x128xbf16, #tpu.memory_space<vmem>>, vector<64x128xbf16>,
    %c0_45 = arith.constant 0 : index
    %c128_46 = arith.constant 128 : index
    %74 = vector.load %arg8[%c0_45, %c128_46] : memref<128x896xbf16, #tpu.memory_space<vmem>>, vector<64x128xbf16>
    %c64 = arith.constant 64 : index
    %c0_47 = arith.constant 0 : index
    %75 = vector.load %arg9[%c64, %c0_47] : memref<448x128xbf16, #tpu.memory_space<vmem>>, vector<64x128xbf16>
    tpu.vector_store %arg9[%c64, %c0_47], %74 {strides = array<i32>} : memref<448x128xbf16, #tpu.memory_space<vmem>>, vector<64x128xbf16>,
    %c0_48 = arith.constant 0 : index
    %c256_49 = arith.constant 256 : index
    %76 = vector.load %arg8[%c0_48, %c256_49] : memref<128x896xbf16, #tpu.memory_space<vmem>>, vector<64x128xbf16>
    %c128_50 = arith.constant 128 : index
    %c0_51 = arith.constant 0 : index
    %77 = vector.load %arg9[%c128_50, %c0_51] : memref<448x128xbf16, #tpu.memory_space<vmem>>, vector<64x128xbf16>
    tpu.vector_store %arg9[%c128_50, %c0_51], %76 {strides = array<i32>} : memref<448x128xbf16, #tpu.memory_space<vmem>>, vector<64x128xbf16>,
    %c0_52 = arith.constant 0 : index
    %c384_53 = arith.constant 384 : index
    %78 = vector.load %arg8[%c0_52, %c384_53] : memref<128x896xbf16, #tpu.memory_space<vmem>>, vector<64x128xbf16>
    %c192 = arith.constant 192 : index
    %c0_54 = arith.constant 0 : index
    %79 = vector.load %arg9[%c192, %c0_54] : memref<448x128xbf16, #tpu.memory_space<vmem>>, vector<64x128xbf16>
    tpu.vector_store %arg9[%c192, %c0_54], %78 {strides = array<i32>} : memref<448x128xbf16, #tpu.memory_space<vmem>>, vector<64x128xbf16>,
    %c0_55 = arith.constant 0 : index
    %c512_56 = arith.constant 512 : index
    %80 = vector.load %arg8[%c0_55, %c512_56] : memref<128x896xbf16, #tpu.memory_space<vmem>>, vector<64x128xbf16>
    %c256_57 = arith.constant 256 : index
    %c0_58 = arith.constant 0 : index
    %81 = vector.load %arg9[%c256_57, %c0_58] : memref<448x128xbf16, #tpu.memory_space<vmem>>, vector<64x128xbf16>
    tpu.vector_store %arg9[%c256_57, %c0_58], %80 {strides = array<i32>} : memref<448x128xbf16, #tpu.memory_space<vmem>>, vector<64x128xbf16>,
    %c0_59 = arith.constant 0 : index
    %c640_60 = arith.constant 640 : index
    %82 = vector.load %arg8[%c0_59, %c640_60] : memref<128x896xbf16, #tpu.memory_space<vmem>>, vector<64x128xbf16>
    %c320 = arith.constant 320 : index
    %c0_61 = arith.constant 0 : index
    %83 = vector.load %arg9[%c320, %c0_61] : memref<448x128xbf16, #tpu.memory_space<vmem>>, vector<64x128xbf16>
    tpu.vector_store %arg9[%c320, %c0_61], %82 {strides = array<i32>} : memref<448x128xbf16, #tpu.memory_space<vmem>>, vector<64x128xbf16>,
    %c0_62 = arith.constant 0 : index
    %c768 = arith.constant 768 : index
    %84 = vector.load %arg8[%c0_62, %c768] : memref<128x896xbf16, #tpu.memory_space<vmem>>, vector<64x128xbf16>
    %c384_63 = arith.constant 384 : index
    %c0_64 = arith.constant 0 : index
    %85 = vector.load %arg9[%c384_63, %c0_64] : memref<448x128xbf16, #tpu.memory_space<vmem>>, vector<64x128xbf16>
    tpu.vector_store %arg9[%c384_63, %c0_64], %84 {strides = array<i32>} : memref<448x128xbf16, #tpu.memory_space<vmem>>, vector<64x128xbf16>,
    %c0_65 = arith.constant 0 : index
    %c0_66 = arith.constant 0 : index
    %86 = vector.load %arg9[%c0_65, %c0_66] : memref<448x128xbf16, #tpu.memory_space<vmem>>, vector<448x128xbf16>
    %c0_67 = arith.constant 0 : index
    %c0_68 = arith.constant 0 : index
    %87 = vector.load %arg3[%c0_67, %c0_68] : memref<128x128xbf16, #tpu.memory_space<vmem>>, vector<128x128xbf16>
    %cst_69 = arith.constant dense<0.000000e+00> : vector<448x128xf32>
    %88 = tpu.matmul %86, %87, %cst_69 {dimension_numbers = #tpu.dot_dimension_numbers<[1], [0], [0], [1], [0, 0, 1, 1], [], []>} : vector<448x128xbf16>, vector<128x128xbf16>, vector<448x128xf32> -> vector<448x128xf32>
    %c0_70 = arith.constant 0 : index
    %c0_71 = arith.constant 0 : index
    %89 = vector.load %arg11[%c0_70, %c0_71] : memref<448x128xf32, #tpu.memory_space<vmem>>, vector<448x128xf32>
    tpu.vector_store %arg11[%c0_70, %c0_71], %88 {strides = array<i32>} : memref<448x128xf32, #tpu.memory_space<vmem>>, vector<448x128xf32>,
    %c64_72 = arith.constant 64 : index
    %c0_73 = arith.constant 0 : index
    %90 = vector.load %arg8[%c64_72, %c0_73] : memref<128x896xbf16, #tpu.memory_space<vmem>>, vector<64x128xbf16>
    %c0_74 = arith.constant 0 : index
    %c0_75 = arith.constant 0 : index
    %91 = vector.load %arg10[%c0_74, %c0_75] : memref<448x128xbf16, #tpu.memory_space<vmem>>, vector<64x128xbf16>
    tpu.vector_store %arg10[%c0_74, %c0_75], %90 {strides = array<i32>} : memref<448x128xbf16, #tpu.memory_space<vmem>>, vector<64x128xbf16>,
    %c64_76 = arith.constant 64 : index
    %c128_77 = arith.constant 128 : index
    %92 = vector.load %arg8[%c64_76, %c128_77] : memref<128x896xbf16, #tpu.memory_space<vmem>>, vector<64x128xbf16>
    %c64_78 = arith.constant 64 : index
    %c0_79 = arith.constant 0 : index
    %93 = vector.load %arg10[%c64_78, %c0_79] : memref<448x128xbf16, #tpu.memory_space<vmem>>, vector<64x128xbf16>
    tpu.vector_store %arg10[%c64_78, %c0_79], %92 {strides = array<i32>} : memref<448x128xbf16, #tpu.memory_space<vmem>>, vector<64x128xbf16>,
    %c64_80 = arith.constant 64 : index
    %c256_81 = arith.constant 256 : index
    %94 = vector.load %arg8[%c64_80, %c256_81] : memref<128x896xbf16, #tpu.memory_space<vmem>>, vector<64x128xbf16>
    %c128_82 = arith.constant 128 : index
    %c0_83 = arith.constant 0 : index
    %95 = vector.load %arg10[%c128_82, %c0_83] : memref<448x128xbf16, #tpu.memory_space<vmem>>, vector<64x128xbf16>
    tpu.vector_store %arg10[%c128_82, %c0_83], %94 {strides = array<i32>} : memref<448x128xbf16, #tpu.memory_space<vmem>>, vector<64x128xbf16>,
    %c64_84 = arith.constant 64 : index
    %c384_85 = arith.constant 384 : index
    %96 = vector.load %arg8[%c64_84, %c384_85] : memref<128x896xbf16, #tpu.memory_space<vmem>>, vector<64x128xbf16>
    %c192_86 = arith.constant 192 : index
    %c0_87 = arith.constant 0 : index
    %97 = vector.load %arg10[%c192_86, %c0_87] : memref<448x128xbf16, #tpu.memory_space<vmem>>, vector<64x128xbf16>
    tpu.vector_store %arg10[%c192_86, %c0_87], %96 {strides = array<i32>} : memref<448x128xbf16, #tpu.memory_space<vmem>>, vector<64x128xbf16>,
    %c64_88 = arith.constant 64 : index
    %c512_89 = arith.constant 512 : index
    %98 = vector.load %arg8[%c64_88, %c512_89] : memref<128x896xbf16, #tpu.memory_space<vmem>>, vector<64x128xbf16>
    %c256_90 = arith.constant 256 : index
    %c0_91 = arith.constant 0 : index
    %99 = vector.load %arg10[%c256_90, %c0_91] : memref<448x128xbf16, #tpu.memory_space<vmem>>, vector<64x128xbf16>
    tpu.vector_store %arg10[%c256_90, %c0_91], %98 {strides = array<i32>} : memref<448x128xbf16, #tpu.memory_space<vmem>>, vector<64x128xbf16>,
    %c64_92 = arith.constant 64 : index
    %c640_93 = arith.constant 640 : index
    %100 = vector.load %arg8[%c64_92, %c640_93] : memref<128x896xbf16, #tpu.memory_space<vmem>>, vector<64x128xbf16>
    %c320_94 = arith.constant 320 : index
    %c0_95 = arith.constant 0 : index
    %101 = vector.load %arg10[%c320_94, %c0_95] : memref<448x128xbf16, #tpu.memory_space<vmem>>, vector<64x128xbf16>
    tpu.vector_store %arg10[%c320_94, %c0_95], %100 {strides = array<i32>} : memref<448x128xbf16, #tpu.memory_space<vmem>>, vector<64x128xbf16>,
    %c64_96 = arith.constant 64 : index
    %c768_97 = arith.constant 768 : index
    %102 = vector.load %arg8[%c64_96, %c768_97] : memref<128x896xbf16, #tpu.memory_space<vmem>>, vector<64x128xbf16>
    %c384_98 = arith.constant 384 : index
    %c0_99 = arith.constant 0 : index
    %103 = vector.load %arg10[%c384_98, %c0_99] : memref<448x128xbf16, #tpu.memory_space<vmem>>, vector<64x128xbf16>
    tpu.vector_store %arg10[%c384_98, %c0_99], %102 {strides = array<i32>} : memref<448x128xbf16, #tpu.memory_space<vmem>>, vector<64x128xbf16>,
    %c0_100 = arith.constant 0 : index
    %c0_101 = arith.constant 0 : index
    %104 = vector.load %arg10[%c0_100, %c0_101] : memref<448x128xbf16, #tpu.memory_space<vmem>>, vector<448x128xbf16>
    %c0_102 = arith.constant 0 : index
    %c0_103 = arith.constant 0 : index
    %105 = vector.load %arg4[%c0_102, %c0_103] : memref<128x128xbf16, #tpu.memory_space<vmem>>, vector<128x128xbf16>
    %cst_104 = arith.constant dense<0.000000e+00> : vector<448x128xf32>
    %106 = tpu.matmul %104, %105, %cst_104 {dimension_numbers = #tpu.dot_dimension_numbers<[1], [0], [0], [1], [0, 0, 1, 1], [], []>} : vector<448x128xbf16>, vector<128x128xbf16>, vector<448x128xf32> -> vector<448x128xf32>
    %c0_105 = arith.constant 0 : index
    %c0_106 = arith.constant 0 : index
    %107 = vector.load %arg12[%c0_105, %c0_106] : memref<448x128xf32, #tpu.memory_space<vmem>>, vector<448x128xf32>
    tpu.vector_store %arg12[%c0_105, %c0_106], %106 {strides = array<i32>} : memref<448x128xf32, #tpu.memory_space<vmem>>, vector<448x128xf32>,
    %c320_107 = arith.constant 320 : index
    %c0_108 = arith.constant 0 : index
    %108 = vector.load %arg11[%c320_107, %c0_108] : memref<448x128xf32, #tpu.memory_space<vmem>>, vector<64x128xf32>
    %c384_109 = arith.constant 384 : index
    %c0_110 = arith.constant 0 : index
    %109 = vector.load %arg12[%c384_109, %c0_110] : memref<448x128xf32, #tpu.memory_space<vmem>>, vector<64x128xf32>
    %110 = arith.addf %108, %109 : vector<64x128xf32>
    %c320_111 = arith.constant 320 : index
    %c0_112 = arith.constant 0 : index
    %111 = vector.load %arg12[%c320_111, %c0_112] : memref<448x128xf32, #tpu.memory_space<vmem>>, vector<64x128xf32>
    %c384_113 = arith.constant 384 : index
    %c0_114 = arith.constant 0 : index
    %112 = vector.load %arg11[%c384_113, %c0_114] : memref<448x128xf32, #tpu.memory_space<vmem>>, vector<64x128xf32>
    %113 = arith.subf %111, %112 : vector<64x128xf32>
    %cst_115 = arith.constant -5.000000e-01 : f32
    %114 = vector.broadcast %cst_115 : f32 to vector<64x128xf32>
    %115 = arith.mulf %114, %113 : vector<64x128xf32>
    %c0_116 = arith.constant 0 : index
    %c512_117 = arith.constant 512 : index
    %116 = vector.load %arg0[%c0_116, %c512_117] : memref<64x640xbf16, #tpu.memory_space<vmem>>, vector<64x128xbf16>
    %117 = arith.extf %116 : vector<64x128xbf16> to vector<64x128xf32>
    %c0_118 = arith.constant 0 : index
    %c0_119 = arith.constant 0 : index
    %118 = vector.load %arg0[%c0_118, %c0_119] : memref<64x640xbf16, #tpu.memory_space<vmem>>, vector<64x128xbf16>
    %119 = arith.extf %118 : vector<64x128xbf16> to vector<64x128xf32>
    %c0_120 = arith.constant 0 : index
    %c384_121 = arith.constant 384 : index
    %120 = vector.load %arg0[%c0_120, %c384_121] : memref<64x640xbf16, #tpu.memory_space<vmem>>, vector<64x128xbf16>
    %121 = arith.extf %120 : vector<64x128xbf16> to vector<64x128xf32>
    %122 = arith.addf %119, %121 : vector<64x128xf32>
    %cst_122 = arith.constant 6.100000e-02 : f32
    %123 = vector.broadcast %cst_122 : f32 to vector<64x128xf32>
    %124 = arith.mulf %123, %117 : vector<64x128xf32>
    %cst_123 = arith.constant 6.600000e-02 : f32
    %125 = vector.broadcast %cst_123 : f32 to vector<64x128xf32>
    %126 = arith.subf %125, %124 : vector<64x128xf32>
    %cst_124 = arith.constant 0.000000e+00 : f32
    %127 = vector.broadcast %cst_124 : f32 to vector<64x128xf32>
    %128 = arith.subf %127, %126 : vector<64x128xf32>
    %cst_125 = arith.constant 3.180000e-01 : f32
    %129 = vector.broadcast %cst_125 : f32 to vector<64x128xf32>
    %130 = arith.mulf %129, %117 : vector<64x128xf32>
    %cst_126 = arith.constant 4.890000e-01 : f32
    %131 = vector.broadcast %cst_126 : f32 to vector<64x128xf32>
    %132 = arith.addf %131, %130 : vector<64x128xf32>
    %133 = arith.mulf %132, %110 : vector<64x128xf32>
    %134 = arith.addf %128, %133 : vector<64x128xf32>
    %cst_127 = arith.constant 3.930000e-01 : f32
    %135 = vector.broadcast %cst_127 : f32 to vector<64x128xf32>
    %136 = arith.mulf %135, %117 : vector<64x128xf32>
    %cst_128 = arith.constant 5.640000e-01 : f32
    %137 = vector.broadcast %cst_128 : f32 to vector<64x128xf32>
    %138 = arith.subf %137, %136 : vector<64x128xf32>
    %139 = arith.mulf %138, %122 : vector<64x128xf32>
    %140 = arith.addf %134, %139 : vector<64x128xf32>
    %cst_129 = arith.constant 3.700000e-02 : f32
    %141 = vector.broadcast %cst_129 : f32 to vector<64x128xf32>
    %142 = arith.mulf %141, %117 : vector<64x128xf32>
    %cst_130 = arith.constant 4.700000e-02 : f32
    %143 = vector.broadcast %cst_130 : f32 to vector<64x128xf32>
    %144 = arith.subf %143, %142 : vector<64x128xf32>
    %145 = arith.mulf %144, %122 : vector<64x128xf32>
    %c0_131 = arith.constant 0 : index
    %c0_132 = arith.constant 0 : index
    %146 = vector.load %arg7[%c0_131, %c0_132] : memref<64x256xbf16, #tpu.memory_space<vmem>>, vector<64x128xbf16>
    %147 = arith.extf %146 : vector<64x128xbf16> to vector<64x128xf32>
    %c0_133 = arith.constant 0 : index
    %c128_134 = arith.constant 128 : index
    %148 = vector.load %arg7[%c0_133, %c128_134] : memref<64x256xbf16, #tpu.memory_space<vmem>>, vector<64x128xbf16>
    %149 = arith.extf %148 : vector<64x128xbf16> to vector<64x128xf32>
    %c0_135 = arith.constant 0 : index
    %c128_136 = arith.constant 128 : index
    %150 = vector.load %arg0[%c0_135, %c128_136] : memref<64x640xbf16, #tpu.memory_space<vmem>>, vector<64x128xbf16>
    %151 = arith.extf %150 : vector<64x128xbf16> to vector<64x128xf32>
    %c0_137 = arith.constant 0 : index
    %c256_138 = arith.constant 256 : index
    %152 = vector.load %arg0[%c0_137, %c256_138] : memref<64x640xbf16, #tpu.memory_space<vmem>>, vector<64x128xbf16>
    %153 = arith.extf %152 : vector<64x128xbf16> to vector<64x128xf32>
    %154 = arith.addf %151, %153 : vector<64x128xf32>
    %155 = arith.mulf %115, %154 : vector<64x128xf32>
    %c0_139 = arith.constant 0 : index
    %c0_140 = arith.constant 0 : index
    %156 = vector.load %arg11[%c0_139, %c0_140] : memref<448x128xf32, #tpu.memory_space<vmem>>, vector<64x128xf32>
    %157 = arith.mulf %147, %156 : vector<64x128xf32>
    %c0_141 = arith.constant 0 : index
    %c0_142 = arith.constant 0 : index
    %158 = vector.load %arg12[%c0_141, %c0_142] : memref<448x128xf32, #tpu.memory_space<vmem>>, vector<64x128xf32>
    %159 = arith.mulf %149, %158 : vector<64x128xf32>
    %160 = arith.addf %157, %159 : vector<64x128xf32>
    %161 = arith.addf %160, %155 : vector<64x128xf32>
    %cst_143 = arith.constant 0.000000e+00 : f32
    %162 = vector.broadcast %cst_143 : f32 to vector<64x128xf32>
    %163 = arith.subf %162, %161 : vector<64x128xf32>
    %c0_144 = arith.constant 0 : index
    %c0_145 = arith.constant 0 : index
    %164 = vector.load %arg0[%c0_144, %c0_145] : memref<64x640xbf16, #tpu.memory_space<vmem>>, vector<64x128xbf16>
    %165 = arith.extf %164 : vector<64x128xbf16> to vector<64x128xf32>
    %166 = arith.mulf %140, %165 : vector<64x128xf32>
    %167 = arith.addf %163, %166 : vector<64x128xf32>
    %168 = arith.addf %167, %145 : vector<64x128xf32>
    %169 = arith.truncf %168 : vector<64x128xf32> to vector<64x128xbf16>
    %c0_146 = arith.constant 0 : index
    %c0_147 = arith.constant 0 : index
    %170 = vector.load %arg13[%c0_146, %c0_147] : memref<64x640xbf16, #tpu.memory_space<vmem>>, vector<64x128xbf16>
    tpu.vector_store %arg13[%c0_146, %c0_147], %169 {strides = array<i32>} : memref<64x640xbf16, #tpu.memory_space<vmem>>, vector<64x128xbf16>,
    %c0_148 = arith.constant 0 : index
    %c384_149 = arith.constant 384 : index
    %171 = vector.load %arg0[%c0_148, %c384_149] : memref<64x640xbf16, #tpu.memory_space<vmem>>, vector<64x128xbf16>
    %172 = arith.extf %171 : vector<64x128xbf16> to vector<64x128xf32>
    %c0_150 = arith.constant 0 : index
    %c0_151 = arith.constant 0 : index
    %173 = vector.load %arg0[%c0_150, %c0_151] : memref<64x640xbf16, #tpu.memory_space<vmem>>, vector<64x128xbf16>
    %174 = arith.extf %173 : vector<64x128xbf16> to vector<64x128xf32>
    %175 = arith.subf %172, %174 : vector<64x128xf32>
    %176 = arith.mulf %115, %175 : vector<64x128xf32>
    %c64_152 = arith.constant 64 : index
    %c0_153 = arith.constant 0 : index
    %177 = vector.load %arg11[%c64_152, %c0_153] : memref<448x128xf32, #tpu.memory_space<vmem>>, vector<64x128xf32>
    %178 = arith.mulf %147, %177 : vector<64x128xf32>
    %c64_154 = arith.constant 64 : index
    %c0_155 = arith.constant 0 : index
    %179 = vector.load %arg12[%c64_154, %c0_155] : memref<448x128xf32, #tpu.memory_space<vmem>>, vector<64x128xf32>
    %180 = arith.mulf %149, %179 : vector<64x128xf32>
    %181 = arith.addf %178, %180 : vector<64x128xf32>
    %182 = arith.addf %181, %176 : vector<64x128xf32>
    %cst_156 = arith.constant 0.000000e+00 : f32
    %183 = vector.broadcast %cst_156 : f32 to vector<64x128xf32>
    %184 = arith.subf %183, %182 : vector<64x128xf32>
    %c0_157 = arith.constant 0 : index
    %c128_158 = arith.constant 128 : index
    %185 = vector.load %arg0[%c0_157, %c128_158] : memref<64x640xbf16, #tpu.memory_space<vmem>>, vector<64x128xbf16>
    %186 = arith.extf %185 : vector<64x128xbf16> to vector<64x128xf32>
    %187 = arith.mulf %140, %186 : vector<64x128xf32>
    %188 = arith.addf %184, %187 : vector<64x128xf32>
    %189 = arith.truncf %188 : vector<64x128xf32> to vector<64x128xbf16>
    %c0_159 = arith.constant 0 : index
    %c128_160 = arith.constant 128 : index
    %190 = vector.load %arg13[%c0_159, %c128_160] : memref<64x640xbf16, #tpu.memory_space<vmem>>, vector<64x128xbf16>
    tpu.vector_store %arg13[%c0_159, %c128_160], %189 {strides = array<i32>} : memref<64x640xbf16, #tpu.memory_space<vmem>>, vector<64x128xbf16>,
    %c128_161 = arith.constant 128 : index
    %c0_162 = arith.constant 0 : index
    %191 = vector.load %arg11[%c128_161, %c0_162] : memref<448x128xf32, #tpu.memory_space<vmem>>, vector<64x128xf32>
    %192 = arith.mulf %147, %191 : vector<64x128xf32>
    %c128_163 = arith.constant 128 : index
    %c0_164 = arith.constant 0 : index
    %193 = vector.load %arg12[%c128_163, %c0_164] : memref<448x128xf32, #tpu.memory_space<vmem>>, vector<64x128xf32>
    %194 = arith.mulf %149, %193 : vector<64x128xf32>
    %195 = arith.addf %192, %194 : vector<64x128xf32>
    %196 = arith.addf %195, %176 : vector<64x128xf32>
    %cst_165 = arith.constant 0.000000e+00 : f32
    %197 = vector.broadcast %cst_165 : f32 to vector<64x128xf32>
    %198 = arith.subf %197, %196 : vector<64x128xf32>
    %c0_166 = arith.constant 0 : index
    %c256_167 = arith.constant 256 : index
    %199 = vector.load %arg0[%c0_166, %c256_167] : memref<64x640xbf16, #tpu.memory_space<vmem>>, vector<64x128xbf16>
    %200 = arith.extf %199 : vector<64x128xbf16> to vector<64x128xf32>
    %201 = arith.mulf %140, %200 : vector<64x128xf32>
    %202 = arith.addf %198, %201 : vector<64x128xf32>
    %203 = arith.truncf %202 : vector<64x128xf32> to vector<64x128xbf16>
    %c0_168 = arith.constant 0 : index
    %c256_169 = arith.constant 256 : index
    %204 = vector.load %arg13[%c0_168, %c256_169] : memref<64x640xbf16, #tpu.memory_space<vmem>>, vector<64x128xbf16>
    tpu.vector_store %arg13[%c0_168, %c256_169], %203 {strides = array<i32>} : memref<64x640xbf16, #tpu.memory_space<vmem>>, vector<64x128xbf16>,
    %c192_170 = arith.constant 192 : index
    %c0_171 = arith.constant 0 : index
    %205 = vector.load %arg11[%c192_170, %c0_171] : memref<448x128xf32, #tpu.memory_space<vmem>>, vector<64x128xf32>
    %206 = arith.mulf %147, %205 : vector<64x128xf32>
    %c192_172 = arith.constant 192 : index
    %c0_173 = arith.constant 0 : index
    %207 = vector.load %arg12[%c192_172, %c0_173] : memref<448x128xf32, #tpu.memory_space<vmem>>, vector<64x128xf32>
    %208 = arith.mulf %149, %207 : vector<64x128xf32>
    %209 = arith.addf %206, %208 : vector<64x128xf32>
    %210 = arith.subf %209, %155 : vector<64x128xf32>
    %cst_174 = arith.constant 0.000000e+00 : f32
    %211 = vector.broadcast %cst_174 : f32 to vector<64x128xf32>
    %212 = arith.subf %211, %210 : vector<64x128xf32>
    %c0_175 = arith.constant 0 : index
    %c384_176 = arith.constant 384 : index
    %213 = vector.load %arg0[%c0_175, %c384_176] : memref<64x640xbf16, #tpu.memory_space<vmem>>, vector<64x128xbf16>
    %214 = arith.extf %213 : vector<64x128xbf16> to vector<64x128xf32>
    %215 = arith.mulf %140, %214 : vector<64x128xf32>
    %216 = arith.addf %212, %215 : vector<64x128xf32>
    %217 = arith.truncf %216 : vector<64x128xf32> to vector<64x128xbf16>
    %c0_177 = arith.constant 0 : index
    %c384_178 = arith.constant 384 : index
    %218 = vector.load %arg13[%c0_177, %c384_178] : memref<64x640xbf16, #tpu.memory_space<vmem>>, vector<64x128xbf16>
    tpu.vector_store %arg13[%c0_177, %c384_178], %217 {strides = array<i32>} : memref<64x640xbf16, #tpu.memory_space<vmem>>, vector<64x128xbf16>,
    %c256_179 = arith.constant 256 : index
    %c0_180 = arith.constant 0 : index
    %219 = vector.load %arg11[%c256_179, %c0_180] : memref<448x128xf32, #tpu.memory_space<vmem>>, vector<64x128xf32>
    %220 = arith.mulf %147, %219 : vector<64x128xf32>
    %c256_181 = arith.constant 256 : index
    %c0_182 = arith.constant 0 : index
    %221 = vector.load %arg12[%c256_181, %c0_182] : memref<448x128xf32, #tpu.memory_space<vmem>>, vector<64x128xf32>
    %222 = arith.mulf %149, %221 : vector<64x128xf32>
    %223 = arith.addf %220, %222 : vector<64x128xf32>
    %cst_183 = arith.constant 0.000000e+00 : f32
    %224 = vector.broadcast %cst_183 : f32 to vector<64x128xf32>
    %225 = arith.subf %224, %223 : vector<64x128xf32>
    %226 = arith.truncf %225 : vector<64x128xf32> to vector<64x128xbf16>
    %c0_184 = arith.constant 0 : index
    %c512_185 = arith.constant 512 : index
    %227 = vector.load %arg13[%c0_184, %c512_185] : memref<64x640xbf16, #tpu.memory_space<vmem>>, vector<64x128xbf16>
    tpu.vector_store %arg13[%c0_184, %c512_185], %226 {strides = array<i32>} : memref<64x640xbf16, #tpu.memory_space<vmem>>, vector<64x128xbf16>,
    %c64_186 = arith.constant 64 : index
    %c0_187 = arith.constant 0 : index
    %228 = vector.load %arg2[%c64_186, %c0_187] : memref<128x64xbf16, #tpu.memory_space<vmem>>, vector<64x64xbf16>
    %c0_188 = arith.constant 0 : index
    %c0_189 = arith.constant 0 : index
    %229 = vector.load %arg13[%c0_188, %c0_189] : memref<64x640xbf16, #tpu.memory_space<vmem>>, vector<64x640xbf16>
    %cst_190 = arith.constant dense<0.000000e+00> : vector<64x640xf32>
    %230 = tpu.matmul %228, %229, %cst_190 {dimension_numbers = #tpu.dot_dimension_numbers<[1], [0], [0], [1], [0, 0, 1, 1], [], []>} : vector<64x64xbf16>, vector<64x640xbf16>, vector<64x640xf32> -> vector<64x640xf32>
    %231 = arith.truncf %230 : vector<64x640xf32> to vector<64x640xbf16>
    %c0_191 = arith.constant 0 : index
    %c0_192 = arith.constant 0 : index
    %232 = vector.load %arg13[%c0_191, %c0_192] : memref<64x640xbf16, #tpu.memory_space<vmem>>, vector<64x640xbf16>
    tpu.vector_store %arg13[%c0_191, %c0_192], %231 {strides = array<i32>} : memref<64x640xbf16, #tpu.memory_space<vmem>>, vector<64x640xbf16>,
    %c0_193 = arith.constant 0 : index
    %c0_194 = arith.constant 0 : index
    %233 = vector.load %arg13[%c0_193, %c0_194] : memref<64x640xbf16, #tpu.memory_space<vmem>>, vector<64x128xbf16>
    %c0_195 = arith.constant 0 : index
    %c0_196 = arith.constant 0 : index
    %234 = vector.load %arg14[%c0_195, %c0_196] : memref<320x128xbf16, #tpu.memory_space<vmem>>, vector<64x128xbf16>
    tpu.vector_store %arg14[%c0_195, %c0_196], %233 {strides = array<i32>} : memref<320x128xbf16, #tpu.memory_space<vmem>>, vector<64x128xbf16>,
    %c0_197 = arith.constant 0 : index
    %c128_198 = arith.constant 128 : index
    %235 = vector.load %arg13[%c0_197, %c128_198] : memref<64x640xbf16, #tpu.memory_space<vmem>>, vector<64x128xbf16>
    %c64_199 = arith.constant 64 : index
    %c0_200 = arith.constant 0 : index
    %236 = vector.load %arg14[%c64_199, %c0_200] : memref<320x128xbf16, #tpu.memory_space<vmem>>, vector<64x128xbf16>
    tpu.vector_store %arg14[%c64_199, %c0_200], %235 {strides = array<i32>} : memref<320x128xbf16, #tpu.memory_space<vmem>>, vector<64x128xbf16>,
    %c0_201 = arith.constant 0 : index
    %c256_202 = arith.constant 256 : index
    %237 = vector.load %arg13[%c0_201, %c256_202] : memref<64x640xbf16, #tpu.memory_space<vmem>>, vector<64x128xbf16>
    %c128_203 = arith.constant 128 : index
    %c0_204 = arith.constant 0 : index
    %238 = vector.load %arg14[%c128_203, %c0_204] : memref<320x128xbf16, #tpu.memory_space<vmem>>, vector<64x128xbf16>
    tpu.vector_store %arg14[%c128_203, %c0_204], %237 {strides = array<i32>} : memref<320x128xbf16, #tpu.memory_space<vmem>>, vector<64x128xbf16>,
    %c0_205 = arith.constant 0 : index
    %c384_206 = arith.constant 384 : index
    %239 = vector.load %arg13[%c0_205, %c384_206] : memref<64x640xbf16, #tpu.memory_space<vmem>>, vector<64x128xbf16>
    %c192_207 = arith.constant 192 : index
    %c0_208 = arith.constant 0 : index
    %240 = vector.load %arg14[%c192_207, %c0_208] : memref<320x128xbf16, #tpu.memory_space<vmem>>, vector<64x128xbf16>
    tpu.vector_store %arg14[%c192_207, %c0_208], %239 {strides = array<i32>} : memref<320x128xbf16, #tpu.memory_space<vmem>>, vector<64x128xbf16>,
    %c0_209 = arith.constant 0 : index
    %c512_210 = arith.constant 512 : index
    %241 = vector.load %arg13[%c0_209, %c512_210] : memref<64x640xbf16, #tpu.memory_space<vmem>>, vector<64x128xbf16>
    %c256_211 = arith.constant 256 : index
    %c0_212 = arith.constant 0 : index
    %242 = vector.load %arg14[%c256_211, %c0_212] : memref<320x128xbf16, #tpu.memory_space<vmem>>, vector<64x128xbf16>
    tpu.vector_store %arg14[%c256_211, %c0_212], %241 {strides = array<i32>} : memref<320x128xbf16, #tpu.memory_space<vmem>>, vector<64x128xbf16>,
    %c0_213 = arith.constant 0 : index
    %c0_214 = arith.constant 0 : index
    %243 = vector.load %arg14[%c0_213, %c0_214] : memref<320x128xbf16, #tpu.memory_space<vmem>>, vector<320x128xbf16>
    %c0_215 = arith.constant 0 : index
    %c0_216 = arith.constant 0 : index
    %244 = vector.load %arg5[%c0_215, %c0_216] : memref<128x128xbf16, #tpu.memory_space<vmem>>, vector<128x128xbf16>
    %cst_217 = arith.constant dense<0.000000e+00> : vector<320x128xf32>
    %245 = tpu.matmul %243, %244, %cst_217 {dimension_numbers = #tpu.dot_dimension_numbers<[1], [0], [0], [1], [0, 0, 1, 1], [], []>} : vector<320x128xbf16>, vector<128x128xbf16>, vector<320x128xf32> -> vector<320x128xf32>
    %c0_218 = arith.constant 0 : index
    %c0_219 = arith.constant 0 : index
    %246 = vector.load %arg6[%c0_218, %c0_219] : memref<320x128xf32, #tpu.memory_space<vmem>>, vector<320x128xf32>
    tpu.vector_store %arg6[%c0_218, %c0_219], %245 {strides = array<i32>} : memref<320x128xf32, #tpu.memory_space<vmem>>, vector<320x128xf32>,
    return
  }
}

</mosaic_0001>

<llo_original>
// kernel: tpu_custom_call.1
$region0: #{tpu_custom_call.1}
  #allocation0 [shape = 'u32[]', space=smem, size = 0x4, offset = 0x4, fixed_abs, tag = 'smem constant byte address 0x4 - core index']
  #allocation1 [shape = 'u32[72,128]{1,0:T(1,128)}', space=vmem, size = 0x9000, scoped, tag = 'internal scratch']
  #allocation2 [shape = 'bf16[64,256]{1,0:T(8,128)(2,1)}', space=vmem, size = 0x8000, scoped, tag = 'scratch operand']
  #allocation3 [shape = 'bf16[128,896]{1,0:T(8,128)(2,1)}', space=vmem, size = 0x38000, scoped, tag = 'scratch operand']
  #allocation4 [shape = 'bf16[448,128]{1,0:T(8,128)(2,1)}', space=vmem, size = 0x1c000, scoped, tag = 'scratch operand']
  #allocation5 [shape = 'bf16[448,128]{1,0:T(8,128)(2,1)}', space=vmem, size = 0x1c000, scoped, tag = 'scratch operand']
  #allocation6 [shape = 'f32[448,128]{1,0:T(8,128)}', space=vmem, size = 0x38000, scoped, tag = 'scratch operand']
  #allocation7 [shape = 'f32[448,128]{1,0:T(8,128)}', space=vmem, size = 0x38000, scoped, tag = 'scratch operand']
  #allocation8 [shape = 'bf16[64,640]{1,0:T(8,128)(2,1)}', space=vmem, size = 0x14000, scoped, tag = 'scratch operand']
  #allocation9 [shape = 'bf16[320,128]{1,0:T(8,128)(2,1)}', space=vmem, size = 0x14000, scoped, tag = 'scratch operand']
  %s0 = inlined_call_operand.hbm [shape: bf16[64,640], index: 0, kind: input, shape index: {}]
  %s1 = inlined_call_operand.hbm [shape: bf16[64,640], index: 1, kind: input, shape index: {}]
  %s2 = inlined_call_operand.vmem [shape: bf16[128,64], index: 2, kind: input, shape index: {}]
  %s3 = inlined_call_operand.vmem [shape: bf16[128,128], index: 3, kind: input, shape index: {}]
  %s4 = inlined_call_operand.hbm [shape: bf16[128,128], index: 4, kind: input, shape index: {}]
  %s5 = inlined_call_operand.hbm [shape: bf16[128,128], index: 5, kind: input, shape index: {}]
  %s6 = inlined_call_operand.hbm [shape: f32[320,128], index: 6, kind: output, shape index: {}]
  %s7 = sld [smem:[#allocation0]]
  $region50: #{tpu_custom_call.1} parent=0
    _
  %s9 = ssub.s32 1, %s7
  %s10 = scalar_select 0, %s9, %s7
  $region1: #{tpu_custom_call.1} parent=0
    #allocation10 [shape = 'u8[81920]{0}', space=vmem, size = 0x14000, scoped, tag = 'input window, operand 0, single buffered']
    #allocation11 [shape = 's32[1]{0}', space=sflag, size = 0x4, scoped, tag = 'scoped memory for tpu_custom_call.1']
    #allocation12 [shape = 's32[1]{0}', space=sflag, size = 0x4, scoped, tag = 'scoped memory for tpu_custom_call.1']
    #allocation13 [shape = 'u8[81920]{0}', space=vmem, size = 0x14000, scoped, tag = 'input window, operand 1, single buffered']
    #allocation14 [shape = 's32[1]{0}', space=sflag, size = 0x4, scoped, tag = 'scoped memory for tpu_custom_call.1']
    #allocation15 [shape = 'u8[32768]{0}', space=vmem, size = 0x8000, scoped, tag = 'input window, operand 4, single buffered']
    #allocation16 [shape = 'u8[32768]{0}', space=vmem, size = 0x8000, scoped, tag = 'input window, operand 5, single buffered']
    #allocation17 [shape = 's32[1]{0}', space=sflag, size = 0x4, scoped, tag = 'scoped memory for tpu_custom_call.1']
    #allocation18 [shape = 'u8[163840]{0}', space=vmem, size = 0x28000, scoped, tag = 'output window, operand 0, single buffered']
    %11 = vsyncpa [#allocation11], 0
    %12 = vsyncpa [#allocation14], 0
    %13 = vsyncpa [#allocation17], 0
    %14 = vsyncpa [#allocation12], 0
    // Predicated region
    $region2: #{tpu_custom_call.1} parent=1 // pred_check
      _
    $region3: #{tpu_custom_call.1} parent=1 // pred_check_branch
      %16 = sbr.rel (0) target = $region5
    $region4: #{tpu_custom_call.1} parent=1 // pred_region
      %18 = vsyncadd [#allocation11], 0
      %s19 = sshll.u32 %s0, 4
      %s20 = int_to_ptr.hbm [resolvable:$true] %s19
      %s21 = sshll.u32 [#allocation10], 4
      %s22 = int_to_ptr.vmem [resolvable:$true] %s21
      %27 = dma.hbm_to_vmem [thread:$0]  %s20, 2560, %s22, [#allocation11], 320, 320, 20
    $region5: #{tpu_custom_call.1} parent=1 // pred_fallthru
      _
    // Predicated region
    $region6: #{tpu_custom_call.1} parent=1 // pred_check
      _
    $region7: #{tpu_custom_call.1} parent=1 // pred_check_branch
      %29 = sbr.rel (0) target = $region9
    $region8: #{tpu_custom_call.1} parent=1 // pred_region
      %31 = vsyncadd [#allocation14], 0
      %s32 = sshll.u32 %s1, 4
      %s33 = int_to_ptr.hbm [resolvable:$true] %s32
      %s34 = sshll.u32 [#allocation13], 4
      %s35 = int_to_ptr.vmem [resolvable:$true] %s34
      %40 = dma.hbm_to_vmem [thread:$0]  %s33, 2560, %s35, [#allocation14], 320, 320, 20
    $region9: #{tpu_custom_call.1} parent=1 // pred_fallthru
      _
    // Predicated region
    $region10: #{tpu_custom_call.1} parent=1 // pred_check
      _
    $region11: #{tpu_custom_call.1} parent=1 // pred_check_branch
      %42 = sbr.rel (0) target = $region13
    $region12: #{tpu_custom_call.1} parent=1 // pred_region
      _
    $region13: #{tpu_custom_call.1} parent=1 // pred_fallthru
      _
    // Predicated region
    $region14: #{tpu_custom_call.1} parent=1 // pred_check
      _
    $region15: #{tpu_custom_call.1} parent=1 // pred_check_branch
      %44 = sbr.rel (0) target = $region17
    $region16: #{tpu_custom_call.1} parent=1 // pred_region
      _
    $region17: #{tpu_custom_call.1} parent=1 // pred_fallthru
      _
    // Predicated region
    $region18: #{tpu_custom_call.1} parent=1 // pred_check
      _
    $region19: #{tpu_custom_call.1} parent=1 // pred_check_branch
      %46 = sbr.rel (0) target = $region21
    $region20: #{tpu_custom_call.1} parent=1 // pred_region
      %48 = vsyncadd [#allocation14], 0
      %s49 = sshll.u32 %s4, 4
      %s50 = int_to_ptr.hbm [resolvable:$true] %s49
      %s51 = sshll.u32 [#allocation15], 4
      %s52 = int_to_ptr.vmem [resolvable:$true] %s51
      %57 = dma.hbm_to_vmem [thread:$0]  %s50, 1024, %s52, [#allocation14], 64, 64, 4
    $region21: #{tpu_custom_call.1} parent=1 // pred_fallthru
      _
    // Predicated region
    $region22: #{tpu_custom_call.1} parent=1 // pred_check
      _
    $region23: #{tpu_custom_call.1} parent=1 // pred_check_branch
      %59 = sbr.rel (0) target = $region25
    $region24: #{tpu_custom_call.1} parent=1 // pred_region
      %61 = vsyncadd [#allocation17], 0
      %s62 = sshll.u32 %s5, 4
      %s63 = int_to_ptr.hbm [resolvable:$true] %s62
      %s64 = sshll.u32 [#allocation16], 4
      %s65 = int_to_ptr.vmem [resolvable:$true] %s64
      %70 = dma.hbm_to_vmem [thread:$0]  %s63, 1024, %s65, [#allocation17], 64, 64, 4
    $region25: #{tpu_custom_call.1} parent=1 // pred_fallthru
      _
    // Predicated region
    $region26: #{tpu_custom_call.1} parent=1 // pred_check
      _
    $region27: #{tpu_custom_call.1} parent=1 // pred_check_branch
      %72 = sbr.rel (0) target = $region29
    $region28: #{tpu_custom_call.1} parent=1 // pred_region
      %74 = dma.done [#allocation11], 2560
    $region29: #{tpu_custom_call.1} parent=1 // pred_fallthru
      _
    // Predicated region
    $region30: #{tpu_custom_call.1} parent=1 // pred_check
      _
    $region31: #{tpu_custom_call.1} parent=1 // pred_check_branch
      %76 = sbr.rel (0) target = $region33
    $region32: #{tpu_custom_call.1} parent=1 // pred_region
      %78 = dma.done [#allocation14], 2560
    $region33: #{tpu_custom_call.1} parent=1 // pred_fallthru
      _
    // Predicated region
    $region34: #{tpu_custom_call.1} parent=1 // pred_check
      _
    $region35: #{tpu_custom_call.1} parent=1 // pred_check_branch
      %80 = sbr.rel (0) target = $region37
    $region36: #{tpu_custom_call.1} parent=1 // pred_region
      %82 = dma.done [#allocation14], 1024
    $region37: #{tpu_custom_call.1} parent=1 // pred_fallthru
      _
    // Predicated region
    $region38: #{tpu_custom_call.1} parent=1 // pred_check
      _
    $region39: #{tpu_custom_call.1} parent=1 // pred_check_branch
      %84 = sbr.rel (0) target = $region41
    $region40: #{tpu_custom_call.1} parent=1 // pred_region
      %86 = dma.done [#allocation17], 1024
    $region41: #{tpu_custom_call.1} parent=1 // pred_fallthru
      _
    %v88 = vld [vmem:[#allocation10] sm:$0xf]
    %v89 = vld [vmem:[#allocation10 + $0x14] sm:$0xf]
    %v90 = vld [vmem:[#allocation10 + $0x28] sm:$0xf]
    %v91 = vld [vmem:[#allocation10 + $0x3c] sm:$0xf]
    %v92 = vld [vmem:[#allocation10 + $0x50] sm:$0xf]
    %v93 = vld [vmem:[#allocation10 + $0x64] sm:$0xf]
    %v94 = vld [vmem:[#allocation10 + $0x78] sm:$0xf]
    %v95 = vld [vmem:[#allocation10 + $0x8c] sm:$0xf]
    %v96 = vunpack.c.l.bf16 %v88
    %v97 = vunpack.c.l.bf16 %v89
    %v98 = vunpack.c.l.bf16 %v90
    %v99 = vunpack.c.l.bf16 %v91
    %v100 = vunpack.c.l.bf16 %v92
    %v101 = vunpack.c.l.bf16 %v93
    %v102 = vunpack.c.l.bf16 %v94
    %v103 = vunpack.c.l.bf16 %v95
    %v104 = vld [vmem:[#allocation13] sm:$0xf]
    %v105 = vld [vmem:[#allocation13 + $0x14] sm:$0xf]
    %v106 = vld [vmem:[#allocation13 + $0x28] sm:$0xf]
    %v107 = vld [vmem:[#allocation13 + $0x3c] sm:$0xf]
    %v108 = vld [vmem:[#allocation13 + $0x50] sm:$0xf]
    %v109 = vld [vmem:[#allocation13 + $0x64] sm:$0xf]
    %v110 = vld [vmem:[#allocation13 + $0x78] sm:$0xf]
    %v111 = vld [vmem:[#allocation13 + $0x8c] sm:$0xf]
    %v112 = vunpack.c.l.bf16 %v104
    %v113 = vunpack.c.l.bf16 %v105
    %v114 = vunpack.c.l.bf16 %v106
    %v115 = vunpack.c.l.bf16 %v107
    %v116 = vunpack.c.l.bf16 %v108
    %v117 = vunpack.c.l.bf16 %v109
    %v118 = vunpack.c.l.bf16 %v110
    %v119 = vunpack.c.l.bf16 %v111
    %v120 = vsub.f32 %v96, %v112
    %v121 = vsub.f32 %v97, %v113
    %v122 = vsub.f32 %v98, %v114
    %v123 = vsub.f32 %v99, %v115
    %v124 = vsub.f32 %v100, %v116
    %v125 = vsub.f32 %v101, %v117
    %v126 = vsub.f32 %v102, %v118
    %v127 = vsub.f32 %v103, %v119
    %v128 = vmul.f32 %v120, -0.061061393
    %v129 = vmul.f32 %v121, -0.061061393
    %v130 = vmul.f32 %v122, -0.061061393
    %v131 = vmul.f32 %v123, -0.061061393
    %v132 = vmul.f32 %v124, -0.061061393
    %v133 = vmul.f32 %v125, -0.061061393
    %v134 = vmul.f32 %v126, -0.061061393
    %v135 = vmul.f32 %v127, -0.061061393
    %v136 = vadd.f32 %v96, %v112
    %v137 = vadd.f32 %v97, %v113
    %v138 = vadd.f32 %v98, %v114
    %v139 = vadd.f32 %v99, %v115
    %v140 = vadd.f32 %v100, %v116
    %v141 = vadd.f32 %v101, %v117
    %v142 = vadd.f32 %v102, %v118
    %v143 = vadd.f32 %v103, %v119
    %v144 = vmul.f32 %v136, -0.029463796
    %v145 = vmul.f32 %v137, -0.029463796
    %v146 = vmul.f32 %v138, -0.029463796
    %v147 = vmul.f32 %v139, -0.029463796
    %v148 = vmul.f32 %v140, -0.029463796
    %v149 = vmul.f32 %v141, -0.029463796
    %v150 = vmul.f32 %v142, -0.029463796
    %v151 = vmul.f32 %v143, -0.029463796
    %v152 = vld [vmem:[#allocation10 + $0x4] sm:$0xf]
    %v153 = vld [vmem:[#allocation10 + $0x18] sm:$0xf]
    %v154 = vld [vmem:[#allocation10 + $0x2c] sm:$0xf]
    %v155 = vld [vmem:[#allocation10 + $0x40] sm:$0xf]
    %v156 = vld [vmem:[#allocation10 + $0x54] sm:$0xf]
    %v157 = vld [vmem:[#allocation10 + $0x68] sm:$0xf]
    %v158 = vld [vmem:[#allocation10 + $0x7c] sm:$0xf]
    %v159 = vld [vmem:[#allocation10 + $0x90] sm:$0xf]
    %v160 = vunpack.c.l.bf16 %v152
    %v161 = vunpack.c.l.bf16 %v153
    %v162 = vunpack.c.l.bf16 %v154
    %v163 = vunpack.c.l.bf16 %v155
    %v164 = vunpack.c.l.bf16 %v156
    %v165 = vunpack.c.l.bf16 %v157
    %v166 = vunpack.c.l.bf16 %v158
    %v167 = vunpack.c.l.bf16 %v159
    %v168 = vld [vmem:[#allocation13 + $0x4] sm:$0xf]
    %v169 = vld [vmem:[#allocation13 + $0x18] sm:$0xf]
    %v170 = vld [vmem:[#allocation13 + $0x2c] sm:$0xf]
    %v171 = vld [vmem:[#allocation13 + $0x40] sm:$0xf]
    %v172 = vld [vmem:[#allocation13 + $0x54] sm:$0xf]
    %v173 = vld [vmem:[#allocation13 + $0x68] sm:$0xf]
    %v174 = vld [vmem:[#allocation13 + $0x7c] sm:$0xf]
    %v175 = vld [vmem:[#allocation13 + $0x90] sm:$0xf]
    %v176 = vunpack.c.l.bf16 %v168
    %v177 = vunpack.c.l.bf16 %v169
    %v178 = vunpack.c.l.bf16 %v170
    %v179 = vunpack.c.l.bf16 %v171
    %v180 = vunpack.c.l.bf16 %v172
    %v181 = vunpack.c.l.bf16 %v173
    %v182 = vunpack.c.l.bf16 %v174
    %v183 = vunpack.c.l.bf16 %v175
    %v184 = vsub.f32 %v160, %v176
    %v185 = vsub.f32 %v161, %v177
    %v186 = vsub.f32 %v162, %v178
    %v187 = vsub.f32 %v163, %v179
    %v188 = vsub.f32 %v164, %v180
    %v189 = vsub.f32 %v165, %v181
    %v190 = vsub.f32 %v166, %v182
    %v191 = vsub.f32 %v167, %v183
    %v192 = vmul.f32 %v184, -0.050892014
    %v193 = vmul.f32 %v185, -0.050892014
    %v194 = vmul.f32 %v186, -0.050892014
    %v195 = vmul.f32 %v187, -0.050892014
    %v196 = vmul.f32 %v188, -0.050892014
    %v197 = vmul.f32 %v189, -0.050892014
    %v198 = vmul.f32 %v190, -0.050892014
    %v199 = vmul.f32 %v191, -0.050892014
    %v200 = vadd.f32 %v160, %v176
    %v201 = vadd.f32 %v161, %v177
    %v202 = vadd.f32 %v162, %v178
    %v203 = vadd.f32 %v163, %v179
    %v204 = vadd.f32 %v164, %v180
    %v205 = vadd.f32 %v165, %v181
    %v206 = vadd.f32 %v166, %v182
    %v207 = vadd.f32 %v167, %v183
    %v208 = vmul.f32 %v200, -0.02870549
    %v209 = vmul.f32 %v201, -0.02870549
    %v210 = vmul.f32 %v202, -0.02870549
    %v211 = vmul.f32 %v203, -0.02870549
    %v212 = vmul.f32 %v204, -0.02870549
    %v213 = vmul.f32 %v205, -0.02870549
    %v214 = vmul.f32 %v206, -0.02870549
    %v215 = vmul.f32 %v207, -0.02870549
    %v216 = vadd.f32 %v128, %v192
    %v217 = vadd.f32 %v129, %v193
    %v218 = vadd.f32 %v130, %v194
    %v219 = vadd.f32 %v131, %v195
    %v220 = vadd.f32 %v132, %v196
    %v221 = vadd.f32 %v133, %v197
    %v222 = vadd.f32 %v134, %v198
    %v223 = vadd.f32 %v135, %v199
    %v224 = vadd.f32 %v144, %v208
    %v225 = vadd.f32 %v145, %v209
    %v226 = vadd.f32 %v146, %v210
    %v227 = vadd.f32 %v147, %v211
    %v228 = vadd.f32 %v148, %v212
    %v229 = vadd.f32 %v149, %v213
    %v230 = vadd.f32 %v150, %v214
    %v231 = vadd.f32 %v151, %v215
    %v232 = vld [vmem:[#allocation10 + $0x8] sm:$0xf]
    %v233 = vld [vmem:[#allocation10 + $0x1c] sm:$0xf]
    %v234 = vld [vmem:[#allocation10 + $0x30] sm:$0xf]
    %v235 = vld [vmem:[#allocation10 + $0x44] sm:$0xf]
    %v236 = vld [vmem:[#allocation10 + $0x58] sm:$0xf]
    %v237 = vld [vmem:[#allocation10 + $0x6c] sm:$0xf]
    %v238 = vld [vmem:[#allocation10 + $0x80] sm:$0xf]
    %v239 = vld [vmem:[#allocation10 + $0x94] sm:$0xf]
    %v240 = vunpack.c.l.bf16 %v232
    %v241 = vunpack.c.l.bf16 %v233
    %v242 = vunpack.c.l.bf16 %v234
    %v243 = vunpack.c.l.bf16 %v235
    %v244 = vunpack.c.l.bf16 %v236
    %v245 = vunpack.c.l.bf16 %v237
    %v246 = vunpack.c.l.bf16 %v238
    %v247 = vunpack.c.l.bf16 %v239
    %v248 = vld [vmem:[#allocation13 + $0x8] sm:$0xf]
    %v249 = vld [vmem:[#allocation13 + $0x1c] sm:$0xf]
    %v250 = vld [vmem:[#allocation13 + $0x30] sm:$0xf]
    %v251 = vld [vmem:[#allocation13 + $0x44] sm:$0xf]
    %v252 = vld [vmem:[#allocation13 + $0x58] sm:$0xf]
    %v253 = vld [vmem:[#allocation13 + $0x6c] sm:$0xf]
    %v254 = vld [vmem:[#allocation13 + $0x80] sm:$0xf]
    %v255 = vld [vmem:[#allocation13 + $0x94] sm:$0xf]
    %v256 = vunpack.c.l.bf16 %v248
    %v257 = vunpack.c.l.bf16 %v249
    %v258 = vunpack.c.l.bf16 %v250
    %v259 = vunpack.c.l.bf16 %v251
    %v260 = vunpack.c.l.bf16 %v252
    %v261 = vunpack.c.l.bf16 %v253
    %v262 = vunpack.c.l.bf16 %v254
    %v263 = vunpack.c.l.bf16 %v255
    %v264 = vsub.f32 %v240, %v256
    %v265 = vsub.f32 %v241, %v257
    %v266 = vsub.f32 %v242, %v258
    %v267 = vsub.f32 %v243, %v259
    %v268 = vsub.f32 %v244, %v260
    %v269 = vsub.f32 %v245, %v261
    %v270 = vsub.f32 %v246, %v262
    %v271 = vsub.f32 %v247, %v263
    %v272 = vmul.f32 %v264, 0.005138606
    %v273 = vmul.f32 %v265, 0.005138606
    %v274 = vmul.f32 %v266, 0.005138606
    %v275 = vmul.f32 %v267, 0.005138606
    %v276 = vmul.f32 %v268, 0.005138606
    %v277 = vmul.f32 %v269, 0.005138606
    %v278 = vmul.f32 %v270, 0.005138606
    %v279 = vmul.f32 %v271, 0.005138606
    %v280 = vadd.f32 %v240, %v256
    %v281 = vadd.f32 %v241, %v257
    %v282 = vadd.f32 %v242, %v258
    %v283 = vadd.f32 %v243, %v259
    %v284 = vadd.f32 %v244, %v260
    %v285 = vadd.f32 %v245, %v261
    %v286 = vadd.f32 %v246, %v262
    %v287 = vadd.f32 %v247, %v263
    %v288 = vmul.f32 %v280, 0.007429145
    %v289 = vmul.f32 %v281, 0.007429145
    %v290 = vmul.f32 %v282, 0.007429145
    %v291 = vmul.f32 %v283, 0.007429145
    %v292 = vmul.f32 %v284, 0.007429145
    %v293 = vmul.f32 %v285, 0.007429145
    %v294 = vmul.f32 %v286, 0.007429145
    %v295 = vmul.f32 %v287, 0.007429145
    %v296 = vadd.f32 %v216, %v272
    %v297 = vadd.f32 %v217, %v273
    %v298 = vadd.f32 %v218, %v274
    %v299 = vadd.f32 %v219, %v275
    %v300 = vadd.f32 %v220, %v276
    %v301 = vadd.f32 %v221, %v277
    %v302 = vadd.f32 %v222, %v278
    %v303 = vadd.f32 %v223, %v279
    %v304 = vadd.f32 %v224, %v288
    %v305 = vadd.f32 %v225, %v289
    %v306 = vadd.f32 %v226, %v290
    %v307 = vadd.f32 %v227, %v291
    %v308 = vadd.f32 %v228, %v292
    %v309 = vadd.f32 %v229, %v293
    %v310 = vadd.f32 %v230, %v294
    %v311 = vadd.f32 %v231, %v295
    %v312 = vld [vmem:[#allocation10 + $0xc] sm:$0xf]
    %v313 = vld [vmem:[#allocation10 + $0x20] sm:$0xf]
    %v314 = vld [vmem:[#allocation10 + $0x34] sm:$0xf]
    %v315 = vld [vmem:[#allocation10 + $0x48] sm:$0xf]
    %v316 = vld [vmem:[#allocation10 + $0x5c] sm:$0xf]
    %v317 = vld [vmem:[#allocation10 + $0x70] sm:$0xf]
    %v318 = vld [vmem:[#allocation10 + $0x84] sm:$0xf]
    %v319 = vld [vmem:[#allocation10 + $0x98] sm:$0xf]
    %v320 = vunpack.c.l.bf16 %v312
    %v321 = vunpack.c.l.bf16 %v313
    %v322 = vunpack.c.l.bf16 %v314
    %v323 = vunpack.c.l.bf16 %v315
    %v324 = vunpack.c.l.bf16 %v316
    %v325 = vunpack.c.l.bf16 %v317
    %v326 = vunpack.c.l.bf16 %v318
    %v327 = vunpack.c.l.bf16 %v319
    %v328 = vld [vmem:[#allocation13 + $0xc] sm:$0xf]
    %v329 = vld [vmem:[#allocation13 + $0x20] sm:$0xf]
    %v330 = vld [vmem:[#allocation13 + $0x34] sm:$0xf]
    %v331 = vld [vmem:[#allocation13 + $0x48] sm:$0xf]
    %v332 = vld [vmem:[#allocation13 + $0x5c] sm:$0xf]
    %v333 = vld [vmem:[#allocation13 + $0x70] sm:$0xf]
    %v334 = vld [vmem:[#allocation13 + $0x84] sm:$0xf]
    %v335 = vld [vmem:[#allocation13 + $0x98] sm:$0xf]
    %v336 = vunpack.c.l.bf16 %v328
    %v337 = vunpack.c.l.bf16 %v329
    %v338 = vunpack.c.l.bf16 %v330
    %v339 = vunpack.c.l.bf16 %v331
    %v340 = vunpack.c.l.bf16 %v332
    %v341 = vunpack.c.l.bf16 %v333
    %v342 = vunpack.c.l.bf16 %v334
    %v343 = vunpack.c.l.bf16 %v335
    %v344 = vsub.f32 %v320, %v336
    %v345 = vsub.f32 %v321, %v337
    %v346 = vsub.f32 %v322, %v338
    %v347 = vsub.f32 %v323, %v339
    %v348 = vsub.f32 %v324, %v340
    %v349 = vsub.f32 %v325, %v341
    %v350 = vsub.f32 %v326, %v342
    %v351 = vsub.f32 %v327, %v343
    %v352 = vmul.f32 %v344, -0.008838755
    %v353 = vmul.f32 %v345, -0.008838755
    %v354 = vmul.f32 %v346, -0.008838755
    %v355 = vmul.f32 %v347, -0.008838755
    %v356 = vmul.f32 %v348, -0.008838755
    %v357 = vmul.f32 %v349, -0.008838755
    %v358 = vmul.f32 %v350, -0.008838755
    %v359 = vmul.f32 %v351, -0.008838755
    %v360 = vadd.f32 %v320, %v336
    %v361 = vadd.f32 %v321, %v337
    %v362 = vadd.f32 %v322, %v338
    %v363 = vadd.f32 %v323, %v339
    %v364 = vadd.f32 %v324, %v340
    %v365 = vadd.f32 %v325, %v341
    %v366 = vadd.f32 %v326, %v342
    %v367 = vadd.f32 %v327, %v343
    %v368 = vmul.f32 %v360, -0.0327634
    %v369 = vmul.f32 %v361, -0.0327634
    %v370 = vmul.f32 %v362, -0.0327634
    %v371 = vmul.f32 %v363, -0.0327634
    %v372 = vmul.f32 %v364, -0.0327634
    %v373 = vmul.f32 %v365, -0.0327634
    %v374 = vmul.f32 %v366, -0.0327634
    %v375 = vmul.f32 %v367, -0.0327634
    %v376 = vadd.f32 %v296, %v352
    %v377 = vadd.f32 %v297, %v353
    %v378 = vadd.f32 %v298, %v354
    %v379 = vadd.f32 %v299, %v355
    %v380 = vadd.f32 %v300, %v356
    %v381 = vadd.f32 %v301, %v357
    %v382 = vadd.f32 %v302, %v358
    %v383 = vadd.f32 %v303, %v359
    %v384 = vadd.f32 %v304, %v368
    %v385 = vadd.f32 %v305, %v369
    %v386 = vadd.f32 %v306, %v370
    %v387 = vadd.f32 %v307, %v371
    %v388 = vadd.f32 %v308, %v372
    %v389 = vadd.f32 %v309, %v373
    %v390 = vadd.f32 %v310, %v374
    %v391 = vadd.f32 %v311, %v375
    %v392 = vld [vmem:[#allocation10 + $0x10] sm:$0xf]
    %v393 = vld [vmem:[#allocation10 + $0x24] sm:$0xf]
    %v394 = vld [vmem:[#allocation10 + $0x38] sm:$0xf]
    %v395 = vld [vmem:[#allocation10 + $0x4c] sm:$0xf]
    %v396 = vld [vmem:[#allocation10 + $0x60] sm:$0xf]
    %v397 = vld [vmem:[#allocation10 + $0x74] sm:$0xf]
    %v398 = vld [vmem:[#allocation10 + $0x88] sm:$0xf]
    %v399 = vld [vmem:[#allocation10 + $0x9c] sm:$0xf]
    %v400 = vunpack.c.l.bf16 %v392
    %v401 = vunpack.c.l.bf16 %v393
    %v402 = vunpack.c.l.bf16 %v394
    %v403 = vunpack.c.l.bf16 %v395
    %v404 = vunpack.c.l.bf16 %v396
    %v405 = vunpack.c.l.bf16 %v397
    %v406 = vunpack.c.l.bf16 %v398
    %v407 = vunpack.c.l.bf16 %v399
    %v408 = vld [vmem:[#allocation13 + $0x10] sm:$0xf]
    %v409 = vld [vmem:[#allocation13 + $0x24] sm:$0xf]
    %v410 = vld [vmem:[#allocation13 + $0x38] sm:$0xf]
    %v411 = vld [vmem:[#allocation13 + $0x4c] sm:$0xf]
    %v412 = vld [vmem:[#allocation13 + $0x60] sm:$0xf]
    %v413 = vld [vmem:[#allocation13 + $0x74] sm:$0xf]
    %v414 = vld [vmem:[#allocation13 + $0x88] sm:$0xf]
    %v415 = vld [vmem:[#allocation13 + $0x9c] sm:$0xf]
    %v416 = vunpack.c.l.bf16 %v408
    %v417 = vunpack.c.l.bf16 %v409
    %v418 = vunpack.c.l.bf16 %v410
    %v419 = vunpack.c.l.bf16 %v411
    %v420 = vunpack.c.l.bf16 %v412
    %v421 = vunpack.c.l.bf16 %v413
    %v422 = vunpack.c.l.bf16 %v414
    %v423 = vunpack.c.l.bf16 %v415
    %v424 = vsub.f32 %v400, %v416
    %v425 = vsub.f32 %v401, %v417
    %v426 = vsub.f32 %v402, %v418
    %v427 = vsub.f32 %v403, %v419
    %v428 = vsub.f32 %v404, %v420
    %v429 = vsub.f32 %v405, %v421
    %v430 = vsub.f32 %v406, %v422
    %v431 = vsub.f32 %v407, %v423
    %v432 = vmul.f32 %v424, -0.019049352
    %v433 = vmul.f32 %v425, -0.019049352
    %v434 = vmul.f32 %v426, -0.019049352
    %v435 = vmul.f32 %v427, -0.019049352
    %v436 = vmul.f32 %v428, -0.019049352
    %v437 = vmul.f32 %v429, -0.019049352
    %v438 = vmul.f32 %v430, -0.019049352
    %v439 = vmul.f32 %v431, -0.019049352
    %v440 = vadd.f32 %v400, %v416
    %v441 = vadd.f32 %v401, %v417
    %v442 = vadd.f32 %v402, %v418
    %v443 = vadd.f32 %v403, %v419
    %v444 = vadd.f32 %v404, %v420
    %v445 = vadd.f32 %v405, %v421
    %v446 = vadd.f32 %v406, %v422
    %v447 = vadd.f32 %v407, %v423
    %v448 = vmul.f32 %v440, 0.053255063
    %v449 = vmul.f32 %v441, 0.053255063
    %v450 = vmul.f32 %v442, 0.053255063
    %v451 = vmul.f32 %v443, 0.053255063
    %v452 = vmul.f32 %v444, 0.053255063
    %v453 = vmul.f32 %v445, 0.053255063
    %v454 = vmul.f32 %v446, 0.053255063
    %v455 = vmul.f32 %v447, 0.053255063
    %v456 = vadd.f32 %v376, %v432
    %v457 = vadd.f32 %v377, %v433
    %v458 = vadd.f32 %v378, %v434
    %v459 = vadd.f32 %v379, %v435
    %v460 = vadd.f32 %v380, %v436
    %v461 = vadd.f32 %v381, %v437
    %v462 = vadd.f32 %v382, %v438
    %v463 = vadd.f32 %v383, %v439
    %v464 = vadd.f32 %v384, %v448
    %v465 = vadd.f32 %v385, %v449
    %v466 = vadd.f32 %v386, %v450
    %v467 = vadd.f32 %v387, %v451
    %v468 = vadd.f32 %v388, %v452
    %v469 = vadd.f32 %v389, %v453
    %v470 = vadd.f32 %v390, %v454
    %v471 = vadd.f32 %v391, %v455
    %v472 = vpack.c.bf16 %v456, %v456
    %v473 = vpack.c.bf16 %v457, %v457
    %v474 = vpack.c.bf16 %v458, %v458
    %v475 = vpack.c.bf16 %v459, %v459
    %v476 = vpack.c.bf16 %v460, %v460
    %v477 = vpack.c.bf16 %v461, %v461
    %v478 = vpack.c.bf16 %v462, %v462
    %v479 = vpack.c.bf16 %v463, %v463
    %480 = vst [vmem:[#allocation2] sm:$0xf] %v472
    %481 = vst [vmem:[#allocation2 + $0x8] sm:$0xf] %v473
    %482 = vst [vmem:[#allocation2 + $0x10] sm:$0xf] %v474
    %483 = vst [vmem:[#allocation2 + $0x18] sm:$0xf] %v475
    %484 = vst [vmem:[#allocation2 + $0x20] sm:$0xf] %v476
    %485 = vst [vmem:[#allocation2 + $0x28] sm:$0xf] %v477
    %486 = vst [vmem:[#allocation2 + $0x30] sm:$0xf] %v478
    %487 = vst [vmem:[#allocation2 + $0x38] sm:$0xf] %v479
    %v488 = vpack.c.bf16 %v464, %v464
    %v489 = vpack.c.bf16 %v465, %v465
    %v490 = vpack.c.bf16 %v466, %v466
    %v491 = vpack.c.bf16 %v467, %v467
    %v492 = vpack.c.bf16 %v468, %v468
    %v493 = vpack.c.bf16 %v469, %v469
    %v494 = vpack.c.bf16 %v470, %v470
    %v495 = vpack.c.bf16 %v471, %v471
    %496 = vst [vmem:[#allocation2 + $0x4] sm:$0xf] %v488
    %497 = vst [vmem:[#allocation2 + $0xc] sm:$0xf] %v489
    %498 = vst [vmem:[#allocation2 + $0x14] sm:$0xf] %v490
    %499 = vst [vmem:[#allocation2 + $0x1c] sm:$0xf] %v491
    %500 = vst [vmem:[#allocation2 + $0x24] sm:$0xf] %v492
    %501 = vst [vmem:[#allocation2 + $0x2c] sm:$0xf] %v493
    %502 = vst [vmem:[#allocation2 + $0x34] sm:$0xf] %v494
    %503 = vst [vmem:[#allocation2 + $0x3c] sm:$0xf] %v495
    %v504 = vld [vmem:[%s2] sm:$0xf]
    %v505 = vld [vmem:[%s2 + $0x4] sm:$0xf]
    %v506 = vld [vmem:[%s2 + $0x8] sm:$0xf]
    %v507 = vld [vmem:[%s2 + $0xc] sm:$0xf]
    %v508 = vld [vmem:[%s2 + $0x10] sm:$0xf]
    %v509 = vld [vmem:[%s2 + $0x14] sm:$0xf]
    %v510 = vld [vmem:[%s2 + $0x18] sm:$0xf]
    %v511 = vld [vmem:[%s2 + $0x1c] sm:$0xf]
    %v512 = vld [vmem:[%s2 + $0x20] sm:$0xf]
    %v513 = vld [vmem:[%s2 + $0x24] sm:$0xf]
    %v514 = vld [vmem:[%s2 + $0x28] sm:$0xf]
    %v515 = vld [vmem:[%s2 + $0x2c] sm:$0xf]
    %v516 = vld [vmem:[%s2 + $0x30] sm:$0xf]
    %v517 = vld [vmem:[%s2 + $0x34] sm:$0xf]
    %v518 = vld [vmem:[%s2 + $0x38] sm:$0xf]
    %v519 = vld [vmem:[%s2 + $0x3c] sm:$0xf]
    %v520 = vld [vmem:[#allocation10] sm:$0xff]
    %v521 = vld [vmem:[#allocation10 + $0x8] sm:$0xff]
    %v522 = vld [vmem:[#allocation10 + $0x10] sm:$0xf]
    %v523 = vld [vmem:[#allocation10 + $0x14] sm:$0xff]
    %v524 = vld [vmem:[#allocation10 + $0x1c] sm:$0xff]
    %v525 = vld [vmem:[#allocation10 + $0x24] sm:$0xf]
    %v526 = vld [vmem:[#allocation10 + $0x28] sm:$0xff]
    %v527 = vld [vmem:[#allocation10 + $0x30] sm:$0xff]
    %v528 = vld [vmem:[#allocation10 + $0x38] sm:$0xf]
    %v529 = vld [vmem:[#allocation10 + $0x3c] sm:$0xff]
    %v530 = vld [vmem:[#allocation10 + $0x44] sm:$0xff]
    %v531 = vld [vmem:[#allocation10 + $0x4c] sm:$0xf]
    %v532 = vld [vmem:[#allocation10 + $0x50] sm:$0xff]
    %v533 = vld [vmem:[#allocation10 + $0x58] sm:$0xff]
    %v534 = vld [vmem:[#allocation10 + $0x60] sm:$0xf]
    %v535 = vld [vmem:[#allocation10 + $0x64] sm:$0xff]
    %v536 = vld [vmem:[#allocation10 + $0x6c] sm:$0xff]
    %v537 = vld [vmem:[#allocation10 + $0x74] sm:$0xf]
    %v538 = vld [vmem:[#allocation10 + $0x78] sm:$0xff]
    %v539 = vld [vmem:[#allocation10 + $0x80] sm:$0xff]
    %v540 = vld [vmem:[#allocation10 + $0x88] sm:$0xf]
    %v541 = vld [vmem:[#allocation10 + $0x8c] sm:$0xff]
    %v542 = vld [vmem:[#allocation10 + $0x94] sm:$0xff]
    %v543 = vld [vmem:[#allocation10 + $0x9c] sm:$0xf]
    %v560 = vunpack.c.l.b16 %v504
    %v561 = vunpack.c.l.b16 %v505
    %v562 = vunpack.c.l.b16 %v506
    %v563 = vunpack.c.l.b16 %v507
    %v564 = vunpack.c.l.b16 %v508
    %v565 = vunpack.c.l.b16 %v509
    %v566 = vunpack.c.l.b16 %v510
    %v567 = vunpack.c.l.b16 %v511
    %v568 = vunpack.c.l.b16 %v512
    %v569 = vunpack.c.l.b16 %v513
    %v570 = vunpack.c.l.b16 %v514
    %v571 = vunpack.c.l.b16 %v515
    %v572 = vunpack.c.l.b16 %v516
    %v573 = vunpack.c.l.b16 %v517
    %v574 = vunpack.c.l.b16 %v518
    %v575 = vunpack.c.l.b16 %v519
    %v576 = vpack.c.b16 %v561, %v560
    %v577 = vpack.c.b16 %v563, %v562
    %v578 = vpack.c.b16 %v565, %v564
    %v579 = vpack.c.b16 %v567, %v566
    %v580 = vpack.c.b16 %v569, %v568
    %v581 = vpack.c.b16 %v571, %v570
    %v582 = vpack.c.b16 %v573, %v572
    %v583 = vpack.c.b16 %v575, %v574
    %v608 = vunpack.c.l.b16 %v520
    %v609 = vunpack.c.h.b16 %v520
    %v610 = vunpack.c.l.b16 %v521
    %v611 = vunpack.c.h.b16 %v521
    %v612 = vunpack.c.l.b16 %v522
    %v613 = vunpack.c.l.b16 %v523
    %v614 = vunpack.c.h.b16 %v523
    %v615 = vunpack.c.l.b16 %v524
    %v616 = vunpack.c.h.b16 %v524
    %v617 = vunpack.c.l.b16 %v525
    %v618 = vunpack.c.l.b16 %v526
    %v619 = vunpack.c.h.b16 %v526
    %v620 = vunpack.c.l.b16 %v527
    %v621 = vunpack.c.h.b16 %v527
    %v622 = vunpack.c.l.b16 %v528
    %v623 = vunpack.c.l.b16 %v529
    %v624 = vunpack.c.h.b16 %v529
    %v625 = vunpack.c.l.b16 %v530
    %v626 = vunpack.c.h.b16 %v530
    %v627 = vunpack.c.l.b16 %v531
    %v628 = vunpack.c.l.b16 %v532
    %v629 = vunpack.c.h.b16 %v532
    %v630 = vunpack.c.l.b16 %v533
    %v631 = vunpack.c.h.b16 %v533
    %v632 = vunpack.c.l.b16 %v534
    %v633 = vunpack.c.l.b16 %v535
    %v634 = vunpack.c.h.b16 %v535
    %v635 = vunpack.c.l.b16 %v536
    %v636 = vunpack.c.h.b16 %v536
    %v637 = vunpack.c.l.b16 %v537
    %v638 = vunpack.c.l.b16 %v538
    %v639 = vunpack.c.h.b16 %v538
    %v640 = vunpack.c.l.b16 %v539
    %v641 = vunpack.c.h.b16 %v539
    %v642 = vunpack.c.l.b16 %v540
    %v643 = vunpack.c.l.b16 %v541
    %v644 = vunpack.c.h.b16 %v541
    %v645 = vunpack.c.l.b16 %v542
    %v646 = vunpack.c.h.b16 %v542
    %v647 = vunpack.c.l.b16 %v543
    %v648 = vpack.c.b16 %v613, %v608
    %v649 = vpack.c.b16 %v614, %v609
    %v650 = vpack.c.b16 %v615, %v610
    %v651 = vpack.c.b16 %v616, %v611
    %v652 = vpack.c.b16 %v617, %v612
    %v653 = vpack.c.b16 %v623, %v618
    %v654 = vpack.c.b16 %v624, %v619
    %v655 = vpack.c.b16 %v625, %v620
    %v656 = vpack.c.b16 %v626, %v621
    %v657 = vpack.c.b16 %v627, %v622
    %v658 = vpack.c.b16 %v633, %v628
    %v659 = vpack.c.b16 %v634, %v629
    %v660 = vpack.c.b16 %v635, %v630
    %v661 = vpack.c.b16 %v636, %v631
    %v662 = vpack.c.b16 %v637, %v632
    %v663 = vpack.c.b16 %v643, %v638
    %v664 = vpack.c.b16 %v644, %v639
    %v665 = vpack.c.b16 %v645, %v640
    %v666 = vpack.c.b16 %v646, %v641
    %v667 = vpack.c.b16 %v647, %v642
    %vm688 = vcmask 523264
    %v690 = vsel %vm688, %v576, 0
    %v693 = vsel %vm688, %v577, 0
    %v696 = vsel %vm688, %v578, 0
    %v699 = vsel %vm688, %v579, 0
    %v702 = vsel %vm688, %v580, 0
    %v705 = vsel %vm688, %v581, 0
    %v708 = vsel %vm688, %v582, 0
    %v711 = vsel %vm688, %v583, 0
    %713 = vmatpush.bf16.msra.mxu0 0
    %714 = vmatpush.bf16.msra.mxu0 0
    %715 = vmatpush.bf16.msra.mxu0 0
    %716 = vmatpush.bf16.msra.mxu0 0
    %717 = vmatpush.bf16.msra.mxu0 %v663
    %718 = vmatpush.bf16.msra.mxu0 %v658
    %719 = vmatpush.bf16.msra.mxu0 %v653
    %720 = vmatpush.bf16.msra.mxu0 %v648
    %721 = vmatmul.bf16.gmra.mxu0 %v690
    %v722 = vpop.f32.mrf.mxu0
    %v723 = vadd.f32 0.0, %v722
    %v724 = vpop.f32.mrf.mxu0
    %v725 = vadd.f32 0.0, %v724
    %726 = vmatmul.bf16.gmra.mxu0 %v693
    %v727 = vpop.f32.mrf.mxu0
    %v728 = vadd.f32 0.0, %v727
    %v729 = vpop.f32.mrf.mxu0
    %v730 = vadd.f32 0.0, %v729
    %731 = vmatmul.bf16.gmra.mxu0 %v696
    %v732 = vpop.f32.mrf.mxu0
    %v733 = vadd.f32 0.0, %v732
    %v734 = vpop.f32.mrf.mxu0
    %v735 = vadd.f32 0.0, %v734
    %736 = vmatmul.bf16.gmra.mxu0 %v699
    %v737 = vpop.f32.mrf.mxu0
    %v738 = vadd.f32 0.0, %v737
    %v739 = vpop.f32.mrf.mxu0
    %v740 = vadd.f32 0.0, %v739
    %741 = vmatmul.bf16.gmra.mxu0 %v702
    %v742 = vpop.f32.mrf.mxu0
    %v743 = vadd.f32 0.0, %v742
    %v744 = vpop.f32.mrf.mxu0
    %v745 = vadd.f32 0.0, %v744
    %746 = vmatmul.bf16.gmra.mxu0 %v705
    %v747 = vpop.f32.mrf.mxu0
    %v748 = vadd.f32 0.0, %v747
    %v749 = vpop.f32.mrf.mxu0
    %v750 = vadd.f32 0.0, %v749
    %751 = vmatmul.bf16.gmra.mxu0 %v708
    %v752 = vpop.f32.mrf.mxu0
    %v753 = vadd.f32 0.0, %v752
    %v754 = vpop.f32.mrf.mxu0
    %v755 = vadd.f32 0.0, %v754
    %756 = vmatmul.bf16.gmra.mxu0 %v711
    %v757 = vpop.f32.mrf.mxu0
    %v758 = vadd.f32 0.0, %v757
    %v759 = vpop.f32.mrf.mxu0
    %v760 = vadd.f32 0.0, %v759
    %761 = vdwg.mxu0
    %762 = vmatpush.bf16.msra.mxu0 0
    %763 = vmatpush.bf16.msra.mxu0 0
    %764 = vmatpush.bf16.msra.mxu0 0
    %765 = vmatpush.bf16.msra.mxu0 0
    %766 = vmatpush.bf16.msra.mxu0 %v664
    %767 = vmatpush.bf16.msra.mxu0 %v659
    %768 = vmatpush.bf16.msra.mxu0 %v654
    %769 = vmatpush.bf16.msra.mxu0 %v649
    %770 = vmatmul.bf16.gmra.mxu0 %v690
    %v771 = vpop.f32.mrf.mxu0
    %v772 = vadd.f32 0.0, %v771
    %v773 = vpop.f32.mrf.mxu0
    %v774 = vadd.f32 0.0, %v773
    %775 = vmatmul.bf16.gmra.mxu0 %v693
    %v776 = vpop.f32.mrf.mxu0
    %v777 = vadd.f32 0.0, %v776
    %v778 = vpop.f32.mrf.mxu0
    %v779 = vadd.f32 0.0, %v778
    %780 = vmatmul.bf16.gmra.mxu0 %v696
    %v781 = vpop.f32.mrf.mxu0
    %v782 = vadd.f32 0.0, %v781
    %v783 = vpop.f32.mrf.mxu0
    %v784 = vadd.f32 0.0, %v783
    %785 = vmatmul.bf16.gmra.mxu0 %v699
    %v786 = vpop.f32.mrf.mxu0
    %v787 = vadd.f32 0.0, %v786
    %v788 = vpop.f32.mrf.mxu0
    %v789 = vadd.f32 0.0, %v788
    %790 = vmatmul.bf16.gmra.mxu0 %v702
    %v791 = vpop.f32.mrf.mxu0
    %v792 = vadd.f32 0.0, %v791
    %v793 = vpop.f32.mrf.mxu0
    %v794 = vadd.f32 0.0, %v793
    %795 = vmatmul.bf16.gmra.mxu0 %v705
    %v796 = vpop.f32.mrf.mxu0
    %v797 = vadd.f32 0.0, %v796
    %v798 = vpop.f32.mrf.mxu0
    %v799 = vadd.f32 0.0, %v798
    %800 = vmatmul.bf16.gmra.mxu0 %v708
    %v801 = vpop.f32.mrf.mxu0
    %v802 = vadd.f32 0.0, %v801
    %v803 = vpop.f32.mrf.mxu0
    %v804 = vadd.f32 0.0, %v803
    %805 = vmatmul.bf16.gmra.mxu0 %v711
    %v806 = vpop.f32.mrf.mxu0
    %v807 = vadd.f32 0.0, %v806
    %v808 = vpop.f32.mrf.mxu0
    %v809 = vadd.f32 0.0, %v808
    %810 = vdwg.mxu0
    %811 = vmatpush.bf16.msra.mxu0 0
    %812 = vmatpush.bf16.msra.mxu0 0
    %813 = vmatpush.bf16.msra.mxu0 0
    %814 = vmatpush.bf16.msra.mxu0 0
    %815 = vmatpush.bf16.msra.mxu0 %v665
    %816 = vmatpush.bf16.msra.mxu0 %v660
    %817 = vmatpush.bf16.msra.mxu0 %v655
    %818 = vmatpush.bf16.msra.mxu0 %v650
    %819 = vmatmul.bf16.gmra.mxu0 %v690
    %v820 = vpop.f32.mrf.mxu0
    %v821 = vadd.f32 0.0, %v820
    %v822 = vpop.f32.mrf.mxu0
    %v823 = vadd.f32 0.0, %v822
    %824 = vmatmul.bf16.gmra.mxu0 %v693
    %v825 = vpop.f32.mrf.mxu0
    %v826 = vadd.f32 0.0, %v825
    %v827 = vpop.f32.mrf.mxu0
    %v828 = vadd.f32 0.0, %v827
    %829 = vmatmul.bf16.gmra.mxu0 %v696
    %v830 = vpop.f32.mrf.mxu0
    %v831 = vadd.f32 0.0, %v830
    %v832 = vpop.f32.mrf.mxu0
    %v833 = vadd.f32 0.0, %v832
    %834 = vmatmul.bf16.gmra.mxu0 %v699
    %v835 = vpop.f32.mrf.mxu0
    %v836 = vadd.f32 0.0, %v835
    %v837 = vpop.f32.mrf.mxu0
    %v838 = vadd.f32 0.0, %v837
    %839 = vmatmul.bf16.gmra.mxu0 %v702
    %v840 = vpop.f32.mrf.mxu0
    %v841 = vadd.f32 0.0, %v840
    %v842 = vpop.f32.mrf.mxu0
    %v843 = vadd.f32 0.0, %v842
    %844 = vmatmul.bf16.gmra.mxu0 %v705
    %v845 = vpop.f32.mrf.mxu0
    %v846 = vadd.f32 0.0, %v845
    %v847 = vpop.f32.mrf.mxu0
    %v848 = vadd.f32 0.0, %v847
    %849 = vmatmul.bf16.gmra.mxu0 %v708
    %v850 = vpop.f32.mrf.mxu0
    %v851 = vadd.f32 0.0, %v850
    %v852 = vpop.f32.mrf.mxu0
    %v853 = vadd.f32 0.0, %v852
    %854 = vmatmul.bf16.gmra.mxu0 %v711
    %v855 = vpop.f32.mrf.mxu0
    %v856 = vadd.f32 0.0, %v855
    %v857 = vpop.f32.mrf.mxu0
    %v858 = vadd.f32 0.0, %v857
    %859 = vdwg.mxu0
    %860 = vmatpush.bf16.msra.mxu0 0
    %861 = vmatpush.bf16.msra.mxu0 0
    %862 = vmatpush.bf16.msra.mxu0 0
    %863 = vmatpush.bf16.msra.mxu0 0
    %864 = vmatpush.bf16.msra.mxu0 %v666
    %865 = vmatpush.bf16.msra.mxu0 %v661
    %866 = vmatpush.bf16.msra.mxu0 %v656
    %867 = vmatpush.bf16.msra.mxu0 %v651
    %868 = vmatmul.bf16.gmra.mxu0 %v690
    %v869 = vpop.f32.mrf.mxu0
    %v870 = vadd.f32 0.0, %v869
    %v871 = vpop.f32.mrf.mxu0
    %v872 = vadd.f32 0.0, %v871
    %873 = vmatmul.bf16.gmra.mxu0 %v693
    %v874 = vpop.f32.mrf.mxu0
    %v875 = vadd.f32 0.0, %v874
    %v876 = vpop.f32.mrf.mxu0
    %v877 = vadd.f32 0.0, %v876
    %878 = vmatmul.bf16.gmra.mxu0 %v696
    %v879 = vpop.f32.mrf.mxu0
    %v880 = vadd.f32 0.0, %v879
    %v881 = vpop.f32.mrf.mxu0
    %v882 = vadd.f32 0.0, %v881
    %883 = vmatmul.bf16.gmra.mxu0 %v699
    %v884 = vpop.f32.mrf.mxu0
    %v885 = vadd.f32 0.0, %v884
    %v886 = vpop.f32.mrf.mxu0
    %v887 = vadd.f32 0.0, %v886
    %888 = vmatmul.bf16.gmra.mxu0 %v702
    %v889 = vpop.f32.mrf.mxu0
    %v890 = vadd.f32 0.0, %v889
    %v891 = vpop.f32.mrf.mxu0
    %v892 = vadd.f32 0.0, %v891
    %893 = vmatmul.bf16.gmra.mxu0 %v705
    %v894 = vpop.f32.mrf.mxu0
    %v895 = vadd.f32 0.0, %v894
    %v896 = vpop.f32.mrf.mxu0
    %v897 = vadd.f32 0.0, %v896
    %898 = vmatmul.bf16.gmra.mxu0 %v708
    %v899 = vpop.f32.mrf.mxu0
    %v900 = vadd.f32 0.0, %v899
    %v901 = vpop.f32.mrf.mxu0
    %v902 = vadd.f32 0.0, %v901
    %903 = vmatmul.bf16.gmra.mxu0 %v711
    %v904 = vpop.f32.mrf.mxu0
    %v905 = vadd.f32 0.0, %v904
    %v906 = vpop.f32.mrf.mxu0
    %v907 = vadd.f32 0.0, %v906
    %908 = vdwg.mxu0
    %909 = vmatpush.bf16.msra.mxu0 0
    %910 = vmatpush.bf16.msra.mxu0 0
    %911 = vmatpush.bf16.msra.mxu0 0
    %912 = vmatpush.bf16.msra.mxu0 0
    %913 = vmatpush.bf16.msra.mxu0 %v667
    %914 = vmatpush.bf16.msra.mxu0 %v662
    %915 = vmatpush.bf16.msra.mxu0 %v657
    %916 = vmatpush.bf16.msra.mxu0 %v652
    %917 = vmatmul.bf16.gmra.mxu0 %v690
    %v918 = vpop.f32.mrf.mxu0
    %v919 = vadd.f32 0.0, %v918
    %v920 = vpop.f32.mrf.mxu0
    %v921 = vadd.f32 0.0, %v920
    %922 = vmatmul.bf16.gmra.mxu0 %v693
    %v923 = vpop.f32.mrf.mxu0
    %v924 = vadd.f32 0.0, %v923
    %v925 = vpop.f32.mrf.mxu0
    %v926 = vadd.f32 0.0, %v925
    %927 = vmatmul.bf16.gmra.mxu0 %v696
    %v928 = vpop.f32.mrf.mxu0
    %v929 = vadd.f32 0.0, %v928
    %v930 = vpop.f32.mrf.mxu0
    %v931 = vadd.f32 0.0, %v930
    %932 = vmatmul.bf16.gmra.mxu0 %v699
    %v933 = vpop.f32.mrf.mxu0
    %v934 = vadd.f32 0.0, %v933
    %v935 = vpop.f32.mrf.mxu0
    %v936 = vadd.f32 0.0, %v935
    %937 = vmatmul.bf16.gmra.mxu0 %v702
    %v938 = vpop.f32.mrf.mxu0
    %v939 = vadd.f32 0.0, %v938
    %v940 = vpop.f32.mrf.mxu0
    %v941 = vadd.f32 0.0, %v940
    %942 = vmatmul.bf16.gmra.mxu0 %v705
    %v943 = vpop.f32.mrf.mxu0
    %v944 = vadd.f32 0.0, %v943
    %v945 = vpop.f32.mrf.mxu0
    %v946 = vadd.f32 0.0, %v945
    %947 = vmatmul.bf16.gmra.mxu0 %v708
    %v948 = vpop.f32.mrf.mxu0
    %v949 = vadd.f32 0.0, %v948
    %v950 = vpop.f32.mrf.mxu0
    %v951 = vadd.f32 0.0, %v950
    %952 = vmatmul.bf16.gmra.mxu0 %v711
    %v953 = vpop.f32.mrf.mxu0
    %v954 = vadd.f32 0.0, %v953
    %v955 = vpop.f32.mrf.mxu0
    %v956 = vadd.f32 0.0, %v955
    %957 = vdwg.mxu0
    %v958 = vpack.c.bf16 %v772, %v723
    %v959 = vpack.c.bf16 %v870, %v821
    %v960 = vpack.c.bf16 %v919, %v919
    %v961 = vpack.c.bf16 %v774, %v725
    %v962 = vpack.c.bf16 %v872, %v823
    %v963 = vpack.c.bf16 %v921, %v921
    %v964 = vpack.c.bf16 %v777, %v728
    %v965 = vpack.c.bf16 %v875, %v826
    %v966 = vpack.c.bf16 %v924, %v924
    %v967 = vpack.c.bf16 %v779, %v730
    %v968 = vpack.c.bf16 %v877, %v828
    %v969 = vpack.c.bf16 %v926, %v926
    %v970 = vpack.c.bf16 %v782, %v733
    %v971 = vpack.c.bf16 %v880, %v831
    %v972 = vpack.c.bf16 %v929, %v929
    %v973 = vpack.c.bf16 %v784, %v735
    %v974 = vpack.c.bf16 %v882, %v833
    %v975 = vpack.c.bf16 %v931, %v931
    %v976 = vpack.c.bf16 %v787, %v738
    %v977 = vpack.c.bf16 %v885, %v836
    %v978 = vpack.c.bf16 %v934, %v934
    %v979 = vpack.c.bf16 %v789, %v740
    %v980 = vpack.c.bf16 %v887, %v838
    %v981 = vpack.c.bf16 %v936, %v936
    %v982 = vpack.c.bf16 %v792, %v743
    %v983 = vpack.c.bf16 %v890, %v841
    %v984 = vpack.c.bf16 %v939, %v939
    %v985 = vpack.c.bf16 %v794, %v745
    %v986 = vpack.c.bf16 %v892, %v843
    %v987 = vpack.c.bf16 %v941, %v941
    %v988 = vpack.c.bf16 %v797, %v748
    %v989 = vpack.c.bf16 %v895, %v846
    %v990 = vpack.c.bf16 %v944, %v944
    %v991 = vpack.c.bf16 %v799, %v750
    %v992 = vpack.c.bf16 %v897, %v848
    %v993 = vpack.c.bf16 %v946, %v946
    %v994 = vpack.c.bf16 %v802, %v753
    %v995 = vpack.c.bf16 %v900, %v851
    %v996 = vpack.c.bf16 %v949, %v949
    %v997 = vpack.c.bf16 %v804, %v755
    %v998 = vpack.c.bf16 %v902, %v853
    %v999 = vpack.c.bf16 %v951, %v951
    %v1000 = vpack.c.bf16 %v807, %v758
    %v1001 = vpack.c.bf16 %v905, %v856
    %v1002 = vpack.c.bf16 %v954, %v954
    %v1003 = vpack.c.bf16 %v809, %v760
    %v1004 = vpack.c.bf16 %v907, %v858
    %v1005 = vpack.c.bf16 %v956, %v956
    %1006 = vst [vmem:[#allocation3] sm:$0xff] %v958
    %1007 = vst [vmem:[#allocation3 + $0x8] sm:$0xff] %v959
    %1008 = vst [vmem:[#allocation3 + $0x10] sm:$0xf] %v960
    %1009 = vst [vmem:[#allocation3 + $0x1c] sm:$0xff] %v961
    %1010 = vst [vmem:[#allocation3 + $0x24] sm:$0xff] %v962
    %1011 = vst [vmem:[#allocation3 + $0x2c] sm:$0xf] %v963
    %1012 = vst [vmem:[#allocation3 + $0x38] sm:$0xff] %v964
    %1013 = vst [vmem:[#allocation3 + $0x40] sm:$0xff] %v965
    %1014 = vst [vmem:[#allocation3 + $0x48] sm:$0xf] %v966
    %1015 = vst [vmem:[#allocation3 + $0x54] sm:$0xff] %v967
    %1016 = vst [vmem:[#allocation3 + $0x5c] sm:$0xff] %v968
    %1017 = vst [vmem:[#allocation3 + $0x64] sm:$0xf] %v969
    %1018 = vst [vmem:[#allocation3 + $0x70] sm:$0xff] %v970
    %1019 = vst [vmem:[#allocation3 + $0x78] sm:$0xff] %v971
    %1020 = vst [vmem:[#allocation3 + $0x80] sm:$0xf] %v972
    %1021 = vst [vmem:[#allocation3 + $0x8c] sm:$0xff] %v973
    %1022 = vst [vmem:[#allocation3 + $0x94] sm:$0xff] %v974
    %1023 = vst [vmem:[#allocation3 + $0x9c] sm:$0xf] %v975
    %1024 = vst [vmem:[#allocation3 + $0xa8] sm:$0xff] %v976
    %1025 = vst [vmem:[#allocation3 + $0xb0] sm:$0xff] %v977
    %1026 = vst [vmem:[#allocation3 + $0xb8] sm:$0xf] %v978
    %1027 = vst [vmem:[#allocation3 + $0xc4] sm:$0xff] %v979
    %1028 = vst [vmem:[#allocation3 + $0xcc] sm:$0xff] %v980
    %1029 = vst [vmem:[#allocation3 + $0xd4] sm:$0xf] %v981
    %1030 = vst [vmem:[#allocation3 + $0xe0] sm:$0xff] %v982
    %1031 = vst [vmem:[#allocation3 + $0xe8] sm:$0xff] %v983
    %1032 = vst [vmem:[#allocation3 + $0xf0] sm:$0xf] %v984
    %1033 = vst [vmem:[#allocation3 + $0xfc] sm:$0xff] %v985
    %1034 = vst [vmem:[#allocation3 + $0x104] sm:$0xff] %v986
    %1035 = vst [vmem:[#allocation3 + $0x10c] sm:$0xf] %v987
    %1036 = vst [vmem:[#allocation3 + $0x118] sm:$0xff] %v988
    %1037 = vst [vmem:[#allocation3 + $0x120] sm:$0xff] %v989
    %1038 = vst [vmem:[#allocation3 + $0x128] sm:$0xf] %v990
    %1039 = vst [vmem:[#allocation3 + $0x134] sm:$0xff] %v991
    %1040 = vst [vmem:[#allocation3 + $0x13c] sm:$0xff] %v992
    %1041 = vst [vmem:[#allocation3 + $0x144] sm:$0xf] %v993
    %1042 = vst [vmem:[#allocation3 + $0x150] sm:$0xff] %v994
    %1043 = vst [vmem:[#allocation3 + $0x158] sm:$0xff] %v995
    %1044 = vst [vmem:[#allocation3 + $0x160] sm:$0xf] %v996
    %1045 = vst [vmem:[#allocation3 + $0x16c] sm:$0xff] %v997
    %1046 = vst [vmem:[#allocation3 + $0x174] sm:$0xff] %v998
    %1047 = vst [vmem:[#allocation3 + $0x17c] sm:$0xf] %v999
    %1048 = vst [vmem:[#allocation3 + $0x188] sm:$0xff] %v1000
    %1049 = vst [vmem:[#allocation3 + $0x190] sm:$0xff] %v1001
    %1050 = vst [vmem:[#allocation3 + $0x198] sm:$0xf] %v1002
    %1051 = vst [vmem:[#allocation3 + $0x1a4] sm:$0xff] %v1003
    %1052 = vst [vmem:[#allocation3 + $0x1ac] sm:$0xff] %v1004
    %1053 = vst [vmem:[#allocation3 + $0x1b4] sm:$0xf] %v1005
    %v1054 = vld [vmem:[%s2] sm:$0xf]
    %v1055 = vld [vmem:[%s2 + $0x4] sm:$0xf]
    %v1056 = vld [vmem:[%s2 + $0x8] sm:$0xf]
    %v1057 = vld [vmem:[%s2 + $0xc] sm:$0xf]
    %v1058 = vld [vmem:[%s2 + $0x10] sm:$0xf]
    %v1059 = vld [vmem:[%s2 + $0x14] sm:$0xf]
    %v1060 = vld [vmem:[%s2 + $0x18] sm:$0xf]
    %v1061 = vld [vmem:[%s2 + $0x1c] sm:$0xf]
    %v1062 = vld [vmem:[%s2 + $0x20] sm:$0xf]
    %v1063 = vld [vmem:[%s2 + $0x24] sm:$0xf]
    %v1064 = vld [vmem:[%s2 + $0x28] sm:$0xf]
    %v1065 = vld [vmem:[%s2 + $0x2c] sm:$0xf]
    %v1066 = vld [vmem:[%s2 + $0x30] sm:$0xf]
    %v1067 = vld [vmem:[%s2 + $0x34] sm:$0xf]
    %v1068 = vld [vmem:[%s2 + $0x38] sm:$0xf]
    %v1069 = vld [vmem:[%s2 + $0x3c] sm:$0xf]
    %v1070 = vld [vmem:[#allocation2] sm:$0xff]
    %v1071 = vld [vmem:[#allocation2 + $0x8] sm:$0xff]
    %v1072 = vld [vmem:[#allocation2 + $0x10] sm:$0xff]
    %v1073 = vld [vmem:[#allocation2 + $0x18] sm:$0xff]
    %v1074 = vld [vmem:[#allocation2 + $0x20] sm:$0xff]
    %v1075 = vld [vmem:[#allocation2 + $0x28] sm:$0xff]
    %v1076 = vld [vmem:[#allocation2 + $0x30] sm:$0xff]
    %v1077 = vld [vmem:[#allocation2 + $0x38] sm:$0xff]
    %v1094 = vunpack.c.l.b16 %v1054
    %v1095 = vunpack.c.l.b16 %v1055
    %v1096 = vunpack.c.l.b16 %v1056
    %v1097 = vunpack.c.l.b16 %v1057
    %v1098 = vunpack.c.l.b16 %v1058
    %v1099 = vunpack.c.l.b16 %v1059
    %v1100 = vunpack.c.l.b16 %v1060
    %v1101 = vunpack.c.l.b16 %v1061
    %v1102 = vunpack.c.l.b16 %v1062
    %v1103 = vunpack.c.l.b16 %v1063
    %v1104 = vunpack.c.l.b16 %v1064
    %v1105 = vunpack.c.l.b16 %v1065
    %v1106 = vunpack.c.l.b16 %v1066
    %v1107 = vunpack.c.l.b16 %v1067
    %v1108 = vunpack.c.l.b16 %v1068
    %v1109 = vunpack.c.l.b16 %v1069
    %v1110 = vpack.c.b16 %v1095, %v1094
    %v1111 = vpack.c.b16 %v1097, %v1096
    %v1112 = vpack.c.b16 %v1099, %v1098
    %v1113 = vpack.c.b16 %v1101, %v1100
    %v1114 = vpack.c.b16 %v1103, %v1102
    %v1115 = vpack.c.b16 %v1105, %v1104
    %v1116 = vpack.c.b16 %v1107, %v1106
    %v1117 = vpack.c.b16 %v1109, %v1108
    %v1126 = vunpack.c.l.b16 %v1070
    %v1127 = vunpack.c.h.b16 %v1070
    %v1128 = vunpack.c.l.b16 %v1071
    %v1129 = vunpack.c.h.b16 %v1071
    %v1130 = vunpack.c.l.b16 %v1072
    %v1131 = vunpack.c.h.b16 %v1072
    %v1132 = vunpack.c.l.b16 %v1073
    %v1133 = vunpack.c.h.b16 %v1073
    %v1134 = vunpack.c.l.b16 %v1074
    %v1135 = vunpack.c.h.b16 %v1074
    %v1136 = vunpack.c.l.b16 %v1075
    %v1137 = vunpack.c.h.b16 %v1075
    %v1138 = vunpack.c.l.b16 %v1076
    %v1139 = vunpack.c.h.b16 %v1076
    %v1140 = vunpack.c.l.b16 %v1077
    %v1141 = vunpack.c.h.b16 %v1077
    %v1142 = vpack.c.b16 %v1128, %v1126
    %v1143 = vpack.c.b16 %v1129, %v1127
    %v1144 = vpack.c.b16 %v1132, %v1130
    %v1145 = vpack.c.b16 %v1133, %v1131
    %v1146 = vpack.c.b16 %v1136, %v1134
    %v1147 = vpack.c.b16 %v1137, %v1135
    %v1148 = vpack.c.b16 %v1140, %v1138
    %v1149 = vpack.c.b16 %v1141, %v1139
    %v1159 = vsel %vm688, %v1110, 0
    %v1162 = vsel %vm688, %v1111, 0
    %v1165 = vsel %vm688, %v1112, 0
    %v1168 = vsel %vm688, %v1113, 0
    %v1171 = vsel %vm688, %v1114, 0
    %v1174 = vsel %vm688, %v1115, 0
    %v1177 = vsel %vm688, %v1116, 0
    %v1180 = vsel %vm688, %v1117, 0
    %1182 = vmatpush.bf16.msra.mxu0 0
    %1183 = vmatpush.bf16.msra.mxu0 0
    %1184 = vmatpush.bf16.msra.mxu0 0
    %1185 = vmatpush.bf16.msra.mxu0 0
    %1186 = vmatpush.bf16.msra.mxu0 %v1148
    %1187 = vmatpush.bf16.msra.mxu0 %v1146
    %1188 = vmatpush.bf16.msra.mxu0 %v1144
    %1189 = vmatpush.bf16.msra.mxu0 %v1142
    %1190 = vmatmul.bf16.gmra.mxu0 %v1159
    %v1191 = vpop.f32.mrf.mxu0
    %v1192 = vadd.f32 0.0, %v1191
    %v1193 = vpop.f32.mrf.mxu0
    %v1194 = vadd.f32 0.0, %v1193
    %1195 = vmatmul.bf16.gmra.mxu0 %v1162
    %v1196 = vpop.f32.mrf.mxu0
    %v1197 = vadd.f32 0.0, %v1196
    %v1198 = vpop.f32.mrf.mxu0
    %v1199 = vadd.f32 0.0, %v1198
    %1200 = vmatmul.bf16.gmra.mxu0 %v1165
    %v1201 = vpop.f32.mrf.mxu0
    %v1202 = vadd.f32 0.0, %v1201
    %v1203 = vpop.f32.mrf.mxu0
    %v1204 = vadd.f32 0.0, %v1203
    %1205 = vmatmul.bf16.gmra.mxu0 %v1168
    %v1206 = vpop.f32.mrf.mxu0
    %v1207 = vadd.f32 0.0, %v1206
    %v1208 = vpop.f32.mrf.mxu0
    %v1209 = vadd.f32 0.0, %v1208
    %1210 = vmatmul.bf16.gmra.mxu0 %v1171
    %v1211 = vpop.f32.mrf.mxu0
    %v1212 = vadd.f32 0.0, %v1211
    %v1213 = vpop.f32.mrf.mxu0
    %v1214 = vadd.f32 0.0, %v1213
    %1215 = vmatmul.bf16.gmra.mxu0 %v1174
    %v1216 = vpop.f32.mrf.mxu0
    %v1217 = vadd.f32 0.0, %v1216
    %v1218 = vpop.f32.mrf.mxu0
    %v1219 = vadd.f32 0.0, %v1218
    %1220 = vmatmul.bf16.gmra.mxu0 %v1177
    %v1221 = vpop.f32.mrf.mxu0
    %v1222 = vadd.f32 0.0, %v1221
    %v1223 = vpop.f32.mrf.mxu0
    %v1224 = vadd.f32 0.0, %v1223
    %1225 = vmatmul.bf16.gmra.mxu0 %v1180
    %v1226 = vpop.f32.mrf.mxu0
    %v1227 = vadd.f32 0.0, %v1226
    %v1228 = vpop.f32.mrf.mxu0
    %v1229 = vadd.f32 0.0, %v1228
    %1230 = vdwg.mxu0
    %1231 = vmatpush.bf16.msra.mxu0 0
    %1232 = vmatpush.bf16.msra.mxu0 0
    %1233 = vmatpush.bf16.msra.mxu0 0
    %1234 = vmatpush.bf16.msra.mxu0 0
    %1235 = vmatpush.bf16.msra.mxu0 %v1149
    %1236 = vmatpush.bf16.msra.mxu0 %v1147
    %1237 = vmatpush.bf16.msra.mxu0 %v1145
    %1238 = vmatpush.bf16.msra.mxu0 %v1143
    %1239 = vmatmul.bf16.gmra.mxu0 %v1159
    %v1240 = vpop.f32.mrf.mxu0
    %v1241 = vadd.f32 0.0, %v1240
    %v1242 = vpop.f32.mrf.mxu0
    %v1243 = vadd.f32 0.0, %v1242
    %1244 = vmatmul.bf16.gmra.mxu0 %v1162
    %v1245 = vpop.f32.mrf.mxu0
    %v1246 = vadd.f32 0.0, %v1245
    %v1247 = vpop.f32.mrf.mxu0
    %v1248 = vadd.f32 0.0, %v1247
    %1249 = vmatmul.bf16.gmra.mxu0 %v1165
    %v1250 = vpop.f32.mrf.mxu0
    %v1251 = vadd.f32 0.0, %v1250
    %v1252 = vpop.f32.mrf.mxu0
    %v1253 = vadd.f32 0.0, %v1252
    %1254 = vmatmul.bf16.gmra.mxu0 %v1168
    %v1255 = vpop.f32.mrf.mxu0
    %v1256 = vadd.f32 0.0, %v1255
    %v1257 = vpop.f32.mrf.mxu0
    %v1258 = vadd.f32 0.0, %v1257
    %1259 = vmatmul.bf16.gmra.mxu0 %v1171
    %v1260 = vpop.f32.mrf.mxu0
    %v1261 = vadd.f32 0.0, %v1260
    %v1262 = vpop.f32.mrf.mxu0
    %v1263 = vadd.f32 0.0, %v1262
    %1264 = vmatmul.bf16.gmra.mxu0 %v1174
    %v1265 = vpop.f32.mrf.mxu0
    %v1266 = vadd.f32 0.0, %v1265
    %v1267 = vpop.f32.mrf.mxu0
    %v1268 = vadd.f32 0.0, %v1267
    %1269 = vmatmul.bf16.gmra.mxu0 %v1177
    %v1270 = vpop.f32.mrf.mxu0
    %v1271 = vadd.f32 0.0, %v1270
    %v1272 = vpop.f32.mrf.mxu0
    %v1273 = vadd.f32 0.0, %v1272
    %1274 = vmatmul.bf16.gmra.mxu0 %v1180
    %v1275 = vpop.f32.mrf.mxu0
    %v1276 = vadd.f32 0.0, %v1275
    %v1277 = vpop.f32.mrf.mxu0
    %v1278 = vadd.f32 0.0, %v1277
    %1279 = vdwg.mxu0
    %v1280 = vpack.c.bf16 %v1241, %v1192
    %v1281 = vpack.c.bf16 %v1243, %v1194
    %v1282 = vpack.c.bf16 %v1246, %v1197
    %v1283 = vpack.c.bf16 %v1248, %v1199
    %v1284 = vpack.c.bf16 %v1251, %v1202
    %v1285 = vpack.c.bf16 %v1253, %v1204
    %v1286 = vpack.c.bf16 %v1256, %v1207
    %v1287 = vpack.c.bf16 %v1258, %v1209
    %v1288 = vpack.c.bf16 %v1261, %v1212
    %v1289 = vpack.c.bf16 %v1263, %v1214
    %v1290 = vpack.c.bf16 %v1266, %v1217
    %v1291 = vpack.c.bf16 %v1268, %v1219
    %v1292 = vpack.c.bf16 %v1271, %v1222
    %v1293 = vpack.c.bf16 %v1273, %v1224
    %v1294 = vpack.c.bf16 %v1276, %v1227
    %v1295 = vpack.c.bf16 %v1278, %v1229
    %1296 = vst [vmem:[#allocation3 + $0x14] sm:$0xff] %v1280
    %1297 = vst [vmem:[#allocation3 + $0x30] sm:$0xff] %v1281
    %1298 = vst [vmem:[#allocation3 + $0x4c] sm:$0xff] %v1282
    %1299 = vst [vmem:[#allocation3 + $0x68] sm:$0xff] %v1283
    %1300 = vst [vmem:[#allocation3 + $0x84] sm:$0xff] %v1284
    %1301 = vst [vmem:[#allocation3 + $0xa0] sm:$0xff] %v1285
    %1302 = vst [vmem:[#allocation3 + $0xbc] sm:$0xff] %v1286
    %1303 = vst [vmem:[#allocation3 + $0xd8] sm:$0xff] %v1287
    %1304 = vst [vmem:[#allocation3 + $0xf4] sm:$0xff] %v1288
    %1305 = vst [vmem:[#allocation3 + $0x110] sm:$0xff] %v1289
    %1306 = vst [vmem:[#allocation3 + $0x12c] sm:$0xff] %v1290
    %1307 = vst [vmem:[#allocation3 + $0x148] sm:$0xff] %v1291
    %1308 = vst [vmem:[#allocation3 + $0x164] sm:$0xff] %v1292
    %1309 = vst [vmem:[#allocation3 + $0x180] sm:$0xff] %v1293
    %1310 = vst [vmem:[#allocation3 + $0x19c] sm:$0xff] %v1294
    %1311 = vst [vmem:[#allocation3 + $0x1b8] sm:$0xff] %v1295
    %v1312 = vld [vmem:[#allocation3] sm:$0xf]
    %v1313 = vld [vmem:[#allocation3 + $0x1c] sm:$0xf]
    %v1314 = vld [vmem:[#allocation3 + $0x38] sm:$0xf]
    %v1315 = vld [vmem:[#allocation3 + $0x54] sm:$0xf]
    %v1316 = vld [vmem:[#allocation3 + $0x70] sm:$0xf]
    %v1317 = vld [vmem:[#allocation3 + $0x8c] sm:$0xf]
    %v1318 = vld [vmem:[#allocation3 + $0xa8] sm:$0xf]
    %v1319 = vld [vmem:[#allocation3 + $0xc4] sm:$0xf]
    %1320 = vst [vmem:[#allocation4] sm:$0xf] %v1312
    %1321 = vst [vmem:[#allocation4 + $0x4] sm:$0xf] %v1313
    %1322 = vst [vmem:[#allocation4 + $0x8] sm:$0xf] %v1314
    %1323 = vst [vmem:[#allocation4 + $0xc] sm:$0xf] %v1315
    %1324 = vst [vmem:[#allocation4 + $0x10] sm:$0xf] %v1316
    %1325 = vst [vmem:[#allocation4 + $0x14] sm:$0xf] %v1317
    %1326 = vst [vmem:[#allocation4 + $0x18] sm:$0xf] %v1318
    %1327 = vst [vmem:[#allocation4 + $0x1c] sm:$0xf] %v1319
    %v1328 = vld [vmem:[#allocation3 + $0x4] sm:$0xf]
    %v1329 = vld [vmem:[#allocation3 + $0x20] sm:$0xf]
    %v1330 = vld [vmem:[#allocation3 + $0x3c] sm:$0xf]
    %v1331 = vld [vmem:[#allocation3 + $0x58] sm:$0xf]
    %v1332 = vld [vmem:[#allocation3 + $0x74] sm:$0xf]
    %v1333 = vld [vmem:[#allocation3 + $0x90] sm:$0xf]
    %v1334 = vld [vmem:[#allocation3 + $0xac] sm:$0xf]
    %v1335 = vld [vmem:[#allocation3 + $0xc8] sm:$0xf]
    %1336 = vst [vmem:[#allocation4 + $0x20] sm:$0xf] %v1328
    %1337 = vst [vmem:[#allocation4 + $0x24] sm:$0xf] %v1329
    %1338 = vst [vmem:[#allocation4 + $0x28] sm:$0xf] %v1330
    %1339 = vst [vmem:[#allocation4 + $0x2c] sm:$0xf] %v1331
    %1340 = vst [vmem:[#allocation4 + $0x30] sm:$0xf] %v1332
    %1341 = vst [vmem:[#allocation4 + $0x34] sm:$0xf] %v1333
    %1342 = vst [vmem:[#allocation4 + $0x38] sm:$0xf] %v1334
    %1343 = vst [vmem:[#allocation4 + $0x3c] sm:$0xf] %v1335
    %v1344 = vld [vmem:[#allocation3 + $0x8] sm:$0xf]
    %v1345 = vld [vmem:[#allocation3 + $0x24] sm:$0xf]
    %v1346 = vld [vmem:[#allocation3 + $0x40] sm:$0xf]
    %v1347 = vld [vmem:[#allocation3 + $0x5c] sm:$0xf]
    %v1348 = vld [vmem:[#allocation3 + $0x78] sm:$0xf]
    %v1349 = vld [vmem:[#allocation3 + $0x94] sm:$0xf]
    %v1350 = vld [vmem:[#allocation3 + $0xb0] sm:$0xf]
    %v1351 = vld [vmem:[#allocation3 + $0xcc] sm:$0xf]
    %1352 = vst [vmem:[#allocation4 + $0x40] sm:$0xf] %v1344
    %1353 = vst [vmem:[#allocation4 + $0x44] sm:$0xf] %v1345
    %1354 = vst [vmem:[#allocation4 + $0x48] sm:$0xf] %v1346
    %1355 = vst [vmem:[#allocation4 + $0x4c] sm:$0xf] %v1347
    %1356 = vst [vmem:[#allocation4 + $0x50] sm:$0xf] %v1348
    %1357 = vst [vmem:[#allocation4 + $0x54] sm:$0xf] %v1349
    %1358 = vst [vmem:[#allocation4 + $0x58] sm:$0xf] %v1350
    %1359 = vst [vmem:[#allocation4 + $0x5c] sm:$0xf] %v1351
    %v1360 = vld [vmem:[#allocation3 + $0xc] sm:$0xf]
    %v1361 = vld [vmem:[#allocation3 + $0x28] sm:$0xf]
    %v1362 = vld [vmem:[#allocation3 + $0x44] sm:$0xf]
    %v1363 = vld [vmem:[#allocation3 + $0x60] sm:$0xf]
    %v1364 = vld [vmem:[#allocation3 + $0x7c] sm:$0xf]
    %v1365 = vld [vmem:[#allocation3 + $0x98] sm:$0xf]
    %v1366 = vld [vmem:[#allocation3 + $0xb4] sm:$0xf]
    %v1367 = vld [vmem:[#allocation3 + $0xd0] sm:$0xf]
    %1368 = vst [vmem:[#allocation4 + $0x60] sm:$0xf] %v1360
    %1369 = vst [vmem:[#allocation4 + $0x64] sm:$0xf] %v1361
    %1370 = vst [vmem:[#allocation4 + $0x68] sm:$0xf] %v1362
    %1371 = vst [vmem:[#allocation4 + $0x6c] sm:$0xf] %v1363
    %1372 = vst [vmem:[#allocation4 + $0x70] sm:$0xf] %v1364
    %1373 = vst [vmem:[#allocation4 + $0x74] sm:$0xf] %v1365
    %1374 = vst [vmem:[#allocation4 + $0x78] sm:$0xf] %v1366
    %1375 = vst [vmem:[#allocation4 + $0x7c] sm:$0xf] %v1367
    %v1376 = vld [vmem:[#allocation3 + $0x10] sm:$0xf]
    %v1377 = vld [vmem:[#allocation3 + $0x2c] sm:$0xf]
    %v1378 = vld [vmem:[#allocation3 + $0x48] sm:$0xf]
    %v1379 = vld [vmem:[#allocation3 + $0x64] sm:$0xf]
    %v1380 = vld [vmem:[#allocation3 + $0x80] sm:$0xf]
    %v1381 = vld [vmem:[#allocation3 + $0x9c] sm:$0xf]
    %v1382 = vld [vmem:[#allocation3 + $0xb8] sm:$0xf]
    %v1383 = vld [vmem:[#allocation3 + $0xd4] sm:$0xf]
    %1384 = vst [vmem:[#allocation4 + $0x80] sm:$0xf] %v1376
    %1385 = vst [vmem:[#allocation4 + $0x84] sm:$0xf] %v1377
    %1386 = vst [vmem:[#allocation4 + $0x88] sm:$0xf] %v1378
    %1387 = vst [vmem:[#allocation4 + $0x8c] sm:$0xf] %v1379
    %1388 = vst [vmem:[#allocation4 + $0x90] sm:$0xf] %v1380
    %1389 = vst [vmem:[#allocation4 + $0x94] sm:$0xf] %v1381
    %1390 = vst [vmem:[#allocation4 + $0x98] sm:$0xf] %v1382
    %1391 = vst [vmem:[#allocation4 + $0x9c] sm:$0xf] %v1383
    %v1392 = vld [vmem:[#allocation3 + $0x14] sm:$0xf]
    %v1393 = vld [vmem:[#allocation3 + $0x30] sm:$0xf]
    %v1394 = vld [vmem:[#allocation3 + $0x4c] sm:$0xf]
    %v1395 = vld [vmem:[#allocation3 + $0x68] sm:$0xf]
    %v1396 = vld [vmem:[#allocation3 + $0x84] sm:$0xf]
    %v1397 = vld [vmem:[#allocation3 + $0xa0] sm:$0xf]
    %v1398 = vld [vmem:[#allocation3 + $0xbc] sm:$0xf]
    %v1399 = vld [vmem:[#allocation3 + $0xd8] sm:$0xf]
    %1400 = vst [vmem:[#allocation4 + $0xa0] sm:$0xf] %v1392
    %1401 = vst [vmem:[#allocation4 + $0xa4] sm:$0xf] %v1393
    %1402 = vst [vmem:[#allocation4 + $0xa8] sm:$0xf] %v1394
    %1403 = vst [vmem:[#allocation4 + $0xac] sm:$0xf] %v1395
    %1404 = vst [vmem:[#allocation4 + $0xb0] sm:$0xf] %v1396
    %1405 = vst [vmem:[#allocation4 + $0xb4] sm:$0xf] %v1397
    %1406 = vst [vmem:[#allocation4 + $0xb8] sm:$0xf] %v1398
    %1407 = vst [vmem:[#allocation4 + $0xbc] sm:$0xf] %v1399
    %v1408 = vld [vmem:[#allocation3 + $0x18] sm:$0xf]
    %v1409 = vld [vmem:[#allocation3 + $0x34] sm:$0xf]
    %v1410 = vld [vmem:[#allocation3 + $0x50] sm:$0xf]
    %v1411 = vld [vmem:[#allocation3 + $0x6c] sm:$0xf]
    %v1412 = vld [vmem:[#allocation3 + $0x88] sm:$0xf]
    %v1413 = vld [vmem:[#allocation3 + $0xa4] sm:$0xf]
    %v1414 = vld [vmem:[#allocation3 + $0xc0] sm:$0xf]
    %v1415 = vld [vmem:[#allocation3 + $0xdc] sm:$0xf]
    %1416 = vst [vmem:[#allocation4 + $0xc0] sm:$0xf] %v1408
    %1417 = vst [vmem:[#allocation4 + $0xc4] sm:$0xf] %v1409
    %1418 = vst [vmem:[#allocation4 + $0xc8] sm:$0xf] %v1410
    %1419 = vst [vmem:[#allocation4 + $0xcc] sm:$0xf] %v1411
    %1420 = vst [vmem:[#allocation4 + $0xd0] sm:$0xf] %v1412
    %1421 = vst [vmem:[#allocation4 + $0xd4] sm:$0xf] %v1413
    %1422 = vst [vmem:[#allocation4 + $0xd8] sm:$0xf] %v1414
    %1423 = vst [vmem:[#allocation4 + $0xdc] sm:$0xf] %v1415
    %v1424 = vld [vmem:[#allocation4] sm:$0xf]
    %v1425 = vld [vmem:[#allocation4 + $0x4] sm:$0xf]
    %v1426 = vld [vmem:[#allocation4 + $0x8] sm:$0xf]
    %v1427 = vld [vmem:[#allocation4 + $0xc] sm:$0xf]
    %v1428 = vld [vmem:[#allocation4 + $0x10] sm:$0xf]
    %v1429 = vld [vmem:[#allocation4 + $0x14] sm:$0xf]
    %v1430 = vld [vmem:[#allocation4 + $0x18] sm:$0xf]
    %v1431 = vld [vmem:[#allocation4 + $0x1c] sm:$0xf]
    %v1432 = vld [vmem:[#allocation4 + $0x20] sm:$0xf]
    %v1433 = vld [vmem:[#allocation4 + $0x24] sm:$0xf]
    %v1434 = vld [vmem:[#allocation4 + $0x28] sm:$0xf]
    %v1435 = vld [vmem:[#allocation4 + $0x2c] sm:$0xf]
    %v1436 = vld [vmem:[#allocation4 + $0x30] sm:$0xf]
    %v1437 = vld [vmem:[#allocation4 + $0x34] sm:$0xf]
    %v1438 = vld [vmem:[#allocation4 + $0x38] sm:$0xf]
    %v1439 = vld [vmem:[#allocation4 + $0x3c] sm:$0xf]
    %v1440 = vld [vmem:[#allocation4 + $0x40] sm:$0xf]
    %v1441 = vld [vmem:[#allocation4 + $0x44] sm:$0xf]
    %v1442 = vld [vmem:[#allocation4 + $0x48] sm:$0xf]
    %v1443 = vld [vmem:[#allocation4 + $0x4c] sm:$0xf]
    %v1444 = vld [vmem:[#allocation4 + $0x50] sm:$0xf]
    %v1445 = vld [vmem:[#allocation4 + $0x54] sm:$0xf]
    %v1446 = vld [vmem:[#allocation4 + $0x58] sm:$0xf]
    %v1447 = vld [vmem:[#allocation4 + $0x5c] sm:$0xf]
    %v1448 = vld [vmem:[#allocation4 + $0x60] sm:$0xf]
    %v1449 = vld [vmem:[#allocation4 + $0x64] sm:$0xf]
    %v1450 = vld [vmem:[#allocation4 + $0x68] sm:$0xf]
    %v1451 = vld [vmem:[#allocation4 + $0x6c] sm:$0xf]
    %v1452 = vld [vmem:[#allocation4 + $0x70] sm:$0xf]
    %v1453 = vld [vmem:[#allocation4 + $0x74] sm:$0xf]
    %v1454 = vld [vmem:[#allocation4 + $0x78] sm:$0xf]
    %v1455 = vld [vmem:[#allocation4 + $0x7c] sm:$0xf]
    %v1456 = vld [vmem:[#allocation4 + $0x80] sm:$0xf]
    %v1457 = vld [vmem:[#allocation4 + $0x84] sm:$0xf]
    %v1458 = vld [vmem:[#allocation4 + $0x88] sm:$0xf]
    %v1459 = vld [vmem:[#allocation4 + $0x8c] sm:$0xf]
    %v1460 = vld [vmem:[#allocation4 + $0x90] sm:$0xf]
    %v1461 = vld [vmem:[#allocation4 + $0x94] sm:$0xf]
    %v1462 = vld [vmem:[#allocation4 + $0x98] sm:$0xf]
    %v1463 = vld [vmem:[#allocation4 + $0x9c] sm:$0xf]
    %v1464 = vld [vmem:[#allocation4 + $0xa0] sm:$0xf]
    %v1465 = vld [vmem:[#allocation4 + $0xa4] sm:$0xf]
    %v1466 = vld [vmem:[#allocation4 + $0xa8] sm:$0xf]
    %v1467 = vld [vmem:[#allocation4 + $0xac] sm:$0xf]
    %v1468 = vld [vmem:[#allocation4 + $0xb0] sm:$0xf]
    %v1469 = vld [vmem:[#allocation4 + $0xb4] sm:$0xf]
    %v1470 = vld [vmem:[#allocation4 + $0xb8] sm:$0xf]
    %v1471 = vld [vmem:[#allocation4 + $0xbc] sm:$0xf]
    %v1472 = vld [vmem:[#allocation4 + $0xc0] sm:$0xf]
    %v1473 = vld [vmem:[#allocation4 + $0xc4] sm:$0xf]
    %v1474 = vld [vmem:[#allocation4 + $0xc8] sm:$0xf]
    %v1475 = vld [vmem:[#allocation4 + $0xcc] sm:$0xf]
    %v1476 = vld [vmem:[#allocation4 + $0xd0] sm:$0xf]
    %v1477 = vld [vmem:[#allocation4 + $0xd4] sm:$0xf]
    %v1478 = vld [vmem:[#allocation4 + $0xd8] sm:$0xf]
    %v1479 = vld [vmem:[#allocation4 + $0xdc] sm:$0xf]
    %v1480 = vld [vmem:[%s3] sm:$0xf]
    %v1481 = vld [vmem:[%s3 + $0x4] sm:$0xf]
    %v1482 = vld [vmem:[%s3 + $0x8] sm:$0xf]
    %v1483 = vld [vmem:[%s3 + $0xc] sm:$0xf]
    %v1484 = vld [vmem:[%s3 + $0x10] sm:$0xf]
    %v1485 = vld [vmem:[%s3 + $0x14] sm:$0xf]
    %v1486 = vld [vmem:[%s3 + $0x18] sm:$0xf]
    %v1487 = vld [vmem:[%s3 + $0x1c] sm:$0xf]
    %v1488 = vld [vmem:[%s3 + $0x20] sm:$0xf]
    %v1489 = vld [vmem:[%s3 + $0x24] sm:$0xf]
    %v1490 = vld [vmem:[%s3 + $0x28] sm:$0xf]
    %v1491 = vld [vmem:[%s3 + $0x2c] sm:$0xf]
    %v1492 = vld [vmem:[%s3 + $0x30] sm:$0xf]
    %v1493 = vld [vmem:[%s3 + $0x34] sm:$0xf]
    %v1494 = vld [vmem:[%s3 + $0x38] sm:$0xf]
    %v1495 = vld [vmem:[%s3 + $0x3c] sm:$0xf]
    %v1552 = vunpack.c.l.b16 %v1424
    %v1553 = vunpack.c.l.b16 %v1425
    %v1554 = vunpack.c.l.b16 %v1426
    %v1555 = vunpack.c.l.b16 %v1427
    %v1556 = vunpack.c.l.b16 %v1428
    %v1557 = vunpack.c.l.b16 %v1429
    %v1558 = vunpack.c.l.b16 %v1430
    %v1559 = vunpack.c.l.b16 %v1431
    %v1560 = vunpack.c.l.b16 %v1432
    %v1561 = vunpack.c.l.b16 %v1433
    %v1562 = vunpack.c.l.b16 %v1434
    %v1563 = vunpack.c.l.b16 %v1435
    %v1564 = vunpack.c.l.b16 %v1436
    %v1565 = vunpack.c.l.b16 %v1437
    %v1566 = vunpack.c.l.b16 %v1438
    %v1567 = vunpack.c.l.b16 %v1439
    %v1568 = vunpack.c.l.b16 %v1440
    %v1569 = vunpack.c.l.b16 %v1441
    %v1570 = vunpack.c.l.b16 %v1442
    %v1571 = vunpack.c.l.b16 %v1443
    %v1572 = vunpack.c.l.b16 %v1444
    %v1573 = vunpack.c.l.b16 %v1445
    %v1574 = vunpack.c.l.b16 %v1446
    %v1575 = vunpack.c.l.b16 %v1447
    %v1576 = vunpack.c.l.b16 %v1448
    %v1577 = vunpack.c.l.b16 %v1449
    %v1578 = vunpack.c.l.b16 %v1450
    %v1579 = vunpack.c.l.b16 %v1451
    %v1580 = vunpack.c.l.b16 %v1452
    %v1581 = vunpack.c.l.b16 %v1453
    %v1582 = vunpack.c.l.b16 %v1454
    %v1583 = vunpack.c.l.b16 %v1455
    %v1584 = vunpack.c.l.b16 %v1456
    %v1585 = vunpack.c.l.b16 %v1457
    %v1586 = vunpack.c.l.b16 %v1458
    %v1587 = vunpack.c.l.b16 %v1459
    %v1588 = vunpack.c.l.b16 %v1460
    %v1589 = vunpack.c.l.b16 %v1461
    %v1590 = vunpack.c.l.b16 %v1462
    %v1591 = vunpack.c.l.b16 %v1463
    %v1592 = vunpack.c.l.b16 %v1464
    %v1593 = vunpack.c.l.b16 %v1465
    %v1594 = vunpack.c.l.b16 %v1466
    %v1595 = vunpack.c.l.b16 %v1467
    %v1596 = vunpack.c.l.b16 %v1468
    %v1597 = vunpack.c.l.b16 %v1469
    %v1598 = vunpack.c.l.b16 %v1470
    %v1599 = vunpack.c.l.b16 %v1471
    %v1600 = vunpack.c.l.b16 %v1472
    %v1601 = vunpack.c.l.b16 %v1473
    %v1602 = vunpack.c.l.b16 %v1474
    %v1603 = vunpack.c.l.b16 %v1475
    %v1604 = vunpack.c.l.b16 %v1476
    %v1605 = vunpack.c.l.b16 %v1477
    %v1606 = vunpack.c.l.b16 %v1478
    %v1607 = vunpack.c.l.b16 %v1479
    %v1608 = vpack.c.b16 %v1553, %v1552
    %v1609 = vpack.c.b16 %v1555, %v1554
    %v1610 = vpack.c.b16 %v1557, %v1556
    %v1611 = vpack.c.b16 %v1559, %v1558
    %v1612 = vpack.c.b16 %v1561, %v1560
    %v1613 = vpack.c.b16 %v1563, %v1562
    %v1614 = vpack.c.b16 %v1565, %v1564
    %v1615 = vpack.c.b16 %v1567, %v1566
    %v1616 = vpack.c.b16 %v1569, %v1568
    %v1617 = vpack.c.b16 %v1571, %v1570
    %v1618 = vpack.c.b16 %v1573, %v1572
    %v1619 = vpack.c.b16 %v1575, %v1574
    %v1620 = vpack.c.b16 %v1577, %v1576
    %v1621 = vpack.c.b16 %v1579, %v1578
    %v1622 = vpack.c.b16 %v1581, %v1580
    %v1623 = vpack.c.b16 %v1583, %v1582
    %v1624 = vpack.c.b16 %v1585, %v1584
    %v1625 = vpack.c.b16 %v1587, %v1586
    %v1626 = vpack.c.b16 %v1589, %v1588
    %v1627 = vpack.c.b16 %v1591, %v1590
    %v1628 = vpack.c.b16 %v1593, %v1592
    %v1629 = vpack.c.b16 %v1595, %v1594
    %v1630 = vpack.c.b16 %v1597, %v1596
    %v1631 = vpack.c.b16 %v1599, %v1598
    %v1632 = vpack.c.b16 %v1601, %v1600
    %v1633 = vpack.c.b16 %v1603, %v1602
    %v1634 = vpack.c.b16 %v1605, %v1604
    %v1635 = vpack.c.b16 %v1607, %v1606
    %v1680 = vunpack.c.l.b16 %v1480
    %v1681 = vunpack.c.l.b16 %v1481
    %v1682 = vunpack.c.l.b16 %v1482
    %v1683 = vunpack.c.l.b16 %v1483
    %v1684 = vunpack.c.l.b16 %v1484
    %v1685 = vunpack.c.l.b16 %v1485
    %v1686 = vunpack.c.l.b16 %v1486
    %v1687 = vunpack.c.l.b16 %v1487
    %v1688 = vunpack.c.l.b16 %v1488
    %v1689 = vunpack.c.l.b16 %v1489
    %v1690 = vunpack.c.l.b16 %v1490
    %v1691 = vunpack.c.l.b16 %v1491
    %v1692 = vunpack.c.l.b16 %v1492
    %v1693 = vunpack.c.l.b16 %v1493
    %v1694 = vunpack.c.l.b16 %v1494
    %v1695 = vunpack.c.l.b16 %v1495
    %v1696 = vpack.c.b16 %v1681, %v1680
    %v1697 = vpack.c.b16 %v1683, %v1682
    %v1698 = vpack.c.b16 %v1685, %v1684
    %v1699 = vpack.c.b16 %v1687, %v1686
    %v1700 = vpack.c.b16 %v1689, %v1688
    %v1701 = vpack.c.b16 %v1691, %v1690
    %v1702 = vpack.c.b16 %v1693, %v1692
    %v1703 = vpack.c.b16 %v1695, %v1694
    %1712 = vmatpush.bf16.msra.mxu0 %v1703
    %1713 = vmatpush.bf16.msra.mxu0 %v1702
    %1714 = vmatpush.bf16.msra.mxu0 %v1701
    %1715 = vmatpush.bf16.msra.mxu0 %v1700
    %1716 = vmatpush.bf16.msra.mxu0 %v1699
    %1717 = vmatpush.bf16.msra.mxu0 %v1698
    %1718 = vmatpush.bf16.msra.mxu0 %v1697
    %1719 = vmatpush.bf16.msra.mxu0 %v1696
    %1720 = vmatmul.bf16.gmra.mxu0 %v1608
    %v1721 = vpop.f32.mrf.mxu0
    %v1722 = vadd.f32 0.0, %v1721
    %v1723 = vpop.f32.mrf.mxu0
    %v1724 = vadd.f32 0.0, %v1723
    %1725 = vmatmul.bf16.gmra.mxu0 %v1609
    %v1726 = vpop.f32.mrf.mxu0
    %v1727 = vadd.f32 0.0, %v1726
    %v1728 = vpop.f32.mrf.mxu0
    %v1729 = vadd.f32 0.0, %v1728
    %1730 = vmatmul.bf16.gmra.mxu0 %v1610
    %v1731 = vpop.f32.mrf.mxu0
    %v1732 = vadd.f32 0.0, %v1731
    %v1733 = vpop.f32.mrf.mxu0
    %v1734 = vadd.f32 0.0, %v1733
    %1735 = vmatmul.bf16.gmra.mxu0 %v1611
    %v1736 = vpop.f32.mrf.mxu0
    %v1737 = vadd.f32 0.0, %v1736
    %v1738 = vpop.f32.mrf.mxu0
    %v1739 = vadd.f32 0.0, %v1738
    %1740 = vmatmul.bf16.gmra.mxu0 %v1612
    %v1741 = vpop.f32.mrf.mxu0
    %v1742 = vadd.f32 0.0, %v1741
    %v1743 = vpop.f32.mrf.mxu0
    %v1744 = vadd.f32 0.0, %v1743
    %1745 = vmatmul.bf16.gmra.mxu0 %v1613
    %v1746 = vpop.f32.mrf.mxu0
    %v1747 = vadd.f32 0.0, %v1746
    %v1748 = vpop.f32.mrf.mxu0
    %v1749 = vadd.f32 0.0, %v1748
    %1750 = vmatmul.bf16.gmra.mxu0 %v1614
    %v1751 = vpop.f32.mrf.mxu0
    %v1752 = vadd.f32 0.0, %v1751
    %v1753 = vpop.f32.mrf.mxu0
    %v1754 = vadd.f32 0.0, %v1753
    %1755 = vmatmul.bf16.gmra.mxu0 %v1615
    %v1756 = vpop.f32.mrf.mxu0
    %v1757 = vadd.f32 0.0, %v1756
    %v1758 = vpop.f32.mrf.mxu0
    %v1759 = vadd.f32 0.0, %v1758
    %1760 = vmatmul.bf16.gmra.mxu0 %v1616
    %v1761 = vpop.f32.mrf.mxu0
    %v1762 = vadd.f32 0.0, %v1761
    %v1763 = vpop.f32.mrf.mxu0
    %v1764 = vadd.f32 0.0, %v1763
    %1765 = vmatmul.bf16.gmra.mxu0 %v1617
    %v1766 = vpop.f32.mrf.mxu0
    %v1767 = vadd.f32 0.0, %v1766
    %v1768 = vpop.f32.mrf.mxu0
    %v1769 = vadd.f32 0.0, %v1768
    %1770 = vmatmul.bf16.gmra.mxu0 %v1618
    %v1771 = vpop.f32.mrf.mxu0
    %v1772 = vadd.f32 0.0, %v1771
    %v1773 = vpop.f32.mrf.mxu0
    %v1774 = vadd.f32 0.0, %v1773
    %1775 = vmatmul.bf16.gmra.mxu0 %v1619
    %v1776 = vpop.f32.mrf.mxu0
    %v1777 = vadd.f32 0.0, %v1776
    %v1778 = vpop.f32.mrf.mxu0
    %v1779 = vadd.f32 0.0, %v1778
    %1780 = vmatmul.bf16.gmra.mxu0 %v1620
    %v1781 = vpop.f32.mrf.mxu0
    %v1782 = vadd.f32 0.0, %v1781
    %v1783 = vpop.f32.mrf.mxu0
    %v1784 = vadd.f32 0.0, %v1783
    %1785 = vmatmul.bf16.gmra.mxu0 %v1621
    %v1786 = vpop.f32.mrf.mxu0
    %v1787 = vadd.f32 0.0, %v1786
    %v1788 = vpop.f32.mrf.mxu0
    %v1789 = vadd.f32 0.0, %v1788
    %1790 = vmatmul.bf16.gmra.mxu0 %v1622
    %v1791 = vpop.f32.mrf.mxu0
    %v1792 = vadd.f32 0.0, %v1791
    %v1793 = vpop.f32.mrf.mxu0
    %v1794 = vadd.f32 0.0, %v1793
    %1795 = vmatmul.bf16.gmra.mxu0 %v1623
    %v1796 = vpop.f32.mrf.mxu0
    %v1797 = vadd.f32 0.0, %v1796
    %v1798 = vpop.f32.mrf.mxu0
    %v1799 = vadd.f32 0.0, %v1798
    %1800 = vmatmul.bf16.gmra.mxu0 %v1624
    %v1801 = vpop.f32.mrf.mxu0
    %v1802 = vadd.f32 0.0, %v1801
    %v1803 = vpop.f32.mrf.mxu0
    %v1804 = vadd.f32 0.0, %v1803
    %1805 = vmatmul.bf16.gmra.mxu0 %v1625
    %v1806 = vpop.f32.mrf.mxu0
    %v1807 = vadd.f32 0.0, %v1806
    %v1808 = vpop.f32.mrf.mxu0
    %v1809 = vadd.f32 0.0, %v1808
    %1810 = vmatmul.bf16.gmra.mxu0 %v1626
    %v1811 = vpop.f32.mrf.mxu0
    %v1812 = vadd.f32 0.0, %v1811
    %v1813 = vpop.f32.mrf.mxu0
    %v1814 = vadd.f32 0.0, %v1813
    %1815 = vmatmul.bf16.gmra.mxu0 %v1627
    %v1816 = vpop.f32.mrf.mxu0
    %v1817 = vadd.f32 0.0, %v1816
    %v1818 = vpop.f32.mrf.mxu0
    %v1819 = vadd.f32 0.0, %v1818
    %1820 = vmatmul.bf16.gmra.mxu0 %v1628
    %v1821 = vpop.f32.mrf.mxu0
    %v1822 = vadd.f32 0.0, %v1821
    %v1823 = vpop.f32.mrf.mxu0
    %v1824 = vadd.f32 0.0, %v1823
    %1825 = vmatmul.bf16.gmra.mxu0 %v1629
    %v1826 = vpop.f32.mrf.mxu0
    %v1827 = vadd.f32 0.0, %v1826
    %v1828 = vpop.f32.mrf.mxu0
    %v1829 = vadd.f32 0.0, %v1828
    %1830 = vmatmul.bf16.gmra.mxu0 %v1630
    %v1831 = vpop.f32.mrf.mxu0
    %v1832 = vadd.f32 0.0, %v1831
    %v1833 = vpop.f32.mrf.mxu0
    %v1834 = vadd.f32 0.0, %v1833
    %1835 = vmatmul.bf16.gmra.mxu0 %v1631
    %v1836 = vpop.f32.mrf.mxu0
    %v1837 = vadd.f32 0.0, %v1836
    %v1838 = vpop.f32.mrf.mxu0
    %v1839 = vadd.f32 0.0, %v1838
    %1840 = vmatmul.bf16.gmra.mxu0 %v1632
    %v1841 = vpop.f32.mrf.mxu0
    %v1842 = vadd.f32 0.0, %v1841
    %v1843 = vpop.f32.mrf.mxu0
    %v1844 = vadd.f32 0.0, %v1843
    %1845 = vmatmul.bf16.gmra.mxu0 %v1633
    %v1846 = vpop.f32.mrf.mxu0
    %v1847 = vadd.f32 0.0, %v1846
    %v1848 = vpop.f32.mrf.mxu0
    %v1849 = vadd.f32 0.0, %v1848
    %1850 = vmatmul.bf16.gmra.mxu0 %v1634
    %v1851 = vpop.f32.mrf.mxu0
    %v1852 = vadd.f32 0.0, %v1851
    %v1853 = vpop.f32.mrf.mxu0
    %v1854 = vadd.f32 0.0, %v1853
    %1855 = vmatmul.bf16.gmra.mxu0 %v1635
    %v1856 = vpop.f32.mrf.mxu0
    %v1857 = vadd.f32 0.0, %v1856
    %v1858 = vpop.f32.mrf.mxu0
    %v1859 = vadd.f32 0.0, %v1858
    %1860 = vdwg.mxu0
    %1861 = vst [vmem:[#allocation6] sm:$0xff] %v1722
    %1862 = vst [vmem:[#allocation6 + $0x8] sm:$0xff] %v1724
    %1863 = vst [vmem:[#allocation6 + $0x10] sm:$0xff] %v1727
    %1864 = vst [vmem:[#allocation6 + $0x18] sm:$0xff] %v1729
    %1865 = vst [vmem:[#allocation6 + $0x20] sm:$0xff] %v1732
    %1866 = vst [vmem:[#allocation6 + $0x28] sm:$0xff] %v1734
    %1867 = vst [vmem:[#allocation6 + $0x30] sm:$0xff] %v1737
    %1868 = vst [vmem:[#allocation6 + $0x38] sm:$0xff] %v1739
    %1869 = vst [vmem:[#allocation6 + $0x40] sm:$0xff] %v1742
    %1870 = vst [vmem:[#allocation6 + $0x48] sm:$0xff] %v1744
    %1871 = vst [vmem:[#allocation6 + $0x50] sm:$0xff] %v1747
    %1872 = vst [vmem:[#allocation6 + $0x58] sm:$0xff] %v1749
    %1873 = vst [vmem:[#allocation6 + $0x60] sm:$0xff] %v1752
    %1874 = vst [vmem:[#allocation6 + $0x68] sm:$0xff] %v1754
    %1875 = vst [vmem:[#allocation6 + $0x70] sm:$0xff] %v1757
    %1876 = vst [vmem:[#allocation6 + $0x78] sm:$0xff] %v1759
    %1877 = vst [vmem:[#allocation6 + $0x80] sm:$0xff] %v1762
    %1878 = vst [vmem:[#allocation6 + $0x88] sm:$0xff] %v1764
    %1879 = vst [vmem:[#allocation6 + $0x90] sm:$0xff] %v1767
    %1880 = vst [vmem:[#allocation6 + $0x98] sm:$0xff] %v1769
    %1881 = vst [vmem:[#allocation6 + $0xa0] sm:$0xff] %v1772
    %1882 = vst [vmem:[#allocation6 + $0xa8] sm:$0xff] %v1774
    %1883 = vst [vmem:[#allocation6 + $0xb0] sm:$0xff] %v1777
    %1884 = vst [vmem:[#allocation6 + $0xb8] sm:$0xff] %v1779
    %1885 = vst [vmem:[#allocation6 + $0xc0] sm:$0xff] %v1782
    %1886 = vst [vmem:[#allocation6 + $0xc8] sm:$0xff] %v1784
    %1887 = vst [vmem:[#allocation6 + $0xd0] sm:$0xff] %v1787
    %1888 = vst [vmem:[#allocation6 + $0xd8] sm:$0xff] %v1789
    %1889 = vst [vmem:[#allocation6 + $0xe0] sm:$0xff] %v1792
    %1890 = vst [vmem:[#allocation6 + $0xe8] sm:$0xff] %v1794
    %1891 = vst [vmem:[#allocation6 + $0xf0] sm:$0xff] %v1797
    %1892 = vst [vmem:[#allocation6 + $0xf8] sm:$0xff] %v1799
    %1893 = vst [vmem:[#allocation6 + $0x100] sm:$0xff] %v1802
    %1894 = vst [vmem:[#allocation6 + $0x108] sm:$0xff] %v1804
    %1895 = vst [vmem:[#allocation6 + $0x110] sm:$0xff] %v1807
    %1896 = vst [vmem:[#allocation6 + $0x118] sm:$0xff] %v1809
    %1897 = vst [vmem:[#allocation6 + $0x120] sm:$0xff] %v1812
    %1898 = vst [vmem:[#allocation6 + $0x128] sm:$0xff] %v1814
    %1899 = vst [vmem:[#allocation6 + $0x130] sm:$0xff] %v1817
    %1900 = vst [vmem:[#allocation6 + $0x138] sm:$0xff] %v1819
    %1901 = vst [vmem:[#allocation6 + $0x140] sm:$0xff] %v1822
    %1902 = vst [vmem:[#allocation6 + $0x148] sm:$0xff] %v1824
    %1903 = vst [vmem:[#allocation6 + $0x150] sm:$0xff] %v1827
    %1904 = vst [vmem:[#allocation6 + $0x158] sm:$0xff] %v1829
    %1905 = vst [vmem:[#allocation6 + $0x160] sm:$0xff] %v1832
    %1906 = vst [vmem:[#allocation6 + $0x168] sm:$0xff] %v1834
    %1907 = vst [vmem:[#allocation6 + $0x170] sm:$0xff] %v1837
    %1908 = vst [vmem:[#allocation6 + $0x178] sm:$0xff] %v1839
    %1909 = vst [vmem:[#allocation6 + $0x180] sm:$0xff] %v1842
    %1910 = vst [vmem:[#allocation6 + $0x188] sm:$0xff] %v1844
    %1911 = vst [vmem:[#allocation6 + $0x190] sm:$0xff] %v1847
    %1912 = vst [vmem:[#allocation6 + $0x198] sm:$0xff] %v1849
    %1913 = vst [vmem:[#allocation6 + $0x1a0] sm:$0xff] %v1852
    %1914 = vst [vmem:[#allocation6 + $0x1a8] sm:$0xff] %v1854
    %1915 = vst [vmem:[#allocation6 + $0x1b0] sm:$0xff] %v1857
    %1916 = vst [vmem:[#allocation6 + $0x1b8] sm:$0xff] %v1859
    %v1917 = vld [vmem:[#allocation3 + $0xe0] sm:$0xf]
    %v1918 = vld [vmem:[#allocation3 + $0xfc] sm:$0xf]
    %v1919 = vld [vmem:[#allocation3 + $0x118] sm:$0xf]
    %v1920 = vld [vmem:[#allocation3 + $0x134] sm:$0xf]
    %v1921 = vld [vmem:[#allocation3 + $0x150] sm:$0xf]
    %v1922 = vld [vmem:[#allocation3 + $0x16c] sm:$0xf]
    %v1923 = vld [vmem:[#allocation3 + $0x188] sm:$0xf]
    %v1924 = vld [vmem:[#allocation3 + $0x1a4] sm:$0xf]
    %1925 = vst [vmem:[#allocation5] sm:$0xf] %v1917
    %1926 = vst [vmem:[#allocation5 + $0x4] sm:$0xf] %v1918
    %1927 = vst [vmem:[#allocation5 + $0x8] sm:$0xf] %v1919
    %1928 = vst [vmem:[#allocation5 + $0xc] sm:$0xf] %v1920
    %1929 = vst [vmem:[#allocation5 + $0x10] sm:$0xf] %v1921
    %1930 = vst [vmem:[#allocation5 + $0x14] sm:$0xf] %v1922
    %1931 = vst [vmem:[#allocation5 + $0x18] sm:$0xf] %v1923
    %1932 = vst [vmem:[#allocation5 + $0x1c] sm:$0xf] %v1924
    %v1933 = vld [vmem:[#allocation3 + $0xe4] sm:$0xf]
    %v1934 = vld [vmem:[#allocation3 + $0x100] sm:$0xf]
    %v1935 = vld [vmem:[#allocation3 + $0x11c] sm:$0xf]
    %v1936 = vld [vmem:[#allocation3 + $0x138] sm:$0xf]
    %v1937 = vld [vmem:[#allocation3 + $0x154] sm:$0xf]
    %v1938 = vld [vmem:[#allocation3 + $0x170] sm:$0xf]
    %v1939 = vld [vmem:[#allocation3 + $0x18c] sm:$0xf]
    %v1940 = vld [vmem:[#allocation3 + $0x1a8] sm:$0xf]
    %1941 = vst [vmem:[#allocation5 + $0x20] sm:$0xf] %v1933
    %1942 = vst [vmem:[#allocation5 + $0x24] sm:$0xf] %v1934
    %1943 = vst [vmem:[#allocation5 + $0x28] sm:$0xf] %v1935
    %1944 = vst [vmem:[#allocation5 + $0x2c] sm:$0xf] %v1936
    %1945 = vst [vmem:[#allocation5 + $0x30] sm:$0xf] %v1937
    %1946 = vst [vmem:[#allocation5 + $0x34] sm:$0xf] %v1938
    %1947 = vst [vmem:[#allocation5 + $0x38] sm:$0xf] %v1939
    %1948 = vst [vmem:[#allocation5 + $0x3c] sm:$0xf] %v1940
    %v1949 = vld [vmem:[#allocation3 + $0xe8] sm:$0xf]
    %v1950 = vld [vmem:[#allocation3 + $0x104] sm:$0xf]
    %v1951 = vld [vmem:[#allocation3 + $0x120] sm:$0xf]
    %v1952 = vld [vmem:[#allocation3 + $0x13c] sm:$0xf]
    %v1953 = vld [vmem:[#allocation3 + $0x158] sm:$0xf]
    %v1954 = vld [vmem:[#allocation3 + $0x174] sm:$0xf]
    %v1955 = vld [vmem:[#allocation3 + $0x190] sm:$0xf]
    %v1956 = vld [vmem:[#allocation3 + $0x1ac] sm:$0xf]
    %1957 = vst [vmem:[#allocation5 + $0x40] sm:$0xf] %v1949
    %1958 = vst [vmem:[#allocation5 + $0x44] sm:$0xf] %v1950
    %1959 = vst [vmem:[#allocation5 + $0x48] sm:$0xf] %v1951
    %1960 = vst [vmem:[#allocation5 + $0x4c] sm:$0xf] %v1952
    %1961 = vst [vmem:[#allocation5 + $0x50] sm:$0xf] %v1953
    %1962 = vst [vmem:[#allocation5 + $0x54] sm:$0xf] %v1954
    %1963 = vst [vmem:[#allocation5 + $0x58] sm:$0xf] %v1955
    %1964 = vst [vmem:[#allocation5 + $0x5c] sm:$0xf] %v1956
    %v1965 = vld [vmem:[#allocation3 + $0xec] sm:$0xf]
    %v1966 = vld [vmem:[#allocation3 + $0x108] sm:$0xf]
    %v1967 = vld [vmem:[#allocation3 + $0x124] sm:$0xf]
    %v1968 = vld [vmem:[#allocation3 + $0x140] sm:$0xf]
    %v1969 = vld [vmem:[#allocation3 + $0x15c] sm:$0xf]
    %v1970 = vld [vmem:[#allocation3 + $0x178] sm:$0xf]
    %v1971 = vld [vmem:[#allocation3 + $0x194] sm:$0xf]
    %v1972 = vld [vmem:[#allocation3 + $0x1b0] sm:$0xf]
    %1973 = vst [vmem:[#allocation5 + $0x60] sm:$0xf] %v1965
    %1974 = vst [vmem:[#allocation5 + $0x64] sm:$0xf] %v1966
    %1975 = vst [vmem:[#allocation5 + $0x68] sm:$0xf] %v1967
    %1976 = vst [vmem:[#allocation5 + $0x6c] sm:$0xf] %v1968
    %1977 = vst [vmem:[#allocation5 + $0x70] sm:$0xf] %v1969
    %1978 = vst [vmem:[#allocation5 + $0x74] sm:$0xf] %v1970
    %1979 = vst [vmem:[#allocation5 + $0x78] sm:$0xf] %v1971
    %1980 = vst [vmem:[#allocation5 + $0x7c] sm:$0xf] %v1972
    %v1981 = vld [vmem:[#allocation3 + $0xf0] sm:$0xf]
    %v1982 = vld [vmem:[#allocation3 + $0x10c] sm:$0xf]
    %v1983 = vld [vmem:[#allocation3 + $0x128] sm:$0xf]
    %v1984 = vld [vmem:[#allocation3 + $0x144] sm:$0xf]
    %v1985 = vld [vmem:[#allocation3 + $0x160] sm:$0xf]
    %v1986 = vld [vmem:[#allocation3 + $0x17c] sm:$0xf]
    %v1987 = vld [vmem:[#allocation3 + $0x198] sm:$0xf]
    %v1988 = vld [vmem:[#allocation3 + $0x1b4] sm:$0xf]
    %1989 = vst [vmem:[#allocation5 + $0x80] sm:$0xf] %v1981
    %1990 = vst [vmem:[#allocation5 + $0x84] sm:$0xf] %v1982
    %1991 = vst [vmem:[#allocation5 + $0x88] sm:$0xf] %v1983
    %1992 = vst [vmem:[#allocation5 + $0x8c] sm:$0xf] %v1984
    %1993 = vst [vmem:[#allocation5 + $0x90] sm:$0xf] %v1985
    %1994 = vst [vmem:[#allocation5 + $0x94] sm:$0xf] %v1986
    %1995 = vst [vmem:[#allocation5 + $0x98] sm:$0xf] %v1987
    %1996 = vst [vmem:[#allocation5 + $0x9c] sm:$0xf] %v1988
    %v1997 = vld [vmem:[#allocation3 + $0xf4] sm:$0xf]
    %v1998 = vld [vmem:[#allocation3 + $0x110] sm:$0xf]
    %v1999 = vld [vmem:[#allocation3 + $0x12c] sm:$0xf]
    %v2000 = vld [vmem:[#allocation3 + $0x148] sm:$0xf]
    %v2001 = vld [vmem:[#allocation3 + $0x164] sm:$0xf]
    %v2002 = vld [vmem:[#allocation3 + $0x180] sm:$0xf]
    %v2003 = vld [vmem:[#allocation3 + $0x19c] sm:$0xf]
    %v2004 = vld [vmem:[#allocation3 + $0x1b8] sm:$0xf]
    %2005 = vst [vmem:[#allocation5 + $0xa0] sm:$0xf] %v1997
    %2006 = vst [vmem:[#allocation5 + $0xa4] sm:$0xf] %v1998
    %2007 = vst [vmem:[#allocation5 + $0xa8] sm:$0xf] %v1999
    %2008 = vst [vmem:[#allocation5 + $0xac] sm:$0xf] %v2000
    %2009 = vst [vmem:[#allocation5 + $0xb0] sm:$0xf] %v2001
    %2010 = vst [vmem:[#allocation5 + $0xb4] sm:$0xf] %v2002
    %2011 = vst [vmem:[#allocation5 + $0xb8] sm:$0xf] %v2003
    %2012 = vst [vmem:[#allocation5 + $0xbc] sm:$0xf] %v2004
    %v2013 = vld [vmem:[#allocation3 + $0xf8] sm:$0xf]
    %v2014 = vld [vmem:[#allocation3 + $0x114] sm:$0xf]
    %v2015 = vld [vmem:[#allocation3 + $0x130] sm:$0xf]
    %v2016 = vld [vmem:[#allocation3 + $0x14c] sm:$0xf]
    %v2017 = vld [vmem:[#allocation3 + $0x168] sm:$0xf]
    %v2018 = vld [vmem:[#allocation3 + $0x184] sm:$0xf]
    %v2019 = vld [vmem:[#allocation3 + $0x1a0] sm:$0xf]
    %v2020 = vld [vmem:[#allocation3 + $0x1bc] sm:$0xf]
    %2021 = vst [vmem:[#allocation5 + $0xc0] sm:$0xf] %v2013
    %2022 = vst [vmem:[#allocation5 + $0xc4] sm:$0xf] %v2014
    %2023 = vst [vmem:[#allocation5 + $0xc8] sm:$0xf] %v2015
    %2024 = vst [vmem:[#allocation5 + $0xcc] sm:$0xf] %v2016
    %2025 = vst [vmem:[#allocation5 + $0xd0] sm:$0xf] %v2017
    %2026 = vst [vmem:[#allocation5 + $0xd4] sm:$0xf] %v2018
    %2027 = vst [vmem:[#allocation5 + $0xd8] sm:$0xf] %v2019
    %2028 = vst [vmem:[#allocation5 + $0xdc] sm:$0xf] %v2020
    %v2029 = vld [vmem:[#allocation5] sm:$0xf]
    %v2030 = vld [vmem:[#allocation5 + $0x4] sm:$0xf]
    %v2031 = vld [vmem:[#allocation5 + $0x8] sm:$0xf]
    %v2032 = vld [vmem:[#allocation5 + $0xc] sm:$0xf]
    %v2033 = vld [vmem:[#allocation5 + $0x10] sm:$0xf]
    %v2034 = vld [vmem:[#allocation5 + $0x14] sm:$0xf]
    %v2035 = vld [vmem:[#allocation5 + $0x18] sm:$0xf]
    %v2036 = vld [vmem:[#allocation5 + $0x1c] sm:$0xf]
    %v2037 = vld [vmem:[#allocation5 + $0x20] sm:$0xf]
    %v2038 = vld [vmem:[#allocation5 + $0x24] sm:$0xf]
    %v2039 = vld [vmem:[#allocation5 + $0x28] sm:$0xf]
    %v2040 = vld [vmem:[#allocation5 + $0x2c] sm:$0xf]
    %v2041 = vld [vmem:[#allocation5 + $0x30] sm:$0xf]
    %v2042 = vld [vmem:[#allocation5 + $0x34] sm:$0xf]
    %v2043 = vld [vmem:[#allocation5 + $0x38] sm:$0xf]
    %v2044 = vld [vmem:[#allocation5 + $0x3c] sm:$0xf]
    %v2045 = vld [vmem:[#allocation5 + $0x40] sm:$0xf]
    %v2046 = vld [vmem:[#allocation5 + $0x44] sm:$0xf]
    %v2047 = vld [vmem:[#allocation5 + $0x48] sm:$0xf]
    %v2048 = vld [vmem:[#allocation5 + $0x4c] sm:$0xf]
    %v2049 = vld [vmem:[#allocation5 + $0x50] sm:$0xf]
    %v2050 = vld [vmem:[#allocation5 + $0x54] sm:$0xf]
    %v2051 = vld [vmem:[#allocation5 + $0x58] sm:$0xf]
    %v2052 = vld [vmem:[#allocation5 + $0x5c] sm:$0xf]
    %v2053 = vld [vmem:[#allocation5 + $0x60] sm:$0xf]
    %v2054 = vld [vmem:[#allocation5 + $0x64] sm:$0xf]
    %v2055 = vld [vmem:[#allocation5 + $0x68] sm:$0xf]
    %v2056 = vld [vmem:[#allocation5 + $0x6c] sm:$0xf]
    %v2057 = vld [vmem:[#allocation5 + $0x70] sm:$0xf]
    %v2058 = vld [vmem:[#allocation5 + $0x74] sm:$0xf]
    %v2059 = vld [vmem:[#allocation5 + $0x78] sm:$0xf]
    %v2060 = vld [vmem:[#allocation5 + $0x7c] sm:$0xf]
    %v2061 = vld [vmem:[#allocation5 + $0x80] sm:$0xf]
    %v2062 = vld [vmem:[#allocation5 + $0x84] sm:$0xf]
    %v2063 = vld [vmem:[#allocation5 + $0x88] sm:$0xf]
    %v2064 = vld [vmem:[#allocation5 + $0x8c] sm:$0xf]
    %v2065 = vld [vmem:[#allocation5 + $0x90] sm:$0xf]
    %v2066 = vld [vmem:[#allocation5 + $0x94] sm:$0xf]
    %v2067 = vld [vmem:[#allocation5 + $0x98] sm:$0xf]
    %v2068 = vld [vmem:[#allocation5 + $0x9c] sm:$0xf]
    %v2069 = vld [vmem:[#allocation5 + $0xa0] sm:$0xf]
    %v2070 = vld [vmem:[#allocation5 + $0xa4] sm:$0xf]
    %v2071 = vld [vmem:[#allocation5 + $0xa8] sm:$0xf]
    %v2072 = vld [vmem:[#allocation5 + $0xac] sm:$0xf]
    %v2073 = vld [vmem:[#allocation5 + $0xb0] sm:$0xf]
    %v2074 = vld [vmem:[#allocation5 + $0xb4] sm:$0xf]
    %v2075 = vld [vmem:[#allocation5 + $0xb8] sm:$0xf]
    %v2076 = vld [vmem:[#allocation5 + $0xbc] sm:$0xf]
    %v2077 = vld [vmem:[#allocation5 + $0xc0] sm:$0xf]
    %v2078 = vld [vmem:[#allocation5 + $0xc4] sm:$0xf]
    %v2079 = vld [vmem:[#allocation5 + $0xc8] sm:$0xf]
    %v2080 = vld [vmem:[#allocation5 + $0xcc] sm:$0xf]
    %v2081 = vld [vmem:[#allocation5 + $0xd0] sm:$0xf]
    %v2082 = vld [vmem:[#allocation5 + $0xd4] sm:$0xf]
    %v2083 = vld [vmem:[#allocation5 + $0xd8] sm:$0xf]
    %v2084 = vld [vmem:[#allocation5 + $0xdc] sm:$0xf]
    %v2085 = vld [vmem:[#allocation15] sm:$0xf]
    %v2086 = vld [vmem:[#allocation15 + $0x4] sm:$0xf]
    %v2087 = vld [vmem:[#allocation15 + $0x8] sm:$0xf]
    %v2088 = vld [vmem:[#allocation15 + $0xc] sm:$0xf]
    %v2089 = vld [vmem:[#allocation15 + $0x10] sm:$0xf]
    %v2090 = vld [vmem:[#allocation15 + $0x14] sm:$0xf]
    %v2091 = vld [vmem:[#allocation15 + $0x18] sm:$0xf]
    %v2092 = vld [vmem:[#allocation15 + $0x1c] sm:$0xf]
    %v2093 = vld [vmem:[#allocation15 + $0x20] sm:$0xf]
    %v2094 = vld [vmem:[#allocation15 + $0x24] sm:$0xf]
    %v2095 = vld [vmem:[#allocation15 + $0x28] sm:$0xf]
    %v2096 = vld [vmem:[#allocation15 + $0x2c] sm:$0xf]
    %v2097 = vld [vmem:[#allocation15 + $0x30] sm:$0xf]
    %v2098 = vld [vmem:[#allocation15 + $0x34] sm:$0xf]
    %v2099 = vld [vmem:[#allocation15 + $0x38] sm:$0xf]
    %v2100 = vld [vmem:[#allocation15 + $0x3c] sm:$0xf]
    %v2157 = vunpack.c.l.b16 %v2029
    %v2158 = vunpack.c.l.b16 %v2030
    %v2159 = vunpack.c.l.b16 %v2031
    %v2160 = vunpack.c.l.b16 %v2032
    %v2161 = vunpack.c.l.b16 %v2033
    %v2162 = vunpack.c.l.b16 %v2034
    %v2163 = vunpack.c.l.b16 %v2035
    %v2164 = vunpack.c.l.b16 %v2036
    %v2165 = vunpack.c.l.b16 %v2037
    %v2166 = vunpack.c.l.b16 %v2038
    %v2167 = vunpack.c.l.b16 %v2039
    %v2168 = vunpack.c.l.b16 %v2040
    %v2169 = vunpack.c.l.b16 %v2041
    %v2170 = vunpack.c.l.b16 %v2042
    %v2171 = vunpack.c.l.b16 %v2043
    %v2172 = vunpack.c.l.b16 %v2044
    %v2173 = vunpack.c.l.b16 %v2045
    %v2174 = vunpack.c.l.b16 %v2046
    %v2175 = vunpack.c.l.b16 %v2047
    %v2176 = vunpack.c.l.b16 %v2048
    %v2177 = vunpack.c.l.b16 %v2049
    %v2178 = vunpack.c.l.b16 %v2050
    %v2179 = vunpack.c.l.b16 %v2051
    %v2180 = vunpack.c.l.b16 %v2052
    %v2181 = vunpack.c.l.b16 %v2053
    %v2182 = vunpack.c.l.b16 %v2054
    %v2183 = vunpack.c.l.b16 %v2055
    %v2184 = vunpack.c.l.b16 %v2056
    %v2185 = vunpack.c.l.b16 %v2057
    %v2186 = vunpack.c.l.b16 %v2058
    %v2187 = vunpack.c.l.b16 %v2059
    %v2188 = vunpack.c.l.b16 %v2060
    %v2189 = vunpack.c.l.b16 %v2061
    %v2190 = vunpack.c.l.b16 %v2062
    %v2191 = vunpack.c.l.b16 %v2063
    %v2192 = vunpack.c.l.b16 %v2064
    %v2193 = vunpack.c.l.b16 %v2065
    %v2194 = vunpack.c.l.b16 %v2066
    %v2195 = vunpack.c.l.b16 %v2067
    %v2196 = vunpack.c.l.b16 %v2068
    %v2197 = vunpack.c.l.b16 %v2069
    %v2198 = vunpack.c.l.b16 %v2070
    %v2199 = vunpack.c.l.b16 %v2071
    %v2200 = vunpack.c.l.b16 %v2072
    %v2201 = vunpack.c.l.b16 %v2073
    %v2202 = vunpack.c.l.b16 %v2074
    %v2203 = vunpack.c.l.b16 %v2075
    %v2204 = vunpack.c.l.b16 %v2076
    %v2205 = vunpack.c.l.b16 %v2077
    %v2206 = vunpack.c.l.b16 %v2078
    %v2207 = vunpack.c.l.b16 %v2079
    %v2208 = vunpack.c.l.b16 %v2080
    %v2209 = vunpack.c.l.b16 %v2081
    %v2210 = vunpack.c.l.b16 %v2082
    %v2211 = vunpack.c.l.b16 %v2083
    %v2212 = vunpack.c.l.b16 %v2084
    %v2213 = vpack.c.b16 %v2158, %v2157
    %v2214 = vpack.c.b16 %v2160, %v2159
    %v2215 = vpack.c.b16 %v2162, %v2161
    %v2216 = vpack.c.b16 %v2164, %v2163
    %v2217 = vpack.c.b16 %v2166, %v2165
    %v2218 = vpack.c.b16 %v2168, %v2167
    %v2219 = vpack.c.b16 %v2170, %v2169
    %v2220 = vpack.c.b16 %v2172, %v2171
    %v2221 = vpack.c.b16 %v2174, %v2173
    %v2222 = vpack.c.b16 %v2176, %v2175
    %v2223 = vpack.c.b16 %v2178, %v2177
    %v2224 = vpack.c.b16 %v2180, %v2179
    %v2225 = vpack.c.b16 %v2182, %v2181
    %v2226 = vpack.c.b16 %v2184, %v2183
    %v2227 = vpack.c.b16 %v2186, %v2185
    %v2228 = vpack.c.b16 %v2188, %v2187
    %v2229 = vpack.c.b16 %v2190, %v2189
    %v2230 = vpack.c.b16 %v2192, %v2191
    %v2231 = vpack.c.b16 %v2194, %v2193
    %v2232 = vpack.c.b16 %v2196, %v2195
    %v2233 = vpack.c.b16 %v2198, %v2197
    %v2234 = vpack.c.b16 %v2200, %v2199
    %v2235 = vpack.c.b16 %v2202, %v2201
    %v2236 = vpack.c.b16 %v2204, %v2203
    %v2237 = vpack.c.b16 %v2206, %v2205
    %v2238 = vpack.c.b16 %v2208, %v2207
    %v2239 = vpack.c.b16 %v2210, %v2209
    %v2240 = vpack.c.b16 %v2212, %v2211
    %v2285 = vunpack.c.l.b16 %v2085
    %v2286 = vunpack.c.l.b16 %v2086
    %v2287 = vunpack.c.l.b16 %v2087
    %v2288 = vunpack.c.l.b16 %v2088
    %v2289 = vunpack.c.l.b16 %v2089
    %v2290 = vunpack.c.l.b16 %v2090
    %v2291 = vunpack.c.l.b16 %v2091
    %v2292 = vunpack.c.l.b16 %v2092
    %v2293 = vunpack.c.l.b16 %v2093
    %v2294 = vunpack.c.l.b16 %v2094
    %v2295 = vunpack.c.l.b16 %v2095
    %v2296 = vunpack.c.l.b16 %v2096
    %v2297 = vunpack.c.l.b16 %v2097
    %v2298 = vunpack.c.l.b16 %v2098
    %v2299 = vunpack.c.l.b16 %v2099
    %v2300 = vunpack.c.l.b16 %v2100
    %v2301 = vpack.c.b16 %v2286, %v2285
    %v2302 = vpack.c.b16 %v2288, %v2287
    %v2303 = vpack.c.b16 %v2290, %v2289
    %v2304 = vpack.c.b16 %v2292, %v2291
    %v2305 = vpack.c.b16 %v2294, %v2293
    %v2306 = vpack.c.b16 %v2296, %v2295
    %v2307 = vpack.c.b16 %v2298, %v2297
    %v2308 = vpack.c.b16 %v2300, %v2299
    %2317 = vmatpush.bf16.msra.mxu0 %v2308
    %2318 = vmatpush.bf16.msra.mxu0 %v2307
    %2319 = vmatpush.bf16.msra.mxu0 %v2306
    %2320 = vmatpush.bf16.msra.mxu0 %v2305
    %2321 = vmatpush.bf16.msra.mxu0 %v2304
    %2322 = vmatpush.bf16.msra.mxu0 %v2303
    %2323 = vmatpush.bf16.msra.mxu0 %v2302
    %2324 = vmatpush.bf16.msra.mxu0 %v2301
    %2325 = vmatmul.bf16.gmra.mxu0 %v2213
    %v2326 = vpop.f32.mrf.mxu0
    %v2327 = vadd.f32 0.0, %v2326
    %v2328 = vpop.f32.mrf.mxu0
    %v2329 = vadd.f32 0.0, %v2328
    %2330 = vmatmul.bf16.gmra.mxu0 %v2214
    %v2331 = vpop.f32.mrf.mxu0
    %v2332 = vadd.f32 0.0, %v2331
    %v2333 = vpop.f32.mrf.mxu0
    %v2334 = vadd.f32 0.0, %v2333
    %2335 = vmatmul.bf16.gmra.mxu0 %v2215
    %v2336 = vpop.f32.mrf.mxu0
    %v2337 = vadd.f32 0.0, %v2336
    %v2338 = vpop.f32.mrf.mxu0
    %v2339 = vadd.f32 0.0, %v2338
    %2340 = vmatmul.bf16.gmra.mxu0 %v2216
    %v2341 = vpop.f32.mrf.mxu0
    %v2342 = vadd.f32 0.0, %v2341
    %v2343 = vpop.f32.mrf.mxu0
    %v2344 = vadd.f32 0.0, %v2343
    %2345 = vmatmul.bf16.gmra.mxu0 %v2217
    %v2346 = vpop.f32.mrf.mxu0
    %v2347 = vadd.f32 0.0, %v2346
    %v2348 = vpop.f32.mrf.mxu0
    %v2349 = vadd.f32 0.0, %v2348
    %2350 = vmatmul.bf16.gmra.mxu0 %v2218
    %v2351 = vpop.f32.mrf.mxu0
    %v2352 = vadd.f32 0.0, %v2351
    %v2353 = vpop.f32.mrf.mxu0
    %v2354 = vadd.f32 0.0, %v2353
    %2355 = vmatmul.bf16.gmra.mxu0 %v2219
    %v2356 = vpop.f32.mrf.mxu0
    %v2357 = vadd.f32 0.0, %v2356
    %v2358 = vpop.f32.mrf.mxu0
    %v2359 = vadd.f32 0.0, %v2358
    %2360 = vmatmul.bf16.gmra.mxu0 %v2220
    %v2361 = vpop.f32.mrf.mxu0
    %v2362 = vadd.f32 0.0, %v2361
    %v2363 = vpop.f32.mrf.mxu0
    %v2364 = vadd.f32 0.0, %v2363
    %2365 = vmatmul.bf16.gmra.mxu0 %v2221
    %v2366 = vpop.f32.mrf.mxu0
    %v2367 = vadd.f32 0.0, %v2366
    %v2368 = vpop.f32.mrf.mxu0
    %v2369 = vadd.f32 0.0, %v2368
    %2370 = vmatmul.bf16.gmra.mxu0 %v2222
    %v2371 = vpop.f32.mrf.mxu0
    %v2372 = vadd.f32 0.0, %v2371
    %v2373 = vpop.f32.mrf.mxu0
    %v2374 = vadd.f32 0.0, %v2373
    %2375 = vmatmul.bf16.gmra.mxu0 %v2223
    %v2376 = vpop.f32.mrf.mxu0
    %v2377 = vadd.f32 0.0, %v2376
    %v2378 = vpop.f32.mrf.mxu0
    %v2379 = vadd.f32 0.0, %v2378
    %2380 = vmatmul.bf16.gmra.mxu0 %v2224
    %v2381 = vpop.f32.mrf.mxu0
    %v2382 = vadd.f32 0.0, %v2381
    %v2383 = vpop.f32.mrf.mxu0
    %v2384 = vadd.f32 0.0, %v2383
    %2385 = vmatmul.bf16.gmra.mxu0 %v2225
    %v2386 = vpop.f32.mrf.mxu0
    %v2387 = vadd.f32 0.0, %v2386
    %v2388 = vpop.f32.mrf.mxu0
    %v2389 = vadd.f32 0.0, %v2388
    %2390 = vmatmul.bf16.gmra.mxu0 %v2226
    %v2391 = vpop.f32.mrf.mxu0
    %v2392 = vadd.f32 0.0, %v2391
    %v2393 = vpop.f32.mrf.mxu0
    %v2394 = vadd.f32 0.0, %v2393
    %2395 = vmatmul.bf16.gmra.mxu0 %v2227
    %v2396 = vpop.f32.mrf.mxu0
    %v2397 = vadd.f32 0.0, %v2396
    %v2398 = vpop.f32.mrf.mxu0
    %v2399 = vadd.f32 0.0, %v2398
    %2400 = vmatmul.bf16.gmra.mxu0 %v2228
    %v2401 = vpop.f32.mrf.mxu0
    %v2402 = vadd.f32 0.0, %v2401
    %v2403 = vpop.f32.mrf.mxu0
    %v2404 = vadd.f32 0.0, %v2403
    %2405 = vmatmul.bf16.gmra.mxu0 %v2229
    %v2406 = vpop.f32.mrf.mxu0
    %v2407 = vadd.f32 0.0, %v2406
    %v2408 = vpop.f32.mrf.mxu0
    %v2409 = vadd.f32 0.0, %v2408
    %2410 = vmatmul.bf16.gmra.mxu0 %v2230
    %v2411 = vpop.f32.mrf.mxu0
    %v2412 = vadd.f32 0.0, %v2411
    %v2413 = vpop.f32.mrf.mxu0
    %v2414 = vadd.f32 0.0, %v2413
    %2415 = vmatmul.bf16.gmra.mxu0 %v2231
    %v2416 = vpop.f32.mrf.mxu0
    %v2417 = vadd.f32 0.0, %v2416
    %v2418 = vpop.f32.mrf.mxu0
    %v2419 = vadd.f32 0.0, %v2418
    %2420 = vmatmul.bf16.gmra.mxu0 %v2232
    %v2421 = vpop.f32.mrf.mxu0
    %v2422 = vadd.f32 0.0, %v2421
    %v2423 = vpop.f32.mrf.mxu0
    %v2424 = vadd.f32 0.0, %v2423
    %2425 = vmatmul.bf16.gmra.mxu0 %v2233
    %v2426 = vpop.f32.mrf.mxu0
    %v2427 = vadd.f32 0.0, %v2426
    %v2428 = vpop.f32.mrf.mxu0
    %v2429 = vadd.f32 0.0, %v2428
    %2430 = vmatmul.bf16.gmra.mxu0 %v2234
    %v2431 = vpop.f32.mrf.mxu0
    %v2432 = vadd.f32 0.0, %v2431
    %v2433 = vpop.f32.mrf.mxu0
    %v2434 = vadd.f32 0.0, %v2433
    %2435 = vmatmul.bf16.gmra.mxu0 %v2235
    %v2436 = vpop.f32.mrf.mxu0
    %v2437 = vadd.f32 0.0, %v2436
    %v2438 = vpop.f32.mrf.mxu0
    %v2439 = vadd.f32 0.0, %v2438
    %2440 = vmatmul.bf16.gmra.mxu0 %v2236
    %v2441 = vpop.f32.mrf.mxu0
    %v2442 = vadd.f32 0.0, %v2441
    %v2443 = vpop.f32.mrf.mxu0
    %v2444 = vadd.f32 0.0, %v2443
    %2445 = vmatmul.bf16.gmra.mxu0 %v2237
    %v2446 = vpop.f32.mrf.mxu0
    %v2447 = vadd.f32 0.0, %v2446
    %v2448 = vpop.f32.mrf.mxu0
    %v2449 = vadd.f32 0.0, %v2448
    %2450 = vmatmul.bf16.gmra.mxu0 %v2238
    %v2451 = vpop.f32.mrf.mxu0
    %v2452 = vadd.f32 0.0, %v2451
    %v2453 = vpop.f32.mrf.mxu0
    %v2454 = vadd.f32 0.0, %v2453
    %2455 = vmatmul.bf16.gmra.mxu0 %v2239
    %v2456 = vpop.f32.mrf.mxu0
    %v2457 = vadd.f32 0.0, %v2456
    %v2458 = vpop.f32.mrf.mxu0
    %v2459 = vadd.f32 0.0, %v2458
    %2460 = vmatmul.bf16.gmra.mxu0 %v2240
    %v2461 = vpop.f32.mrf.mxu0
    %v2462 = vadd.f32 0.0, %v2461
    %v2463 = vpop.f32.mrf.mxu0
    %v2464 = vadd.f32 0.0, %v2463
    %2465 = vdwg.mxu0
    %2466 = vst [vmem:[#allocation7] sm:$0xff] %v2327
    %2467 = vst [vmem:[#allocation7 + $0x8] sm:$0xff] %v2329
    %2468 = vst [vmem:[#allocation7 + $0x10] sm:$0xff] %v2332
    %2469 = vst [vmem:[#allocation7 + $0x18] sm:$0xff] %v2334
    %2470 = vst [vmem:[#allocation7 + $0x20] sm:$0xff] %v2337
    %2471 = vst [vmem:[#allocation7 + $0x28] sm:$0xff] %v2339
    %2472 = vst [vmem:[#allocation7 + $0x30] sm:$0xff] %v2342
    %2473 = vst [vmem:[#allocation7 + $0x38] sm:$0xff] %v2344
    %2474 = vst [vmem:[#allocation7 + $0x40] sm:$0xff] %v2347
    %2475 = vst [vmem:[#allocation7 + $0x48] sm:$0xff] %v2349
    %2476 = vst [vmem:[#allocation7 + $0x50] sm:$0xff] %v2352
    %2477 = vst [vmem:[#allocation7 + $0x58] sm:$0xff] %v2354
    %2478 = vst [vmem:[#allocation7 + $0x60] sm:$0xff] %v2357
    %2479 = vst [vmem:[#allocation7 + $0x68] sm:$0xff] %v2359
    %2480 = vst [vmem:[#allocation7 + $0x70] sm:$0xff] %v2362
    %2481 = vst [vmem:[#allocation7 + $0x78] sm:$0xff] %v2364
    %2482 = vst [vmem:[#allocation7 + $0x80] sm:$0xff] %v2367
    %2483 = vst [vmem:[#allocation7 + $0x88] sm:$0xff] %v2369
    %2484 = vst [vmem:[#allocation7 + $0x90] sm:$0xff] %v2372
    %2485 = vst [vmem:[#allocation7 + $0x98] sm:$0xff] %v2374
    %2486 = vst [vmem:[#allocation7 + $0xa0] sm:$0xff] %v2377
    %2487 = vst [vmem:[#allocation7 + $0xa8] sm:$0xff] %v2379
    %2488 = vst [vmem:[#allocation7 + $0xb0] sm:$0xff] %v2382
    %2489 = vst [vmem:[#allocation7 + $0xb8] sm:$0xff] %v2384
    %2490 = vst [vmem:[#allocation7 + $0xc0] sm:$0xff] %v2387
    %2491 = vst [vmem:[#allocation7 + $0xc8] sm:$0xff] %v2389
    %2492 = vst [vmem:[#allocation7 + $0xd0] sm:$0xff] %v2392
    %2493 = vst [vmem:[#allocation7 + $0xd8] sm:$0xff] %v2394
    %2494 = vst [vmem:[#allocation7 + $0xe0] sm:$0xff] %v2397
    %2495 = vst [vmem:[#allocation7 + $0xe8] sm:$0xff] %v2399
    %2496 = vst [vmem:[#allocation7 + $0xf0] sm:$0xff] %v2402
    %2497 = vst [vmem:[#allocation7 + $0xf8] sm:$0xff] %v2404
    %2498 = vst [vmem:[#allocation7 + $0x100] sm:$0xff] %v2407
    %2499 = vst [vmem:[#allocation7 + $0x108] sm:$0xff] %v2409
    %2500 = vst [vmem:[#allocation7 + $0x110] sm:$0xff] %v2412
    %2501 = vst [vmem:[#allocation7 + $0x118] sm:$0xff] %v2414
    %2502 = vst [vmem:[#allocation7 + $0x120] sm:$0xff] %v2417
    %2503 = vst [vmem:[#allocation7 + $0x128] sm:$0xff] %v2419
    %2504 = vst [vmem:[#allocation7 + $0x130] sm:$0xff] %v2422
    %2505 = vst [vmem:[#allocation7 + $0x138] sm:$0xff] %v2424
    %2506 = vst [vmem:[#allocation7 + $0x140] sm:$0xff] %v2427
    %2507 = vst [vmem:[#allocation7 + $0x148] sm:$0xff] %v2429
    %2508 = vst [vmem:[#allocation7 + $0x150] sm:$0xff] %v2432
    %2509 = vst [vmem:[#allocation7 + $0x158] sm:$0xff] %v2434
    %2510 = vst [vmem:[#allocation7 + $0x160] sm:$0xff] %v2437
    %2511 = vst [vmem:[#allocation7 + $0x168] sm:$0xff] %v2439
    %2512 = vst [vmem:[#allocation7 + $0x170] sm:$0xff] %v2442
    %2513 = vst [vmem:[#allocation7 + $0x178] sm:$0xff] %v2444
    %2514 = vst [vmem:[#allocation7 + $0x180] sm:$0xff] %v2447
    %2515 = vst [vmem:[#allocation7 + $0x188] sm:$0xff] %v2449
    %2516 = vst [vmem:[#allocation7 + $0x190] sm:$0xff] %v2452
    %2517 = vst [vmem:[#allocation7 + $0x198] sm:$0xff] %v2454
    %2518 = vst [vmem:[#allocation7 + $0x1a0] sm:$0xff] %v2457
    %2519 = vst [vmem:[#allocation7 + $0x1a8] sm:$0xff] %v2459
    %2520 = vst [vmem:[#allocation7 + $0x1b0] sm:$0xff] %v2462
    %2521 = vst [vmem:[#allocation7 + $0x1b8] sm:$0xff] %v2464
    %v2522 = vld [vmem:[#allocation6 + $0x140] sm:$0xff]
    %v2523 = vld [vmem:[#allocation6 + $0x148] sm:$0xff]
    %v2524 = vld [vmem:[#allocation6 + $0x150] sm:$0xff]
    %v2525 = vld [vmem:[#allocation6 + $0x158] sm:$0xff]
    %v2526 = vld [vmem:[#allocation6 + $0x160] sm:$0xff]
    %v2527 = vld [vmem:[#allocation6 + $0x168] sm:$0xff]
    %v2528 = vld [vmem:[#allocation6 + $0x170] sm:$0xff]
    %v2529 = vld [vmem:[#allocation6 + $0x178] sm:$0xff]
    %v2530 = vld [vmem:[#allocation7 + $0x180] sm:$0xff]
    %v2531 = vld [vmem:[#allocation7 + $0x188] sm:$0xff]
    %v2532 = vld [vmem:[#allocation7 + $0x190] sm:$0xff]
    %v2533 = vld [vmem:[#allocation7 + $0x198] sm:$0xff]
    %v2534 = vld [vmem:[#allocation7 + $0x1a0] sm:$0xff]
    %v2535 = vld [vmem:[#allocation7 + $0x1a8] sm:$0xff]
    %v2536 = vld [vmem:[#allocation7 + $0x1b0] sm:$0xff]
    %v2537 = vld [vmem:[#allocation7 + $0x1b8] sm:$0xff]
    %v2538 = vadd.f32 %v2522, %v2530
    %v2539 = vadd.f32 %v2523, %v2531
    %v2540 = vadd.f32 %v2524, %v2532
    %v2541 = vadd.f32 %v2525, %v2533
    %v2542 = vadd.f32 %v2526, %v2534
    %v2543 = vadd.f32 %v2527, %v2535
    %v2544 = vadd.f32 %v2528, %v2536
    %v2545 = vadd.f32 %v2529, %v2537
    %v2546 = vld [vmem:[#allocation7 + $0x140] sm:$0xff]
    %v2547 = vld [vmem:[#allocation7 + $0x148] sm:$0xff]
    %v2548 = vld [vmem:[#allocation7 + $0x150] sm:$0xff]
    %v2549 = vld [vmem:[#allocation7 + $0x158] sm:$0xff]
    %v2550 = vld [vmem:[#allocation7 + $0x160] sm:$0xff]
    %v2551 = vld [vmem:[#allocation7 + $0x168] sm:$0xff]
    %v2552 = vld [vmem:[#allocation7 + $0x170] sm:$0xff]
    %v2553 = vld [vmem:[#allocation7 + $0x178] sm:$0xff]
    %v2554 = vld [vmem:[#allocation6 + $0x180] sm:$0xff]
    %v2555 = vld [vmem:[#allocation6 + $0x188] sm:$0xff]
    %v2556 = vld [vmem:[#allocation6 + $0x190] sm:$0xff]
    %v2557 = vld [vmem:[#allocation6 + $0x198] sm:$0xff]
    %v2558 = vld [vmem:[#allocation6 + $0x1a0] sm:$0xff]
    %v2559 = vld [vmem:[#allocation6 + $0x1a8] sm:$0xff]
    %v2560 = vld [vmem:[#allocation6 + $0x1b0] sm:$0xff]
    %v2561 = vld [vmem:[#allocation6 + $0x1b8] sm:$0xff]
    %v2562 = vsub.f32 %v2546, %v2554
    %v2563 = vsub.f32 %v2547, %v2555
    %v2564 = vsub.f32 %v2548, %v2556
    %v2565 = vsub.f32 %v2549, %v2557
    %v2566 = vsub.f32 %v2550, %v2558
    %v2567 = vsub.f32 %v2551, %v2559
    %v2568 = vsub.f32 %v2552, %v2560
    %v2569 = vsub.f32 %v2553, %v2561
    %v2570 = vmul.f32 %v2562, -0.5
    %v2571 = vmul.f32 %v2563, -0.5
    %v2572 = vmul.f32 %v2564, -0.5
    %v2573 = vmul.f32 %v2565, -0.5
    %v2574 = vmul.f32 %v2566, -0.5
    %v2575 = vmul.f32 %v2567, -0.5
    %v2576 = vmul.f32 %v2568, -0.5
    %v2577 = vmul.f32 %v2569, -0.5
    %v2578 = vld [vmem:[#allocation10 + $0x10] sm:$0xf]
    %v2579 = vld [vmem:[#allocation10 + $0x24] sm:$0xf]
    %v2580 = vld [vmem:[#allocation10 + $0x38] sm:$0xf]
    %v2581 = vld [vmem:[#allocation10 + $0x4c] sm:$0xf]
    %v2582 = vld [vmem:[#allocation10 + $0x60] sm:$0xf]
    %v2583 = vld [vmem:[#allocation10 + $0x74] sm:$0xf]
    %v2584 = vld [vmem:[#allocation10 + $0x88] sm:$0xf]
    %v2585 = vld [vmem:[#allocation10 + $0x9c] sm:$0xf]
    %v2586 = vunpack.c.l.bf16 %v2578
    %v2587 = vunpack.c.l.bf16 %v2579
    %v2588 = vunpack.c.l.bf16 %v2580
    %v2589 = vunpack.c.l.bf16 %v2581
    %v2590 = vunpack.c.l.bf16 %v2582
    %v2591 = vunpack.c.l.bf16 %v2583
    %v2592 = vunpack.c.l.bf16 %v2584
    %v2593 = vunpack.c.l.bf16 %v2585
    %v2594 = vld [vmem:[#allocation10] sm:$0xf]
    %v2595 = vld [vmem:[#allocation10 + $0x14] sm:$0xf]
    %v2596 = vld [vmem:[#allocation10 + $0x28] sm:$0xf]
    %v2597 = vld [vmem:[#allocation10 + $0x3c] sm:$0xf]
    %v2598 = vld [vmem:[#allocation10 + $0x50] sm:$0xf]
    %v2599 = vld [vmem:[#allocation10 + $0x64] sm:$0xf]
    %v2600 = vld [vmem:[#allocation10 + $0x78] sm:$0xf]
    %v2601 = vld [vmem:[#allocation10 + $0x8c] sm:$0xf]
    %v2602 = vunpack.c.l.bf16 %v2594
    %v2603 = vunpack.c.l.bf16 %v2595
    %v2604 = vunpack.c.l.bf16 %v2596
    %v2605 = vunpack.c.l.bf16 %v2597
    %v2606 = vunpack.c.l.bf16 %v2598
    %v2607 = vunpack.c.l.bf16 %v2599
    %v2608 = vunpack.c.l.bf16 %v2600
    %v2609 = vunpack.c.l.bf16 %v2601
    %v2610 = vld [vmem:[#allocation10 + $0xc] sm:$0xf]
    %v2611 = vld [vmem:[#allocation10 + $0x20] sm:$0xf]
    %v2612 = vld [vmem:[#allocation10 + $0x34] sm:$0xf]
    %v2613 = vld [vmem:[#allocation10 + $0x48] sm:$0xf]
    %v2614 = vld [vmem:[#allocation10 + $0x5c] sm:$0xf]
    %v2615 = vld [vmem:[#allocation10 + $0x70] sm:$0xf]
    %v2616 = vld [vmem:[#allocation10 + $0x84] sm:$0xf]
    %v2617 = vld [vmem:[#allocation10 + $0x98] sm:$0xf]
    %v2618 = vunpack.c.l.bf16 %v2610
    %v2619 = vunpack.c.l.bf16 %v2611
    %v2620 = vunpack.c.l.bf16 %v2612
    %v2621 = vunpack.c.l.bf16 %v2613
    %v2622 = vunpack.c.l.bf16 %v2614
    %v2623 = vunpack.c.l.bf16 %v2615
    %v2624 = vunpack.c.l.bf16 %v2616
    %v2625 = vunpack.c.l.bf16 %v2617
    %v2626 = vadd.f32 %v2602, %v2618
    %v2627 = vadd.f32 %v2603, %v2619
    %v2628 = vadd.f32 %v2604, %v2620
    %v2629 = vadd.f32 %v2605, %v2621
    %v2630 = vadd.f32 %v2606, %v2622
    %v2631 = vadd.f32 %v2607, %v2623
    %v2632 = vadd.f32 %v2608, %v2624
    %v2633 = vadd.f32 %v2609, %v2625
    %v2634 = vmul.f32 %v2586, 0.061
    %v2635 = vmul.f32 %v2587, 0.061
    %v2636 = vmul.f32 %v2588, 0.061
    %v2637 = vmul.f32 %v2589, 0.061
    %v2638 = vmul.f32 %v2590, 0.061
    %v2639 = vmul.f32 %v2591, 0.061
    %v2640 = vmul.f32 %v2592, 0.061
    %v2641 = vmul.f32 %v2593, 0.061
    %v2642 = vsub.f32 0.066, %v2634
    %v2643 = vsub.f32 0.066, %v2635
    %v2644 = vsub.f32 0.066, %v2636
    %v2645 = vsub.f32 0.066, %v2637
    %v2646 = vsub.f32 0.066, %v2638
    %v2647 = vsub.f32 0.066, %v2639
    %v2648 = vsub.f32 0.066, %v2640
    %v2649 = vsub.f32 0.066, %v2641
    %v2650 = vsub.f32 0.0, %v2642
    %v2651 = vsub.f32 0.0, %v2643
    %v2652 = vsub.f32 0.0, %v2644
    %v2653 = vsub.f32 0.0, %v2645
    %v2654 = vsub.f32 0.0, %v2646
    %v2655 = vsub.f32 0.0, %v2647
    %v2656 = vsub.f32 0.0, %v2648
    %v2657 = vsub.f32 0.0, %v2649
    %v2658 = vmul.f32 %v2586, 0.318
    %v2659 = vmul.f32 %v2587, 0.318
    %v2660 = vmul.f32 %v2588, 0.318
    %v2661 = vmul.f32 %v2589, 0.318
    %v2662 = vmul.f32 %v2590, 0.318
    %v2663 = vmul.f32 %v2591, 0.318
    %v2664 = vmul.f32 %v2592, 0.318
    %v2665 = vmul.f32 %v2593, 0.318
    %v2666 = vadd.f32 %v2658, 0.489
    %v2667 = vadd.f32 %v2659, 0.489
    %v2668 = vadd.f32 %v2660, 0.489
    %v2669 = vadd.f32 %v2661, 0.489
    %v2670 = vadd.f32 %v2662, 0.489
    %v2671 = vadd.f32 %v2663, 0.489
    %v2672 = vadd.f32 %v2664, 0.489
    %v2673 = vadd.f32 %v2665, 0.489
    %v2674 = vmul.f32 %v2666, %v2538
    %v2675 = vmul.f32 %v2667, %v2539
    %v2676 = vmul.f32 %v2668, %v2540
    %v2677 = vmul.f32 %v2669, %v2541
    %v2678 = vmul.f32 %v2670, %v2542
    %v2679 = vmul.f32 %v2671, %v2543
    %v2680 = vmul.f32 %v2672, %v2544
    %v2681 = vmul.f32 %v2673, %v2545
    %v2682 = vadd.f32 %v2650, %v2674
    %v2683 = vadd.f32 %v2651, %v2675
    %v2684 = vadd.f32 %v2652, %v2676
    %v2685 = vadd.f32 %v2653, %v2677
    %v2686 = vadd.f32 %v2654, %v2678
    %v2687 = vadd.f32 %v2655, %v2679
    %v2688 = vadd.f32 %v2656, %v2680
    %v2689 = vadd.f32 %v2657, %v2681
    %v2690 = vmul.f32 %v2586, 0.393
    %v2691 = vmul.f32 %v2587, 0.393
    %v2692 = vmul.f32 %v2588, 0.393
    %v2693 = vmul.f32 %v2589, 0.393
    %v2694 = vmul.f32 %v2590, 0.393
    %v2695 = vmul.f32 %v2591, 0.393
    %v2696 = vmul.f32 %v2592, 0.393
    %v2697 = vmul.f32 %v2593, 0.393
    %v2698 = vsub.f32 0.564, %v2690
    %v2699 = vsub.f32 0.564, %v2691
    %v2700 = vsub.f32 0.564, %v2692
    %v2701 = vsub.f32 0.564, %v2693
    %v2702 = vsub.f32 0.564, %v2694
    %v2703 = vsub.f32 0.564, %v2695
    %v2704 = vsub.f32 0.564, %v2696
    %v2705 = vsub.f32 0.564, %v2697
    %v2706 = vmul.f32 %v2698, %v2626
    %v2707 = vmul.f32 %v2699, %v2627
    %v2708 = vmul.f32 %v2700, %v2628
    %v2709 = vmul.f32 %v2701, %v2629
    %v2710 = vmul.f32 %v2702, %v2630
    %v2711 = vmul.f32 %v2703, %v2631
    %v2712 = vmul.f32 %v2704, %v2632
    %v2713 = vmul.f32 %v2705, %v2633
    %v2714 = vadd.f32 %v2682, %v2706
    %v2715 = vadd.f32 %v2683, %v2707
    %v2716 = vadd.f32 %v2684, %v2708
    %v2717 = vadd.f32 %v2685, %v2709
    %v2718 = vadd.f32 %v2686, %v2710
    %v2719 = vadd.f32 %v2687, %v2711
    %v2720 = vadd.f32 %v2688, %v2712
    %v2721 = vadd.f32 %v2689, %v2713
    %v2722 = vmul.f32 %v2586, 0.037
    %v2723 = vmul.f32 %v2587, 0.037
    %v2724 = vmul.f32 %v2588, 0.037
    %v2725 = vmul.f32 %v2589, 0.037
    %v2726 = vmul.f32 %v2590, 0.037
    %v2727 = vmul.f32 %v2591, 0.037
    %v2728 = vmul.f32 %v2592, 0.037
    %v2729 = vmul.f32 %v2593, 0.037
    %v2730 = vsub.f32 0.047, %v2722
    %v2731 = vsub.f32 0.047, %v2723
    %v2732 = vsub.f32 0.047, %v2724
    %v2733 = vsub.f32 0.047, %v2725
    %v2734 = vsub.f32 0.047, %v2726
    %v2735 = vsub.f32 0.047, %v2727
    %v2736 = vsub.f32 0.047, %v2728
    %v2737 = vsub.f32 0.047, %v2729
    %v2738 = vmul.f32 %v2730, %v2626
    %v2739 = vmul.f32 %v2731, %v2627
    %v2740 = vmul.f32 %v2732, %v2628
    %v2741 = vmul.f32 %v2733, %v2629
    %v2742 = vmul.f32 %v2734, %v2630
    %v2743 = vmul.f32 %v2735, %v2631
    %v2744 = vmul.f32 %v2736, %v2632
    %v2745 = vmul.f32 %v2737, %v2633
    %v2746 = vld [vmem:[#allocation2] sm:$0xf]
    %v2747 = vld [vmem:[#allocation2 + $0x8] sm:$0xf]
    %v2748 = vld [vmem:[#allocation2 + $0x10] sm:$0xf]
    %v2749 = vld [vmem:[#allocation2 + $0x18] sm:$0xf]
    %v2750 = vld [vmem:[#allocation2 + $0x20] sm:$0xf]
    %v2751 = vld [vmem:[#allocation2 + $0x28] sm:$0xf]
    %v2752 = vld [vmem:[#allocation2 + $0x30] sm:$0xf]
    %v2753 = vld [vmem:[#allocation2 + $0x38] sm:$0xf]
    %v2754 = vunpack.c.l.bf16 %v2746
    %v2755 = vunpack.c.l.bf16 %v2747
    %v2756 = vunpack.c.l.bf16 %v2748
    %v2757 = vunpack.c.l.bf16 %v2749
    %v2758 = vunpack.c.l.bf16 %v2750
    %v2759 = vunpack.c.l.bf16 %v2751
    %v2760 = vunpack.c.l.bf16 %v2752
    %v2761 = vunpack.c.l.bf16 %v2753
    %v2762 = vld [vmem:[#allocation2 + $0x4] sm:$0xf]
    %v2763 = vld [vmem:[#allocation2 + $0xc] sm:$0xf]
    %v2764 = vld [vmem:[#allocation2 + $0x14] sm:$0xf]
    %v2765 = vld [vmem:[#allocation2 + $0x1c] sm:$0xf]
    %v2766 = vld [vmem:[#allocation2 + $0x24] sm:$0xf]
    %v2767 = vld [vmem:[#allocation2 + $0x2c] sm:$0xf]
    %v2768 = vld [vmem:[#allocation2 + $0x34] sm:$0xf]
    %v2769 = vld [vmem:[#allocation2 + $0x3c] sm:$0xf]
    %v2770 = vunpack.c.l.bf16 %v2762
    %v2771 = vunpack.c.l.bf16 %v2763
    %v2772 = vunpack.c.l.bf16 %v2764
    %v2773 = vunpack.c.l.bf16 %v2765
    %v2774 = vunpack.c.l.bf16 %v2766
    %v2775 = vunpack.c.l.bf16 %v2767
    %v2776 = vunpack.c.l.bf16 %v2768
    %v2777 = vunpack.c.l.bf16 %v2769
    %v2778 = vld [vmem:[#allocation10 + $0x4] sm:$0xf]
    %v2779 = vld [vmem:[#allocation10 + $0x18] sm:$0xf]
    %v2780 = vld [vmem:[#allocation10 + $0x2c] sm:$0xf]
    %v2781 = vld [vmem:[#allocation10 + $0x40] sm:$0xf]
    %v2782 = vld [vmem:[#allocation10 + $0x54] sm:$0xf]
    %v2783 = vld [vmem:[#allocation10 + $0x68] sm:$0xf]
    %v2784 = vld [vmem:[#allocation10 + $0x7c] sm:$0xf]
    %v2785 = vld [vmem:[#allocation10 + $0x90] sm:$0xf]
    %v2786 = vunpack.c.l.bf16 %v2778
    %v2787 = vunpack.c.l.bf16 %v2779
    %v2788 = vunpack.c.l.bf16 %v2780
    %v2789 = vunpack.c.l.bf16 %v2781
    %v2790 = vunpack.c.l.bf16 %v2782
    %v2791 = vunpack.c.l.bf16 %v2783
    %v2792 = vunpack.c.l.bf16 %v2784
    %v2793 = vunpack.c.l.bf16 %v2785
    %v2794 = vld [vmem:[#allocation10 + $0x8] sm:$0xf]
    %v2795 = vld [vmem:[#allocation10 + $0x1c] sm:$0xf]
    %v2796 = vld [vmem:[#allocation10 + $0x30] sm:$0xf]
    %v2797 = vld [vmem:[#allocation10 + $0x44] sm:$0xf]
    %v2798 = vld [vmem:[#allocation10 + $0x58] sm:$0xf]
    %v2799 = vld [vmem:[#allocation10 + $0x6c] sm:$0xf]
    %v2800 = vld [vmem:[#allocation10 + $0x80] sm:$0xf]
    %v2801 = vld [vmem:[#allocation10 + $0x94] sm:$0xf]
    %v2802 = vunpack.c.l.bf16 %v2794
    %v2803 = vunpack.c.l.bf16 %v2795
    %v2804 = vunpack.c.l.bf16 %v2796
    %v2805 = vunpack.c.l.bf16 %v2797
    %v2806 = vunpack.c.l.bf16 %v2798
    %v2807 = vunpack.c.l.bf16 %v2799
    %v2808 = vunpack.c.l.bf16 %v2800
    %v2809 = vunpack.c.l.bf16 %v2801
    %v2810 = vadd.f32 %v2786, %v2802
    %v2811 = vadd.f32 %v2787, %v2803
    %v2812 = vadd.f32 %v2788, %v2804
    %v2813 = vadd.f32 %v2789, %v2805
    %v2814 = vadd.f32 %v2790, %v2806
    %v2815 = vadd.f32 %v2791, %v2807
    %v2816 = vadd.f32 %v2792, %v2808
    %v2817 = vadd.f32 %v2793, %v2809
    %v2818 = vmul.f32 %v2570, %v2810
    %v2819 = vmul.f32 %v2571, %v2811
    %v2820 = vmul.f32 %v2572, %v2812
    %v2821 = vmul.f32 %v2573, %v2813
    %v2822 = vmul.f32 %v2574, %v2814
    %v2823 = vmul.f32 %v2575, %v2815
    %v2824 = vmul.f32 %v2576, %v2816
    %v2825 = vmul.f32 %v2577, %v2817
    %v2826 = vld [vmem:[#allocation6] sm:$0xff]
    %v2827 = vld [vmem:[#allocation6 + $0x8] sm:$0xff]
    %v2828 = vld [vmem:[#allocation6 + $0x10] sm:$0xff]
    %v2829 = vld [vmem:[#allocation6 + $0x18] sm:$0xff]
    %v2830 = vld [vmem:[#allocation6 + $0x20] sm:$0xff]
    %v2831 = vld [vmem:[#allocation6 + $0x28] sm:$0xff]
    %v2832 = vld [vmem:[#allocation6 + $0x30] sm:$0xff]
    %v2833 = vld [vmem:[#allocation6 + $0x38] sm:$0xff]
    %v2834 = vmul.f32 %v2754, %v2826
    %v2835 = vmul.f32 %v2755, %v2827
    %v2836 = vmul.f32 %v2756, %v2828
    %v2837 = vmul.f32 %v2757, %v2829
    %v2838 = vmul.f32 %v2758, %v2830
    %v2839 = vmul.f32 %v2759, %v2831
    %v2840 = vmul.f32 %v2760, %v2832
    %v2841 = vmul.f32 %v2761, %v2833
    %v2842 = vld [vmem:[#allocation7] sm:$0xff]
    %v2843 = vld [vmem:[#allocation7 + $0x8] sm:$0xff]
    %v2844 = vld [vmem:[#allocation7 + $0x10] sm:$0xff]
    %v2845 = vld [vmem:[#allocation7 + $0x18] sm:$0xff]
    %v2846 = vld [vmem:[#allocation7 + $0x20] sm:$0xff]
    %v2847 = vld [vmem:[#allocation7 + $0x28] sm:$0xff]
    %v2848 = vld [vmem:[#allocation7 + $0x30] sm:$0xff]
    %v2849 = vld [vmem:[#allocation7 + $0x38] sm:$0xff]
    %v2850 = vmul.f32 %v2770, %v2842
    %v2851 = vmul.f32 %v2771, %v2843
    %v2852 = vmul.f32 %v2772, %v2844
    %v2853 = vmul.f32 %v2773, %v2845
    %v2854 = vmul.f32 %v2774, %v2846
    %v2855 = vmul.f32 %v2775, %v2847
    %v2856 = vmul.f32 %v2776, %v2848
    %v2857 = vmul.f32 %v2777, %v2849
    %v2858 = vadd.f32 %v2834, %v2850
    %v2859 = vadd.f32 %v2835, %v2851
    %v2860 = vadd.f32 %v2836, %v2852
    %v2861 = vadd.f32 %v2837, %v2853
    %v2862 = vadd.f32 %v2838, %v2854
    %v2863 = vadd.f32 %v2839, %v2855
    %v2864 = vadd.f32 %v2840, %v2856
    %v2865 = vadd.f32 %v2841, %v2857
    %v2866 = vadd.f32 %v2858, %v2818
    %v2867 = vadd.f32 %v2859, %v2819
    %v2868 = vadd.f32 %v2860, %v2820
    %v2869 = vadd.f32 %v2861, %v2821
    %v2870 = vadd.f32 %v2862, %v2822
    %v2871 = vadd.f32 %v2863, %v2823
    %v2872 = vadd.f32 %v2864, %v2824
    %v2873 = vadd.f32 %v2865, %v2825
    %v2874 = vsub.f32 0.0, %v2866
    %v2875 = vsub.f32 0.0, %v2867
    %v2876 = vsub.f32 0.0, %v2868
    %v2877 = vsub.f32 0.0, %v2869
    %v2878 = vsub.f32 0.0, %v2870
    %v2879 = vsub.f32 0.0, %v2871
    %v2880 = vsub.f32 0.0, %v2872
    %v2881 = vsub.f32 0.0, %v2873
    %v2882 = vmul.f32 %v2714, %v2602
    %v2883 = vmul.f32 %v2715, %v2603
    %v2884 = vmul.f32 %v2716, %v2604
    %v2885 = vmul.f32 %v2717, %v2605
    %v2886 = vmul.f32 %v2718, %v2606
    %v2887 = vmul.f32 %v2719, %v2607
    %v2888 = vmul.f32 %v2720, %v2608
    %v2889 = vmul.f32 %v2721, %v2609
    %v2890 = vadd.f32 %v2874, %v2882
    %v2891 = vadd.f32 %v2875, %v2883
    %v2892 = vadd.f32 %v2876, %v2884
    %v2893 = vadd.f32 %v2877, %v2885
    %v2894 = vadd.f32 %v2878, %v2886
    %v2895 = vadd.f32 %v2879, %v2887
    %v2896 = vadd.f32 %v2880, %v2888
    %v2897 = vadd.f32 %v2881, %v2889
    %v2898 = vadd.f32 %v2890, %v2738
    %v2899 = vadd.f32 %v2891, %v2739
    %v2900 = vadd.f32 %v2892, %v2740
    %v2901 = vadd.f32 %v2893, %v2741
    %v2902 = vadd.f32 %v2894, %v2742
    %v2903 = vadd.f32 %v2895, %v2743
    %v2904 = vadd.f32 %v2896, %v2744
    %v2905 = vadd.f32 %v2897, %v2745
    %v2906 = vpack.c.bf16 %v2898, %v2898
    %v2907 = vpack.c.bf16 %v2899, %v2899
    %v2908 = vpack.c.bf16 %v2900, %v2900
    %v2909 = vpack.c.bf16 %v2901, %v2901
    %v2910 = vpack.c.bf16 %v2902, %v2902
    %v2911 = vpack.c.bf16 %v2903, %v2903
    %v2912 = vpack.c.bf16 %v2904, %v2904
    %v2913 = vpack.c.bf16 %v2905, %v2905
    %2914 = vst [vmem:[#allocation8] sm:$0xf] %v2906
    %2915 = vst [vmem:[#allocation8 + $0x14] sm:$0xf] %v2907
    %2916 = vst [vmem:[#allocation8 + $0x28] sm:$0xf] %v2908
    %2917 = vst [vmem:[#allocation8 + $0x3c] sm:$0xf] %v2909
    %2918 = vst [vmem:[#allocation8 + $0x50] sm:$0xf] %v2910
    %2919 = vst [vmem:[#allocation8 + $0x64] sm:$0xf] %v2911
    %2920 = vst [vmem:[#allocation8 + $0x78] sm:$0xf] %v2912
    %2921 = vst [vmem:[#allocation8 + $0x8c] sm:$0xf] %v2913
    %v2922 = vld [vmem:[#allocation10 + $0xc] sm:$0xf]
    %v2923 = vld [vmem:[#allocation10 + $0x20] sm:$0xf]
    %v2924 = vld [vmem:[#allocation10 + $0x34] sm:$0xf]
    %v2925 = vld [vmem:[#allocation10 + $0x48] sm:$0xf]
    %v2926 = vld [vmem:[#allocation10 + $0x5c] sm:$0xf]
    %v2927 = vld [vmem:[#allocation10 + $0x70] sm:$0xf]
    %v2928 = vld [vmem:[#allocation10 + $0x84] sm:$0xf]
    %v2929 = vld [vmem:[#allocation10 + $0x98] sm:$0xf]
    %v2930 = vunpack.c.l.bf16 %v2922
    %v2931 = vunpack.c.l.bf16 %v2923
    %v2932 = vunpack.c.l.bf16 %v2924
    %v2933 = vunpack.c.l.bf16 %v2925
    %v2934 = vunpack.c.l.bf16 %v2926
    %v2935 = vunpack.c.l.bf16 %v2927
    %v2936 = vunpack.c.l.bf16 %v2928
    %v2937 = vunpack.c.l.bf16 %v2929
    %v2938 = vld [vmem:[#allocation10] sm:$0xf]
    %v2939 = vld [vmem:[#allocation10 + $0x14] sm:$0xf]
    %v2940 = vld [vmem:[#allocation10 + $0x28] sm:$0xf]
    %v2941 = vld [vmem:[#allocation10 + $0x3c] sm:$0xf]
    %v2942 = vld [vmem:[#allocation10 + $0x50] sm:$0xf]
    %v2943 = vld [vmem:[#allocation10 + $0x64] sm:$0xf]
    %v2944 = vld [vmem:[#allocation10 + $0x78] sm:$0xf]
    %v2945 = vld [vmem:[#allocation10 + $0x8c] sm:$0xf]
    %v2946 = vunpack.c.l.bf16 %v2938
    %v2947 = vunpack.c.l.bf16 %v2939
    %v2948 = vunpack.c.l.bf16 %v2940
    %v2949 = vunpack.c.l.bf16 %v2941
    %v2950 = vunpack.c.l.bf16 %v2942
    %v2951 = vunpack.c.l.bf16 %v2943
    %v2952 = vunpack.c.l.bf16 %v2944
    %v2953 = vunpack.c.l.bf16 %v2945
    %v2954 = vsub.f32 %v2930, %v2946
    %v2955 = vsub.f32 %v2931, %v2947
    %v2956 = vsub.f32 %v2932, %v2948
    %v2957 = vsub.f32 %v2933, %v2949
    %v2958 = vsub.f32 %v2934, %v2950
    %v2959 = vsub.f32 %v2935, %v2951
    %v2960 = vsub.f32 %v2936, %v2952
    %v2961 = vsub.f32 %v2937, %v2953
    %v2962 = vmul.f32 %v2570, %v2954
    %v2963 = vmul.f32 %v2571, %v2955
    %v2964 = vmul.f32 %v2572, %v2956
    %v2965 = vmul.f32 %v2573, %v2957
    %v2966 = vmul.f32 %v2574, %v2958
    %v2967 = vmul.f32 %v2575, %v2959
    %v2968 = vmul.f32 %v2576, %v2960
    %v2969 = vmul.f32 %v2577, %v2961
    %v2970 = vld [vmem:[#allocation6 + $0x40] sm:$0xff]
    %v2971 = vld [vmem:[#allocation6 + $0x48] sm:$0xff]
    %v2972 = vld [vmem:[#allocation6 + $0x50] sm:$0xff]
    %v2973 = vld [vmem:[#allocation6 + $0x58] sm:$0xff]
    %v2974 = vld [vmem:[#allocation6 + $0x60] sm:$0xff]
    %v2975 = vld [vmem:[#allocation6 + $0x68] sm:$0xff]
    %v2976 = vld [vmem:[#allocation6 + $0x70] sm:$0xff]
    %v2977 = vld [vmem:[#allocation6 + $0x78] sm:$0xff]
    %v2978 = vmul.f32 %v2754, %v2970
    %v2979 = vmul.f32 %v2755, %v2971
    %v2980 = vmul.f32 %v2756, %v2972
    %v2981 = vmul.f32 %v2757, %v2973
    %v2982 = vmul.f32 %v2758, %v2974
    %v2983 = vmul.f32 %v2759, %v2975
    %v2984 = vmul.f32 %v2760, %v2976
    %v2985 = vmul.f32 %v2761, %v2977
    %v2986 = vld [vmem:[#allocation7 + $0x40] sm:$0xff]
    %v2987 = vld [vmem:[#allocation7 + $0x48] sm:$0xff]
    %v2988 = vld [vmem:[#allocation7 + $0x50] sm:$0xff]
    %v2989 = vld [vmem:[#allocation7 + $0x58] sm:$0xff]
    %v2990 = vld [vmem:[#allocation7 + $0x60] sm:$0xff]
    %v2991 = vld [vmem:[#allocation7 + $0x68] sm:$0xff]
    %v2992 = vld [vmem:[#allocation7 + $0x70] sm:$0xff]
    %v2993 = vld [vmem:[#allocation7 + $0x78] sm:$0xff]
    %v2994 = vmul.f32 %v2770, %v2986
    %v2995 = vmul.f32 %v2771, %v2987
    %v2996 = vmul.f32 %v2772, %v2988
    %v2997 = vmul.f32 %v2773, %v2989
    %v2998 = vmul.f32 %v2774, %v2990
    %v2999 = vmul.f32 %v2775, %v2991
    %v3000 = vmul.f32 %v2776, %v2992
    %v3001 = vmul.f32 %v2777, %v2993
    %v3002 = vadd.f32 %v2978, %v2994
    %v3003 = vadd.f32 %v2979, %v2995
    %v3004 = vadd.f32 %v2980, %v2996
    %v3005 = vadd.f32 %v2981, %v2997
    %v3006 = vadd.f32 %v2982, %v2998
    %v3007 = vadd.f32 %v2983, %v2999
    %v3008 = vadd.f32 %v2984, %v3000
    %v3009 = vadd.f32 %v2985, %v3001
    %v3010 = vadd.f32 %v3002, %v2962
    %v3011 = vadd.f32 %v3003, %v2963
    %v3012 = vadd.f32 %v3004, %v2964
    %v3013 = vadd.f32 %v3005, %v2965
    %v3014 = vadd.f32 %v3006, %v2966
    %v3015 = vadd.f32 %v3007, %v2967
    %v3016 = vadd.f32 %v3008, %v2968
    %v3017 = vadd.f32 %v3009, %v2969
    %v3018 = vsub.f32 0.0, %v3010
    %v3019 = vsub.f32 0.0, %v3011
    %v3020 = vsub.f32 0.0, %v3012
    %v3021 = vsub.f32 0.0, %v3013
    %v3022 = vsub.f32 0.0, %v3014
    %v3023 = vsub.f32 0.0, %v3015
    %v3024 = vsub.f32 0.0, %v3016
    %v3025 = vsub.f32 0.0, %v3017
    %v3026 = vld [vmem:[#allocation10 + $0x4] sm:$0xf]
    %v3027 = vld [vmem:[#allocation10 + $0x18] sm:$0xf]
    %v3028 = vld [vmem:[#allocation10 + $0x2c] sm:$0xf]
    %v3029 = vld [vmem:[#allocation10 + $0x40] sm:$0xf]
    %v3030 = vld [vmem:[#allocation10 + $0x54] sm:$0xf]
    %v3031 = vld [vmem:[#allocation10 + $0x68] sm:$0xf]
    %v3032 = vld [vmem:[#allocation10 + $0x7c] sm:$0xf]
    %v3033 = vld [vmem:[#allocation10 + $0x90] sm:$0xf]
    %v3034 = vunpack.c.l.bf16 %v3026
    %v3035 = vunpack.c.l.bf16 %v3027
    %v3036 = vunpack.c.l.bf16 %v3028
    %v3037 = vunpack.c.l.bf16 %v3029
    %v3038 = vunpack.c.l.bf16 %v3030
    %v3039 = vunpack.c.l.bf16 %v3031
    %v3040 = vunpack.c.l.bf16 %v3032
    %v3041 = vunpack.c.l.bf16 %v3033
    %v3042 = vmul.f32 %v2714, %v3034
    %v3043 = vmul.f32 %v2715, %v3035
    %v3044 = vmul.f32 %v2716, %v3036
    %v3045 = vmul.f32 %v2717, %v3037
    %v3046 = vmul.f32 %v2718, %v3038
    %v3047 = vmul.f32 %v2719, %v3039
    %v3048 = vmul.f32 %v2720, %v3040
    %v3049 = vmul.f32 %v2721, %v3041
    %v3050 = vadd.f32 %v3018, %v3042
    %v3051 = vadd.f32 %v3019, %v3043
    %v3052 = vadd.f32 %v3020, %v3044
    %v3053 = vadd.f32 %v3021, %v3045
    %v3054 = vadd.f32 %v3022, %v3046
    %v3055 = vadd.f32 %v3023, %v3047
    %v3056 = vadd.f32 %v3024, %v3048
    %v3057 = vadd.f32 %v3025, %v3049
    %v3058 = vpack.c.bf16 %v3050, %v3050
    %v3059 = vpack.c.bf16 %v3051, %v3051
    %v3060 = vpack.c.bf16 %v3052, %v3052
    %v3061 = vpack.c.bf16 %v3053, %v3053
    %v3062 = vpack.c.bf16 %v3054, %v3054
    %v3063 = vpack.c.bf16 %v3055, %v3055
    %v3064 = vpack.c.bf16 %v3056, %v3056
    %v3065 = vpack.c.bf16 %v3057, %v3057
    %3066 = vst [vmem:[#allocation8 + $0x4] sm:$0xf] %v3058
    %3067 = vst [vmem:[#allocation8 + $0x18] sm:$0xf] %v3059
    %3068 = vst [vmem:[#allocation8 + $0x2c] sm:$0xf] %v3060
    %3069 = vst [vmem:[#allocation8 + $0x40] sm:$0xf] %v3061
    %3070 = vst [vmem:[#allocation8 + $0x54] sm:$0xf] %v3062
    %3071 = vst [vmem:[#allocation8 + $0x68] sm:$0xf] %v3063
    %3072 = vst [vmem:[#allocation8 + $0x7c] sm:$0xf] %v3064
    %3073 = vst [vmem:[#allocation8 + $0x90] sm:$0xf] %v3065
    %v3074 = vld [vmem:[#allocation6 + $0x80] sm:$0xff]
    %v3075 = vld [vmem:[#allocation6 + $0x88] sm:$0xff]
    %v3076 = vld [vmem:[#allocation6 + $0x90] sm:$0xff]
    %v3077 = vld [vmem:[#allocation6 + $0x98] sm:$0xff]
    %v3078 = vld [vmem:[#allocation6 + $0xa0] sm:$0xff]
    %v3079 = vld [vmem:[#allocation6 + $0xa8] sm:$0xff]
    %v3080 = vld [vmem:[#allocation6 + $0xb0] sm:$0xff]
    %v3081 = vld [vmem:[#allocation6 + $0xb8] sm:$0xff]
    %v3082 = vmul.f32 %v2754, %v3074
    %v3083 = vmul.f32 %v2755, %v3075
    %v3084 = vmul.f32 %v2756, %v3076
    %v3085 = vmul.f32 %v2757, %v3077
    %v3086 = vmul.f32 %v2758, %v3078
    %v3087 = vmul.f32 %v2759, %v3079
    %v3088 = vmul.f32 %v2760, %v3080
    %v3089 = vmul.f32 %v2761, %v3081
    %v3090 = vld [vmem:[#allocation7 + $0x80] sm:$0xff]
    %v3091 = vld [vmem:[#allocation7 + $0x88] sm:$0xff]
    %v3092 = vld [vmem:[#allocation7 + $0x90] sm:$0xff]
    %v3093 = vld [vmem:[#allocation7 + $0x98] sm:$0xff]
    %v3094 = vld [vmem:[#allocation7 + $0xa0] sm:$0xff]
    %v3095 = vld [vmem:[#allocation7 + $0xa8] sm:$0xff]
    %v3096 = vld [vmem:[#allocation7 + $0xb0] sm:$0xff]
    %v3097 = vld [vmem:[#allocation7 + $0xb8] sm:$0xff]
    %v3098 = vmul.f32 %v2770, %v3090
    %v3099 = vmul.f32 %v2771, %v3091
    %v3100 = vmul.f32 %v2772, %v3092
    %v3101 = vmul.f32 %v2773, %v3093
    %v3102 = vmul.f32 %v2774, %v3094
    %v3103 = vmul.f32 %v2775, %v3095
    %v3104 = vmul.f32 %v2776, %v3096
    %v3105 = vmul.f32 %v2777, %v3097
    %v3106 = vadd.f32 %v3082, %v3098
    %v3107 = vadd.f32 %v3083, %v3099
    %v3108 = vadd.f32 %v3084, %v3100
    %v3109 = vadd.f32 %v3085, %v3101
    %v3110 = vadd.f32 %v3086, %v3102
    %v3111 = vadd.f32 %v3087, %v3103
    %v3112 = vadd.f32 %v3088, %v3104
    %v3113 = vadd.f32 %v3089, %v3105
    %v3114 = vadd.f32 %v3106, %v2962
    %v3115 = vadd.f32 %v3107, %v2963
    %v3116 = vadd.f32 %v3108, %v2964
    %v3117 = vadd.f32 %v3109, %v2965
    %v3118 = vadd.f32 %v3110, %v2966
    %v3119 = vadd.f32 %v3111, %v2967
    %v3120 = vadd.f32 %v3112, %v2968
    %v3121 = vadd.f32 %v3113, %v2969
    %v3122 = vsub.f32 0.0, %v3114
    %v3123 = vsub.f32 0.0, %v3115
    %v3124 = vsub.f32 0.0, %v3116
    %v3125 = vsub.f32 0.0, %v3117
    %v3126 = vsub.f32 0.0, %v3118
    %v3127 = vsub.f32 0.0, %v3119
    %v3128 = vsub.f32 0.0, %v3120
    %v3129 = vsub.f32 0.0, %v3121
    %v3130 = vld [vmem:[#allocation10 + $0x8] sm:$0xf]
    %v3131 = vld [vmem:[#allocation10 + $0x1c] sm:$0xf]
    %v3132 = vld [vmem:[#allocation10 + $0x30] sm:$0xf]
    %v3133 = vld [vmem:[#allocation10 + $0x44] sm:$0xf]
    %v3134 = vld [vmem:[#allocation10 + $0x58] sm:$0xf]
    %v3135 = vld [vmem:[#allocation10 + $0x6c] sm:$0xf]
    %v3136 = vld [vmem:[#allocation10 + $0x80] sm:$0xf]
    %v3137 = vld [vmem:[#allocation10 + $0x94] sm:$0xf]
    %v3138 = vunpack.c.l.bf16 %v3130
    %v3139 = vunpack.c.l.bf16 %v3131
    %v3140 = vunpack.c.l.bf16 %v3132
    %v3141 = vunpack.c.l.bf16 %v3133
    %v3142 = vunpack.c.l.bf16 %v3134
    %v3143 = vunpack.c.l.bf16 %v3135
    %v3144 = vunpack.c.l.bf16 %v3136
    %v3145 = vunpack.c.l.bf16 %v3137
    %v3146 = vmul.f32 %v2714, %v3138
    %v3147 = vmul.f32 %v2715, %v3139
    %v3148 = vmul.f32 %v2716, %v3140
    %v3149 = vmul.f32 %v2717, %v3141
    %v3150 = vmul.f32 %v2718, %v3142
    %v3151 = vmul.f32 %v2719, %v3143
    %v3152 = vmul.f32 %v2720, %v3144
    %v3153 = vmul.f32 %v2721, %v3145
    %v3154 = vadd.f32 %v3122, %v3146
    %v3155 = vadd.f32 %v3123, %v3147
    %v3156 = vadd.f32 %v3124, %v3148
    %v3157 = vadd.f32 %v3125, %v3149
    %v3158 = vadd.f32 %v3126, %v3150
    %v3159 = vadd.f32 %v3127, %v3151
    %v3160 = vadd.f32 %v3128, %v3152
    %v3161 = vadd.f32 %v3129, %v3153
    %v3162 = vpack.c.bf16 %v3154, %v3154
    %v3163 = vpack.c.bf16 %v3155, %v3155
    %v3164 = vpack.c.bf16 %v3156, %v3156
    %v3165 = vpack.c.bf16 %v3157, %v3157
    %v3166 = vpack.c.bf16 %v3158, %v3158
    %v3167 = vpack.c.bf16 %v3159, %v3159
    %v3168 = vpack.c.bf16 %v3160, %v3160
    %v3169 = vpack.c.bf16 %v3161, %v3161
    %3170 = vst [vmem:[#allocation8 + $0x8] sm:$0xf] %v3162
    %3171 = vst [vmem:[#allocation8 + $0x1c] sm:$0xf] %v3163
    %3172 = vst [vmem:[#allocation8 + $0x30] sm:$0xf] %v3164
    %3173 = vst [vmem:[#allocation8 + $0x44] sm:$0xf] %v3165
    %3174 = vst [vmem:[#allocation8 + $0x58] sm:$0xf] %v3166
    %3175 = vst [vmem:[#allocation8 + $0x6c] sm:$0xf] %v3167
    %3176 = vst [vmem:[#allocation8 + $0x80] sm:$0xf] %v3168
    %3177 = vst [vmem:[#allocation8 + $0x94] sm:$0xf] %v3169
    %v3178 = vld [vmem:[#allocation6 + $0xc0] sm:$0xff]
    %v3179 = vld [vmem:[#allocation6 + $0xc8] sm:$0xff]
    %v3180 = vld [vmem:[#allocation6 + $0xd0] sm:$0xff]
    %v3181 = vld [vmem:[#allocation6 + $0xd8] sm:$0xff]
    %v3182 = vld [vmem:[#allocation6 + $0xe0] sm:$0xff]
    %v3183 = vld [vmem:[#allocation6 + $0xe8] sm:$0xff]
    %v3184 = vld [vmem:[#allocation6 + $0xf0] sm:$0xff]
    %v3185 = vld [vmem:[#allocation6 + $0xf8] sm:$0xff]
    %v3186 = vmul.f32 %v2754, %v3178
    %v3187 = vmul.f32 %v2755, %v3179
    %v3188 = vmul.f32 %v2756, %v3180
    %v3189 = vmul.f32 %v2757, %v3181
    %v3190 = vmul.f32 %v2758, %v3182
    %v3191 = vmul.f32 %v2759, %v3183
    %v3192 = vmul.f32 %v2760, %v3184
    %v3193 = vmul.f32 %v2761, %v3185
    %v3194 = vld [vmem:[#allocation7 + $0xc0] sm:$0xff]
    %v3195 = vld [vmem:[#allocation7 + $0xc8] sm:$0xff]
    %v3196 = vld [vmem:[#allocation7 + $0xd0] sm:$0xff]
    %v3197 = vld [vmem:[#allocation7 + $0xd8] sm:$0xff]
    %v3198 = vld [vmem:[#allocation7 + $0xe0] sm:$0xff]
    %v3199 = vld [vmem:[#allocation7 + $0xe8] sm:$0xff]
    %v3200 = vld [vmem:[#allocation7 + $0xf0] sm:$0xff]
    %v3201 = vld [vmem:[#allocation7 + $0xf8] sm:$0xff]
    %v3202 = vmul.f32 %v2770, %v3194
    %v3203 = vmul.f32 %v2771, %v3195
    %v3204 = vmul.f32 %v2772, %v3196
    %v3205 = vmul.f32 %v2773, %v3197
    %v3206 = vmul.f32 %v2774, %v3198
    %v3207 = vmul.f32 %v2775, %v3199
    %v3208 = vmul.f32 %v2776, %v3200
    %v3209 = vmul.f32 %v2777, %v3201
    %v3210 = vadd.f32 %v3186, %v3202
    %v3211 = vadd.f32 %v3187, %v3203
    %v3212 = vadd.f32 %v3188, %v3204
    %v3213 = vadd.f32 %v3189, %v3205
    %v3214 = vadd.f32 %v3190, %v3206
    %v3215 = vadd.f32 %v3191, %v3207
    %v3216 = vadd.f32 %v3192, %v3208
    %v3217 = vadd.f32 %v3193, %v3209
    %v3218 = vsub.f32 %v3210, %v2818
    %v3219 = vsub.f32 %v3211, %v2819
    %v3220 = vsub.f32 %v3212, %v2820
    %v3221 = vsub.f32 %v3213, %v2821
    %v3222 = vsub.f32 %v3214, %v2822
    %v3223 = vsub.f32 %v3215, %v2823
    %v3224 = vsub.f32 %v3216, %v2824
    %v3225 = vsub.f32 %v3217, %v2825
    %v3226 = vsub.f32 0.0, %v3218
    %v3227 = vsub.f32 0.0, %v3219
    %v3228 = vsub.f32 0.0, %v3220
    %v3229 = vsub.f32 0.0, %v3221
    %v3230 = vsub.f32 0.0, %v3222
    %v3231 = vsub.f32 0.0, %v3223
    %v3232 = vsub.f32 0.0, %v3224
    %v3233 = vsub.f32 0.0, %v3225
    %v3234 = vld [vmem:[#allocation10 + $0xc] sm:$0xf]
    %v3235 = vld [vmem:[#allocation10 + $0x20] sm:$0xf]
    %v3236 = vld [vmem:[#allocation10 + $0x34] sm:$0xf]
    %v3237 = vld [vmem:[#allocation10 + $0x48] sm:$0xf]
    %v3238 = vld [vmem:[#allocation10 + $0x5c] sm:$0xf]
    %v3239 = vld [vmem:[#allocation10 + $0x70] sm:$0xf]
    %v3240 = vld [vmem:[#allocation10 + $0x84] sm:$0xf]
    %v3241 = vld [vmem:[#allocation10 + $0x98] sm:$0xf]
    %v3242 = vunpack.c.l.bf16 %v3234
    %v3243 = vunpack.c.l.bf16 %v3235
    %v3244 = vunpack.c.l.bf16 %v3236
    %v3245 = vunpack.c.l.bf16 %v3237
    %v3246 = vunpack.c.l.bf16 %v3238
    %v3247 = vunpack.c.l.bf16 %v3239
    %v3248 = vunpack.c.l.bf16 %v3240
    %v3249 = vunpack.c.l.bf16 %v3241
    %v3250 = vmul.f32 %v2714, %v3242
    %v3251 = vmul.f32 %v2715, %v3243
    %v3252 = vmul.f32 %v2716, %v3244
    %v3253 = vmul.f32 %v2717, %v3245
    %v3254 = vmul.f32 %v2718, %v3246
    %v3255 = vmul.f32 %v2719, %v3247
    %v3256 = vmul.f32 %v2720, %v3248
    %v3257 = vmul.f32 %v2721, %v3249
    %v3258 = vadd.f32 %v3226, %v3250
    %v3259 = vadd.f32 %v3227, %v3251
    %v3260 = vadd.f32 %v3228, %v3252
    %v3261 = vadd.f32 %v3229, %v3253
    %v3262 = vadd.f32 %v3230, %v3254
    %v3263 = vadd.f32 %v3231, %v3255
    %v3264 = vadd.f32 %v3232, %v3256
    %v3265 = vadd.f32 %v3233, %v3257
    %v3266 = vpack.c.bf16 %v3258, %v3258
    %v3267 = vpack.c.bf16 %v3259, %v3259
    %v3268 = vpack.c.bf16 %v3260, %v3260
    %v3269 = vpack.c.bf16 %v3261, %v3261
    %v3270 = vpack.c.bf16 %v3262, %v3262
    %v3271 = vpack.c.bf16 %v3263, %v3263
    %v3272 = vpack.c.bf16 %v3264, %v3264
    %v3273 = vpack.c.bf16 %v3265, %v3265
    %3274 = vst [vmem:[#allocation8 + $0xc] sm:$0xf] %v3266
    %3275 = vst [vmem:[#allocation8 + $0x20] sm:$0xf] %v3267
    %3276 = vst [vmem:[#allocation8 + $0x34] sm:$0xf] %v3268
    %3277 = vst [vmem:[#allocation8 + $0x48] sm:$0xf] %v3269
    %3278 = vst [vmem:[#allocation8 + $0x5c] sm:$0xf] %v3270
    %3279 = vst [vmem:[#allocation8 + $0x70] sm:$0xf] %v3271
    %3280 = vst [vmem:[#allocation8 + $0x84] sm:$0xf] %v3272
    %3281 = vst [vmem:[#allocation8 + $0x98] sm:$0xf] %v3273
    %v3282 = vld [vmem:[#allocation6 + $0x100] sm:$0xff]
    %v3283 = vld [vmem:[#allocation6 + $0x108] sm:$0xff]
    %v3284 = vld [vmem:[#allocation6 + $0x110] sm:$0xff]
    %v3285 = vld [vmem:[#allocation6 + $0x118] sm:$0xff]
    %v3286 = vld [vmem:[#allocation6 + $0x120] sm:$0xff]
    %v3287 = vld [vmem:[#allocation6 + $0x128] sm:$0xff]
    %v3288 = vld [vmem:[#allocation6 + $0x130] sm:$0xff]
    %v3289 = vld [vmem:[#allocation6 + $0x138] sm:$0xff]
    %v3290 = vmul.f32 %v2754, %v3282
    %v3291 = vmul.f32 %v2755, %v3283
    %v3292 = vmul.f32 %v2756, %v3284
    %v3293 = vmul.f32 %v2757, %v3285
    %v3294 = vmul.f32 %v2758, %v3286
    %v3295 = vmul.f32 %v2759, %v3287
    %v3296 = vmul.f32 %v2760, %v3288
    %v3297 = vmul.f32 %v2761, %v3289
    %v3298 = vld [vmem:[#allocation7 + $0x100] sm:$0xff]
    %v3299 = vld [vmem:[#allocation7 + $0x108] sm:$0xff]
    %v3300 = vld [vmem:[#allocation7 + $0x110] sm:$0xff]
    %v3301 = vld [vmem:[#allocation7 + $0x118] sm:$0xff]
    %v3302 = vld [vmem:[#allocation7 + $0x120] sm:$0xff]
    %v3303 = vld [vmem:[#allocation7 + $0x128] sm:$0xff]
    %v3304 = vld [vmem:[#allocation7 + $0x130] sm:$0xff]
    %v3305 = vld [vmem:[#allocation7 + $0x138] sm:$0xff]
    %v3306 = vmul.f32 %v2770, %v3298
    %v3307 = vmul.f32 %v2771, %v3299
    %v3308 = vmul.f32 %v2772, %v3300
    %v3309 = vmul.f32 %v2773, %v3301
    %v3310 = vmul.f32 %v2774, %v3302
    %v3311 = vmul.f32 %v2775, %v3303
    %v3312 = vmul.f32 %v2776, %v3304
    %v3313 = vmul.f32 %v2777, %v3305
    %v3314 = vadd.f32 %v3290, %v3306
    %v3315 = vadd.f32 %v3291, %v3307
    %v3316 = vadd.f32 %v3292, %v3308
    %v3317 = vadd.f32 %v3293, %v3309
    %v3318 = vadd.f32 %v3294, %v3310
    %v3319 = vadd.f32 %v3295, %v3311
    %v3320 = vadd.f32 %v3296, %v3312
    %v3321 = vadd.f32 %v3297, %v3313
    %v3322 = vsub.f32 0.0, %v3314
    %v3323 = vsub.f32 0.0, %v3315
    %v3324 = vsub.f32 0.0, %v3316
    %v3325 = vsub.f32 0.0, %v3317
    %v3326 = vsub.f32 0.0, %v3318
    %v3327 = vsub.f32 0.0, %v3319
    %v3328 = vsub.f32 0.0, %v3320
    %v3329 = vsub.f32 0.0, %v3321
    %v3330 = vpack.c.bf16 %v3322, %v3322
    %v3331 = vpack.c.bf16 %v3323, %v3323
    %v3332 = vpack.c.bf16 %v3324, %v3324
    %v3333 = vpack.c.bf16 %v3325, %v3325
    %v3334 = vpack.c.bf16 %v3326, %v3326
    %v3335 = vpack.c.bf16 %v3327, %v3327
    %v3336 = vpack.c.bf16 %v3328, %v3328
    %v3337 = vpack.c.bf16 %v3329, %v3329
    %3338 = vst [vmem:[#allocation8 + $0x10] sm:$0xf] %v3330
    %3339 = vst [vmem:[#allocation8 + $0x24] sm:$0xf] %v3331
    %3340 = vst [vmem:[#allocation8 + $0x38] sm:$0xf] %v3332
    %3341 = vst [vmem:[#allocation8 + $0x4c] sm:$0xf] %v3333
    %3342 = vst [vmem:[#allocation8 + $0x60] sm:$0xf] %v3334
    %3343 = vst [vmem:[#allocation8 + $0x74] sm:$0xf] %v3335
    %3344 = vst [vmem:[#allocation8 + $0x88] sm:$0xf] %v3336
    %3345 = vst [vmem:[#allocation8 + $0x9c] sm:$0xf] %v3337
    %v3346 = vld [vmem:[%s2 + $0x20] sm:$0xf]
    %v3347 = vld [vmem:[%s2 + $0x24] sm:$0xf]
    %v3348 = vld [vmem:[%s2 + $0x28] sm:$0xf]
    %v3349 = vld [vmem:[%s2 + $0x2c] sm:$0xf]
    %v3350 = vld [vmem:[%s2 + $0x30] sm:$0xf]
    %v3351 = vld [vmem:[%s2 + $0x34] sm:$0xf]
    %v3352 = vld [vmem:[%s2 + $0x38] sm:$0xf]
    %v3353 = vld [vmem:[%s2 + $0x3c] sm:$0xf]
    %v3354 = vld [vmem:[#allocation8] sm:$0xff]
    %v3355 = vld [vmem:[#allocation8 + $0x8] sm:$0xff]
    %v3356 = vld [vmem:[#allocation8 + $0x10] sm:$0xf]
    %v3357 = vld [vmem:[#allocation8 + $0x14] sm:$0xff]
    %v3358 = vld [vmem:[#allocation8 + $0x1c] sm:$0xff]
    %v3359 = vld [vmem:[#allocation8 + $0x24] sm:$0xf]
    %v3360 = vld [vmem:[#allocation8 + $0x28] sm:$0xff]
    %v3361 = vld [vmem:[#allocation8 + $0x30] sm:$0xff]
    %v3362 = vld [vmem:[#allocation8 + $0x38] sm:$0xf]
    %v3363 = vld [vmem:[#allocation8 + $0x3c] sm:$0xff]
    %v3364 = vld [vmem:[#allocation8 + $0x44] sm:$0xff]
    %v3365 = vld [vmem:[#allocation8 + $0x4c] sm:$0xf]
    %v3366 = vld [vmem:[#allocation8 + $0x50] sm:$0xff]
    %v3367 = vld [vmem:[#allocation8 + $0x58] sm:$0xff]
    %v3368 = vld [vmem:[#allocation8 + $0x60] sm:$0xf]
    %v3369 = vld [vmem:[#allocation8 + $0x64] sm:$0xff]
    %v3370 = vld [vmem:[#allocation8 + $0x6c] sm:$0xff]
    %v3371 = vld [vmem:[#allocation8 + $0x74] sm:$0xf]
    %v3372 = vld [vmem:[#allocation8 + $0x78] sm:$0xff]
    %v3373 = vld [vmem:[#allocation8 + $0x80] sm:$0xff]
    %v3374 = vld [vmem:[#allocation8 + $0x88] sm:$0xf]
    %v3375 = vld [vmem:[#allocation8 + $0x8c] sm:$0xff]
    %v3376 = vld [vmem:[#allocation8 + $0x94] sm:$0xff]
    %v3377 = vld [vmem:[#allocation8 + $0x9c] sm:$0xf]
    %v3386 = vunpack.c.l.b16 %v3346
    %v3387 = vunpack.c.l.b16 %v3347
    %v3388 = vunpack.c.l.b16 %v3348
    %v3389 = vunpack.c.l.b16 %v3349
    %v3390 = vunpack.c.l.b16 %v3350
    %v3391 = vunpack.c.l.b16 %v3351
    %v3392 = vunpack.c.l.b16 %v3352
    %v3393 = vunpack.c.l.b16 %v3353
    %v3394 = vpack.c.b16 %v3387, %v3386
    %v3395 = vpack.c.b16 %v3389, %v3388
    %v3396 = vpack.c.b16 %v3391, %v3390
    %v3397 = vpack.c.b16 %v3393, %v3392
    %v3422 = vunpack.c.l.b16 %v3354
    %v3423 = vunpack.c.h.b16 %v3354
    %v3424 = vunpack.c.l.b16 %v3355
    %v3425 = vunpack.c.h.b16 %v3355
    %v3426 = vunpack.c.l.b16 %v3356
    %v3427 = vunpack.c.l.b16 %v3357
    %v3428 = vunpack.c.h.b16 %v3357
    %v3429 = vunpack.c.l.b16 %v3358
    %v3430 = vunpack.c.h.b16 %v3358
    %v3431 = vunpack.c.l.b16 %v3359
    %v3432 = vunpack.c.l.b16 %v3360
    %v3433 = vunpack.c.h.b16 %v3360
    %v3434 = vunpack.c.l.b16 %v3361
    %v3435 = vunpack.c.h.b16 %v3361
    %v3436 = vunpack.c.l.b16 %v3362
    %v3437 = vunpack.c.l.b16 %v3363
    %v3438 = vunpack.c.h.b16 %v3363
    %v3439 = vunpack.c.l.b16 %v3364
    %v3440 = vunpack.c.h.b16 %v3364
    %v3441 = vunpack.c.l.b16 %v3365
    %v3442 = vunpack.c.l.b16 %v3366
    %v3443 = vunpack.c.h.b16 %v3366
    %v3444 = vunpack.c.l.b16 %v3367
    %v3445 = vunpack.c.h.b16 %v3367
    %v3446 = vunpack.c.l.b16 %v3368
    %v3447 = vunpack.c.l.b16 %v3369
    %v3448 = vunpack.c.h.b16 %v3369
    %v3449 = vunpack.c.l.b16 %v3370
    %v3450 = vunpack.c.h.b16 %v3370
    %v3451 = vunpack.c.l.b16 %v3371
    %v3452 = vunpack.c.l.b16 %v3372
    %v3453 = vunpack.c.h.b16 %v3372
    %v3454 = vunpack.c.l.b16 %v3373
    %v3455 = vunpack.c.h.b16 %v3373
    %v3456 = vunpack.c.l.b16 %v3374
    %v3457 = vunpack.c.l.b16 %v3375
    %v3458 = vunpack.c.h.b16 %v3375
    %v3459 = vunpack.c.l.b16 %v3376
    %v3460 = vunpack.c.h.b16 %v3376
    %v3461 = vunpack.c.l.b16 %v3377
    %v3462 = vpack.c.b16 %v3427, %v3422
    %v3463 = vpack.c.b16 %v3428, %v3423
    %v3464 = vpack.c.b16 %v3429, %v3424
    %v3465 = vpack.c.b16 %v3430, %v3425
    %v3466 = vpack.c.b16 %v3431, %v3426
    %v3467 = vpack.c.b16 %v3437, %v3432
    %v3468 = vpack.c.b16 %v3438, %v3433
    %v3469 = vpack.c.b16 %v3439, %v3434
    %v3470 = vpack.c.b16 %v3440, %v3435
    %v3471 = vpack.c.b16 %v3441, %v3436
    %v3472 = vpack.c.b16 %v3447, %v3442
    %v3473 = vpack.c.b16 %v3448, %v3443
    %v3474 = vpack.c.b16 %v3449, %v3444
    %v3475 = vpack.c.b16 %v3450, %v3445
    %v3476 = vpack.c.b16 %v3451, %v3446
    %v3477 = vpack.c.b16 %v3457, %v3452
    %v3478 = vpack.c.b16 %v3458, %v3453
    %v3479 = vpack.c.b16 %v3459, %v3454
    %v3480 = vpack.c.b16 %v3460, %v3455
    %v3481 = vpack.c.b16 %v3461, %v3456
    %v3503 = vsel %vm688, %v3394, 0
    %v3506 = vsel %vm688, %v3395, 0
    %v3509 = vsel %vm688, %v3396, 0
    %v3512 = vsel %vm688, %v3397, 0
    %3514 = vmatpush.bf16.msra.mxu0 0
    %3515 = vmatpush.bf16.msra.mxu0 0
    %3516 = vmatpush.bf16.msra.mxu0 0
    %3517 = vmatpush.bf16.msra.mxu0 0
    %3518 = vmatpush.bf16.msra.mxu0 %v3477
    %3519 = vmatpush.bf16.msra.mxu0 %v3472
    %3520 = vmatpush.bf16.msra.mxu0 %v3467
    %3521 = vmatpush.bf16.msra.mxu0 %v3462
    %3522 = vmatmul.bf16.gmra.mxu0 %v3503
    %v3523 = vpop.f32.mrf.mxu0
    %v3524 = vadd.f32 0.0, %v3523
    %v3525 = vpop.f32.mrf.mxu0
    %v3526 = vadd.f32 0.0, %v3525
    %3527 = vmatmul.bf16.gmra.mxu0 %v3506
    %v3528 = vpop.f32.mrf.mxu0
    %v3529 = vadd.f32 0.0, %v3528
    %v3530 = vpop.f32.mrf.mxu0
    %v3531 = vadd.f32 0.0, %v3530
    %3532 = vmatmul.bf16.gmra.mxu0 %v3509
    %v3533 = vpop.f32.mrf.mxu0
    %v3534 = vadd.f32 0.0, %v3533
    %v3535 = vpop.f32.mrf.mxu0
    %v3536 = vadd.f32 0.0, %v3535
    %3537 = vmatmul.bf16.gmra.mxu0 %v3512
    %v3538 = vpop.f32.mrf.mxu0
    %v3539 = vadd.f32 0.0, %v3538
    %v3540 = vpop.f32.mrf.mxu0
    %v3541 = vadd.f32 0.0, %v3540
    %3542 = vdwg.mxu0
    %3543 = vmatpush.bf16.msra.mxu0 0
    %3544 = vmatpush.bf16.msra.mxu0 0
    %3545 = vmatpush.bf16.msra.mxu0 0
    %3546 = vmatpush.bf16.msra.mxu0 0
    %3547 = vmatpush.bf16.msra.mxu0 %v3478
    %3548 = vmatpush.bf16.msra.mxu0 %v3473
    %3549 = vmatpush.bf16.msra.mxu0 %v3468
    %3550 = vmatpush.bf16.msra.mxu0 %v3463
    %3551 = vmatmul.bf16.gmra.mxu0 %v3503
    %v3552 = vpop.f32.mrf.mxu0
    %v3553 = vadd.f32 0.0, %v3552
    %v3554 = vpop.f32.mrf.mxu0
    %v3555 = vadd.f32 0.0, %v3554
    %3556 = vmatmul.bf16.gmra.mxu0 %v3506
    %v3557 = vpop.f32.mrf.mxu0
    %v3558 = vadd.f32 0.0, %v3557
    %v3559 = vpop.f32.mrf.mxu0
    %v3560 = vadd.f32 0.0, %v3559
    %3561 = vmatmul.bf16.gmra.mxu0 %v3509
    %v3562 = vpop.f32.mrf.mxu0
    %v3563 = vadd.f32 0.0, %v3562
    %v3564 = vpop.f32.mrf.mxu0
    %v3565 = vadd.f32 0.0, %v3564
    %3566 = vmatmul.bf16.gmra.mxu0 %v3512
    %v3567 = vpop.f32.mrf.mxu0
    %v3568 = vadd.f32 0.0, %v3567
    %v3569 = vpop.f32.mrf.mxu0
    %v3570 = vadd.f32 0.0, %v3569
    %3571 = vdwg.mxu0
    %3572 = vmatpush.bf16.msra.mxu0 0
    %3573 = vmatpush.bf16.msra.mxu0 0
    %3574 = vmatpush.bf16.msra.mxu0 0
    %3575 = vmatpush.bf16.msra.mxu0 0
    %3576 = vmatpush.bf16.msra.mxu0 %v3479
    %3577 = vmatpush.bf16.msra.mxu0 %v3474
    %3578 = vmatpush.bf16.msra.mxu0 %v3469
    %3579 = vmatpush.bf16.msra.mxu0 %v3464
    %3580 = vmatmul.bf16.gmra.mxu0 %v3503
    %v3581 = vpop.f32.mrf.mxu0
    %v3582 = vadd.f32 0.0, %v3581
    %v3583 = vpop.f32.mrf.mxu0
    %v3584 = vadd.f32 0.0, %v3583
    %3585 = vmatmul.bf16.gmra.mxu0 %v3506
    %v3586 = vpop.f32.mrf.mxu0
    %v3587 = vadd.f32 0.0, %v3586
    %v3588 = vpop.f32.mrf.mxu0
    %v3589 = vadd.f32 0.0, %v3588
    %3590 = vmatmul.bf16.gmra.mxu0 %v3509
    %v3591 = vpop.f32.mrf.mxu0
    %v3592 = vadd.f32 0.0, %v3591
    %v3593 = vpop.f32.mrf.mxu0
    %v3594 = vadd.f32 0.0, %v3593
    %3595 = vmatmul.bf16.gmra.mxu0 %v3512
    %v3596 = vpop.f32.mrf.mxu0
    %v3597 = vadd.f32 0.0, %v3596
    %v3598 = vpop.f32.mrf.mxu0
    %v3599 = vadd.f32 0.0, %v3598
    %3600 = vdwg.mxu0
    %3601 = vmatpush.bf16.msra.mxu0 0
    %3602 = vmatpush.bf16.msra.mxu0 0
    %3603 = vmatpush.bf16.msra.mxu0 0
    %3604 = vmatpush.bf16.msra.mxu0 0
    %3605 = vmatpush.bf16.msra.mxu0 %v3480
    %3606 = vmatpush.bf16.msra.mxu0 %v3475
    %3607 = vmatpush.bf16.msra.mxu0 %v3470
    %3608 = vmatpush.bf16.msra.mxu0 %v3465
    %3609 = vmatmul.bf16.gmra.mxu0 %v3503
    %v3610 = vpop.f32.mrf.mxu0
    %v3611 = vadd.f32 0.0, %v3610
    %v3612 = vpop.f32.mrf.mxu0
    %v3613 = vadd.f32 0.0, %v3612
    %3614 = vmatmul.bf16.gmra.mxu0 %v3506
    %v3615 = vpop.f32.mrf.mxu0
    %v3616 = vadd.f32 0.0, %v3615
    %v3617 = vpop.f32.mrf.mxu0
    %v3618 = vadd.f32 0.0, %v3617
    %3619 = vmatmul.bf16.gmra.mxu0 %v3509
    %v3620 = vpop.f32.mrf.mxu0
    %v3621 = vadd.f32 0.0, %v3620
    %v3622 = vpop.f32.mrf.mxu0
    %v3623 = vadd.f32 0.0, %v3622
    %3624 = vmatmul.bf16.gmra.mxu0 %v3512
    %v3625 = vpop.f32.mrf.mxu0
    %v3626 = vadd.f32 0.0, %v3625
    %v3627 = vpop.f32.mrf.mxu0
    %v3628 = vadd.f32 0.0, %v3627
    %3629 = vdwg.mxu0
    %3630 = vmatpush.bf16.msra.mxu0 0
    %3631 = vmatpush.bf16.msra.mxu0 0
    %3632 = vmatpush.bf16.msra.mxu0 0
    %3633 = vmatpush.bf16.msra.mxu0 0
    %3634 = vmatpush.bf16.msra.mxu0 %v3481
    %3635 = vmatpush.bf16.msra.mxu0 %v3476
    %3636 = vmatpush.bf16.msra.mxu0 %v3471
    %3637 = vmatpush.bf16.msra.mxu0 %v3466
    %3638 = vmatmul.bf16.gmra.mxu0 %v3503
    %v3639 = vpop.f32.mrf.mxu0
    %v3640 = vadd.f32 0.0, %v3639
    %v3641 = vpop.f32.mrf.mxu0
    %v3642 = vadd.f32 0.0, %v3641
    %3643 = vmatmul.bf16.gmra.mxu0 %v3506
    %v3644 = vpop.f32.mrf.mxu0
    %v3645 = vadd.f32 0.0, %v3644
    %v3646 = vpop.f32.mrf.mxu0
    %v3647 = vadd.f32 0.0, %v3646
    %3648 = vmatmul.bf16.gmra.mxu0 %v3509
    %v3649 = vpop.f32.mrf.mxu0
    %v3650 = vadd.f32 0.0, %v3649
    %v3651 = vpop.f32.mrf.mxu0
    %v3652 = vadd.f32 0.0, %v3651
    %3653 = vmatmul.bf16.gmra.mxu0 %v3512
    %v3654 = vpop.f32.mrf.mxu0
    %v3655 = vadd.f32 0.0, %v3654
    %v3656 = vpop.f32.mrf.mxu0
    %v3657 = vadd.f32 0.0, %v3656
    %3658 = vdwg.mxu0
    %v3659 = vpack.c.bf16 %v3553, %v3524
    %v3660 = vpack.c.bf16 %v3611, %v3582
    %v3661 = vpack.c.bf16 %v3640, %v3640
    %v3662 = vpack.c.bf16 %v3555, %v3526
    %v3663 = vpack.c.bf16 %v3613, %v3584
    %v3664 = vpack.c.bf16 %v3642, %v3642
    %v3665 = vpack.c.bf16 %v3558, %v3529
    %v3666 = vpack.c.bf16 %v3616, %v3587
    %v3667 = vpack.c.bf16 %v3645, %v3645
    %v3668 = vpack.c.bf16 %v3560, %v3531
    %v3669 = vpack.c.bf16 %v3618, %v3589
    %v3670 = vpack.c.bf16 %v3647, %v3647
    %v3671 = vpack.c.bf16 %v3563, %v3534
    %v3672 = vpack.c.bf16 %v3621, %v3592
    %v3673 = vpack.c.bf16 %v3650, %v3650
    %v3674 = vpack.c.bf16 %v3565, %v3536
    %v3675 = vpack.c.bf16 %v3623, %v3594
    %v3676 = vpack.c.bf16 %v3652, %v3652
    %v3677 = vpack.c.bf16 %v3568, %v3539
    %v3678 = vpack.c.bf16 %v3626, %v3597
    %v3679 = vpack.c.bf16 %v3655, %v3655
    %v3680 = vpack.c.bf16 %v3570, %v3541
    %v3681 = vpack.c.bf16 %v3628, %v3599
    %v3682 = vpack.c.bf16 %v3657, %v3657
    %3683 = vst [vmem:[#allocation8] sm:$0xff] %v3659
    %3684 = vst [vmem:[#allocation8 + $0x8] sm:$0xff] %v3660
    %3685 = vst [vmem:[#allocation8 + $0x10] sm:$0xf] %v3661
    %3686 = vst [vmem:[#allocation8 + $0x14] sm:$0xff] %v3662
    %3687 = vst [vmem:[#allocation8 + $0x1c] sm:$0xff] %v3663
    %3688 = vst [vmem:[#allocation8 + $0x24] sm:$0xf] %v3664
    %3689 = vst [vmem:[#allocation8 + $0x28] sm:$0xff] %v3665
    %3690 = vst [vmem:[#allocation8 + $0x30] sm:$0xff] %v3666
    %3691 = vst [vmem:[#allocation8 + $0x38] sm:$0xf] %v3667
    %3692 = vst [vmem:[#allocation8 + $0x3c] sm:$0xff] %v3668
    %3693 = vst [vmem:[#allocation8 + $0x44] sm:$0xff] %v3669
    %3694 = vst [vmem:[#allocation8 + $0x4c] sm:$0xf] %v3670
    %3695 = vst [vmem:[#allocation8 + $0x50] sm:$0xff] %v3671
    %3696 = vst [vmem:[#allocation8 + $0x58] sm:$0xff] %v3672
    %3697 = vst [vmem:[#allocation8 + $0x60] sm:$0xf] %v3673
    %3698 = vst [vmem:[#allocation8 + $0x64] sm:$0xff] %v3674
    %3699 = vst [vmem:[#allocation8 + $0x6c] sm:$0xff] %v3675
    %3700 = vst [vmem:[#allocation8 + $0x74] sm:$0xf] %v3676
    %3701 = vst [vmem:[#allocation8 + $0x78] sm:$0xff] %v3677
    %3702 = vst [vmem:[#allocation8 + $0x80] sm:$0xff] %v3678
    %3703 = vst [vmem:[#allocation8 + $0x88] sm:$0xf] %v3679
    %3704 = vst [vmem:[#allocation8 + $0x8c] sm:$0xff] %v3680
    %3705 = vst [vmem:[#allocation8 + $0x94] sm:$0xff] %v3681
    %3706 = vst [vmem:[#allocation8 + $0x9c] sm:$0xf] %v3682
    %v3707 = vld [vmem:[#allocation8] sm:$0xf]
    %v3708 = vld [vmem:[#allocation8 + $0x14] sm:$0xf]
    %v3709 = vld [vmem:[#allocation8 + $0x28] sm:$0xf]
    %v3710 = vld [vmem:[#allocation8 + $0x3c] sm:$0xf]
    %v3711 = vld [vmem:[#allocation8 + $0x50] sm:$0xf]
    %v3712 = vld [vmem:[#allocation8 + $0x64] sm:$0xf]
    %v3713 = vld [vmem:[#allocation8 + $0x78] sm:$0xf]
    %v3714 = vld [vmem:[#allocation8 + $0x8c] sm:$0xf]
    %3715 = vst [vmem:[#allocation9] sm:$0xf] %v3707
    %3716 = vst [vmem:[#allocation9 + $0x4] sm:$0xf] %v3708
    %3717 = vst [vmem:[#allocation9 + $0x8] sm:$0xf] %v3709
    %3718 = vst [vmem:[#allocation9 + $0xc] sm:$0xf] %v3710
    %3719 = vst [vmem:[#allocation9 + $0x10] sm:$0xf] %v3711
    %3720 = vst [vmem:[#allocation9 + $0x14] sm:$0xf] %v3712
    %3721 = vst [vmem:[#allocation9 + $0x18] sm:$0xf] %v3713
    %3722 = vst [vmem:[#allocation9 + $0x1c] sm:$0xf] %v3714
    %v3723 = vld [vmem:[#allocation8 + $0x4] sm:$0xf]
    %v3724 = vld [vmem:[#allocation8 + $0x18] sm:$0xf]
    %v3725 = vld [vmem:[#allocation8 + $0x2c] sm:$0xf]
    %v3726 = vld [vmem:[#allocation8 + $0x40] sm:$0xf]
    %v3727 = vld [vmem:[#allocation8 + $0x54] sm:$0xf]
    %v3728 = vld [vmem:[#allocation8 + $0x68] sm:$0xf]
    %v3729 = vld [vmem:[#allocation8 + $0x7c] sm:$0xf]
    %v3730 = vld [vmem:[#allocation8 + $0x90] sm:$0xf]
    %3731 = vst [vmem:[#allocation9 + $0x20] sm:$0xf] %v3723
    %3732 = vst [vmem:[#allocation9 + $0x24] sm:$0xf] %v3724
    %3733 = vst [vmem:[#allocation9 + $0x28] sm:$0xf] %v3725
    %3734 = vst [vmem:[#allocation9 + $0x2c] sm:$0xf] %v3726
    %3735 = vst [vmem:[#allocation9 + $0x30] sm:$0xf] %v3727
    %3736 = vst [vmem:[#allocation9 + $0x34] sm:$0xf] %v3728
    %3737 = vst [vmem:[#allocation9 + $0x38] sm:$0xf] %v3729
    %3738 = vst [vmem:[#allocation9 + $0x3c] sm:$0xf] %v3730
    %v3739 = vld [vmem:[#allocation8 + $0x8] sm:$0xf]
    %v3740 = vld [vmem:[#allocation8 + $0x1c] sm:$0xf]
    %v3741 = vld [vmem:[#allocation8 + $0x30] sm:$0xf]
    %v3742 = vld [vmem:[#allocation8 + $0x44] sm:$0xf]
    %v3743 = vld [vmem:[#allocation8 + $0x58] sm:$0xf]
    %v3744 = vld [vmem:[#allocation8 + $0x6c] sm:$0xf]
    %v3745 = vld [vmem:[#allocation8 + $0x80] sm:$0xf]
    %v3746 = vld [vmem:[#allocation8 + $0x94] sm:$0xf]
    %3747 = vst [vmem:[#allocation9 + $0x40] sm:$0xf] %v3739
    %3748 = vst [vmem:[#allocation9 + $0x44] sm:$0xf] %v3740
    %3749 = vst [vmem:[#allocation9 + $0x48] sm:$0xf] %v3741
    %3750 = vst [vmem:[#allocation9 + $0x4c] sm:$0xf] %v3742
    %3751 = vst [vmem:[#allocation9 + $0x50] sm:$0xf] %v3743
    %3752 = vst [vmem:[#allocation9 + $0x54] sm:$0xf] %v3744
    %3753 = vst [vmem:[#allocation9 + $0x58] sm:$0xf] %v3745
    %3754 = vst [vmem:[#allocation9 + $0x5c] sm:$0xf] %v3746
    %v3755 = vld [vmem:[#allocation8 + $0xc] sm:$0xf]
    %v3756 = vld [vmem:[#allocation8 + $0x20] sm:$0xf]
    %v3757 = vld [vmem:[#allocation8 + $0x34] sm:$0xf]
    %v3758 = vld [vmem:[#allocation8 + $0x48] sm:$0xf]
    %v3759 = vld [vmem:[#allocation8 + $0x5c] sm:$0xf]
    %v3760 = vld [vmem:[#allocation8 + $0x70] sm:$0xf]
    %v3761 = vld [vmem:[#allocation8 + $0x84] sm:$0xf]
    %v3762 = vld [vmem:[#allocation8 + $0x98] sm:$0xf]
    %3763 = vst [vmem:[#allocation9 + $0x60] sm:$0xf] %v3755
    %3764 = vst [vmem:[#allocation9 + $0x64] sm:$0xf] %v3756
    %3765 = vst [vmem:[#allocation9 + $0x68] sm:$0xf] %v3757
    %3766 = vst [vmem:[#allocation9 + $0x6c] sm:$0xf] %v3758
    %3767 = vst [vmem:[#allocation9 + $0x70] sm:$0xf] %v3759
    %3768 = vst [vmem:[#allocation9 + $0x74] sm:$0xf] %v3760
    %3769 = vst [vmem:[#allocation9 + $0x78] sm:$0xf] %v3761
    %3770 = vst [vmem:[#allocation9 + $0x7c] sm:$0xf] %v3762
    %v3771 = vld [vmem:[#allocation8 + $0x10] sm:$0xf]
    %v3772 = vld [vmem:[#allocation8 + $0x24] sm:$0xf]
    %v3773 = vld [vmem:[#allocation8 + $0x38] sm:$0xf]
    %v3774 = vld [vmem:[#allocation8 + $0x4c] sm:$0xf]
    %v3775 = vld [vmem:[#allocation8 + $0x60] sm:$0xf]
    %v3776 = vld [vmem:[#allocation8 + $0x74] sm:$0xf]
    %v3777 = vld [vmem:[#allocation8 + $0x88] sm:$0xf]
    %v3778 = vld [vmem:[#allocation8 + $0x9c] sm:$0xf]
    %3779 = vst [vmem:[#allocation9 + $0x80] sm:$0xf] %v3771
    %3780 = vst [vmem:[#allocation9 + $0x84] sm:$0xf] %v3772
    %3781 = vst [vmem:[#allocation9 + $0x88] sm:$0xf] %v3773
    %3782 = vst [vmem:[#allocation9 + $0x8c] sm:$0xf] %v3774
    %3783 = vst [vmem:[#allocation9 + $0x90] sm:$0xf] %v3775
    %3784 = vst [vmem:[#allocation9 + $0x94] sm:$0xf] %v3776
    %3785 = vst [vmem:[#allocation9 + $0x98] sm:$0xf] %v3777
    %3786 = vst [vmem:[#allocation9 + $0x9c] sm:$0xf] %v3778
    %v3787 = vld [vmem:[#allocation9] sm:$0xf]
    %v3788 = vld [vmem:[#allocation9 + $0x4] sm:$0xf]
    %v3789 = vld [vmem:[#allocation9 + $0x8] sm:$0xf]
    %v3790 = vld [vmem:[#allocation9 + $0xc] sm:$0xf]
    %v3791 = vld [vmem:[#allocation9 + $0x10] sm:$0xf]
    %v3792 = vld [vmem:[#allocation9 + $0x14] sm:$0xf]
    %v3793 = vld [vmem:[#allocation9 + $0x18] sm:$0xf]
    %v3794 = vld [vmem:[#allocation9 + $0x1c] sm:$0xf]
    %v3795 = vld [vmem:[#allocation9 + $0x20] sm:$0xf]
    %v3796 = vld [vmem:[#allocation9 + $0x24] sm:$0xf]
    %v3797 = vld [vmem:[#allocation9 + $0x28] sm:$0xf]
    %v3798 = vld [vmem:[#allocation9 + $0x2c] sm:$0xf]
    %v3799 = vld [vmem:[#allocation9 + $0x30] sm:$0xf]
    %v3800 = vld [vmem:[#allocation9 + $0x34] sm:$0xf]
    %v3801 = vld [vmem:[#allocation9 + $0x38] sm:$0xf]
    %v3802 = vld [vmem:[#allocation9 + $0x3c] sm:$0xf]
    %v3803 = vld [vmem:[#allocation9 + $0x40] sm:$0xf]
    %v3804 = vld [vmem:[#allocation9 + $0x44] sm:$0xf]
    %v3805 = vld [vmem:[#allocation9 + $0x48] sm:$0xf]
    %v3806 = vld [vmem:[#allocation9 + $0x4c] sm:$0xf]
    %v3807 = vld [vmem:[#allocation9 + $0x50] sm:$0xf]
    %v3808 = vld [vmem:[#allocation9 + $0x54] sm:$0xf]
    %v3809 = vld [vmem:[#allocation9 + $0x58] sm:$0xf]
    %v3810 = vld [vmem:[#allocation9 + $0x5c] sm:$0xf]
    %v3811 = vld [vmem:[#allocation9 + $0x60] sm:$0xf]
    %v3812 = vld [vmem:[#allocation9 + $0x64] sm:$0xf]
    %v3813 = vld [vmem:[#allocation9 + $0x68] sm:$0xf]
    %v3814 = vld [vmem:[#allocation9 + $0x6c] sm:$0xf]
    %v3815 = vld [vmem:[#allocation9 + $0x70] sm:$0xf]
    %v3816 = vld [vmem:[#allocation9 + $0x74] sm:$0xf]
    %v3817 = vld [vmem:[#allocation9 + $0x78] sm:$0xf]
    %v3818 = vld [vmem:[#allocation9 + $0x7c] sm:$0xf]
    %v3819 = vld [vmem:[#allocation9 + $0x80] sm:$0xf]
    %v3820 = vld [vmem:[#allocation9 + $0x84] sm:$0xf]
    %v3821 = vld [vmem:[#allocation9 + $0x88] sm:$0xf]
    %v3822 = vld [vmem:[#allocation9 + $0x8c] sm:$0xf]
    %v3823 = vld [vmem:[#allocation9 + $0x90] sm:$0xf]
    %v3824 = vld [vmem:[#allocation9 + $0x94] sm:$0xf]
    %v3825 = vld [vmem:[#allocation9 + $0x98] sm:$0xf]
    %v3826 = vld [vmem:[#allocation9 + $0x9c] sm:$0xf]
    %v3827 = vld [vmem:[#allocation16] sm:$0xf]
    %v3828 = vld [vmem:[#allocation16 + $0x4] sm:$0xf]
    %v3829 = vld [vmem:[#allocation16 + $0x8] sm:$0xf]
    %v3830 = vld [vmem:[#allocation16 + $0xc] sm:$0xf]
    %v3831 = vld [vmem:[#allocation16 + $0x10] sm:$0xf]
    %v3832 = vld [vmem:[#allocation16 + $0x14] sm:$0xf]
    %v3833 = vld [vmem:[#allocation16 + $0x18] sm:$0xf]
    %v3834 = vld [vmem:[#allocation16 + $0x1c] sm:$0xf]
    %v3835 = vld [vmem:[#allocation16 + $0x20] sm:$0xf]
    %v3836 = vld [vmem:[#allocation16 + $0x24] sm:$0xf]
    %v3837 = vld [vmem:[#allocation16 + $0x28] sm:$0xf]
    %v3838 = vld [vmem:[#allocation16 + $0x2c] sm:$0xf]
    %v3839 = vld [vmem:[#allocation16 + $0x30] sm:$0xf]
    %v3840 = vld [vmem:[#allocation16 + $0x34] sm:$0xf]
    %v3841 = vld [vmem:[#allocation16 + $0x38] sm:$0xf]
    %v3842 = vld [vmem:[#allocation16 + $0x3c] sm:$0xf]
    %v3883 = vunpack.c.l.b16 %v3787
    %v3884 = vunpack.c.l.b16 %v3788
    %v3885 = vunpack.c.l.b16 %v3789
    %v3886 = vunpack.c.l.b16 %v3790
    %v3887 = vunpack.c.l.b16 %v3791
    %v3888 = vunpack.c.l.b16 %v3792
    %v3889 = vunpack.c.l.b16 %v3793
    %v3890 = vunpack.c.l.b16 %v3794
    %v3891 = vunpack.c.l.b16 %v3795
    %v3892 = vunpack.c.l.b16 %v3796
    %v3893 = vunpack.c.l.b16 %v3797
    %v3894 = vunpack.c.l.b16 %v3798
    %v3895 = vunpack.c.l.b16 %v3799
    %v3896 = vunpack.c.l.b16 %v3800
    %v3897 = vunpack.c.l.b16 %v3801
    %v3898 = vunpack.c.l.b16 %v3802
    %v3899 = vunpack.c.l.b16 %v3803
    %v3900 = vunpack.c.l.b16 %v3804
    %v3901 = vunpack.c.l.b16 %v3805
    %v3902 = vunpack.c.l.b16 %v3806
    %v3903 = vunpack.c.l.b16 %v3807
    %v3904 = vunpack.c.l.b16 %v3808
    %v3905 = vunpack.c.l.b16 %v3809
    %v3906 = vunpack.c.l.b16 %v3810
    %v3907 = vunpack.c.l.b16 %v3811
    %v3908 = vunpack.c.l.b16 %v3812
    %v3909 = vunpack.c.l.b16 %v3813
    %v3910 = vunpack.c.l.b16 %v3814
    %v3911 = vunpack.c.l.b16 %v3815
    %v3912 = vunpack.c.l.b16 %v3816
    %v3913 = vunpack.c.l.b16 %v3817
    %v3914 = vunpack.c.l.b16 %v3818
    %v3915 = vunpack.c.l.b16 %v3819
    %v3916 = vunpack.c.l.b16 %v3820
    %v3917 = vunpack.c.l.b16 %v3821
    %v3918 = vunpack.c.l.b16 %v3822
    %v3919 = vunpack.c.l.b16 %v3823
    %v3920 = vunpack.c.l.b16 %v3824
    %v3921 = vunpack.c.l.b16 %v3825
    %v3922 = vunpack.c.l.b16 %v3826
    %v3923 = vpack.c.b16 %v3884, %v3883
    %v3924 = vpack.c.b16 %v3886, %v3885
    %v3925 = vpack.c.b16 %v3888, %v3887
    %v3926 = vpack.c.b16 %v3890, %v3889
    %v3927 = vpack.c.b16 %v3892, %v3891
    %v3928 = vpack.c.b16 %v3894, %v3893
    %v3929 = vpack.c.b16 %v3896, %v3895
    %v3930 = vpack.c.b16 %v3898, %v3897
    %v3931 = vpack.c.b16 %v3900, %v3899
    %v3932 = vpack.c.b16 %v3902, %v3901
    %v3933 = vpack.c.b16 %v3904, %v3903
    %v3934 = vpack.c.b16 %v3906, %v3905
    %v3935 = vpack.c.b16 %v3908, %v3907
    %v3936 = vpack.c.b16 %v3910, %v3909
    %v3937 = vpack.c.b16 %v3912, %v3911
    %v3938 = vpack.c.b16 %v3914, %v3913
    %v3939 = vpack.c.b16 %v3916, %v3915
    %v3940 = vpack.c.b16 %v3918, %v3917
    %v3941 = vpack.c.b16 %v3920, %v3919
    %v3942 = vpack.c.b16 %v3922, %v3921
    %v3979 = vunpack.c.l.b16 %v3827
    %v3980 = vunpack.c.l.b16 %v3828
    %v3981 = vunpack.c.l.b16 %v3829
    %v3982 = vunpack.c.l.b16 %v3830
    %v3983 = vunpack.c.l.b16 %v3831
    %v3984 = vunpack.c.l.b16 %v3832
    %v3985 = vunpack.c.l.b16 %v3833
    %v3986 = vunpack.c.l.b16 %v3834
    %v3987 = vunpack.c.l.b16 %v3835
    %v3988 = vunpack.c.l.b16 %v3836
    %v3989 = vunpack.c.l.b16 %v3837
    %v3990 = vunpack.c.l.b16 %v3838
    %v3991 = vunpack.c.l.b16 %v3839
    %v3992 = vunpack.c.l.b16 %v3840
    %v3993 = vunpack.c.l.b16 %v3841
    %v3994 = vunpack.c.l.b16 %v3842
    %v3995 = vpack.c.b16 %v3980, %v3979
    %v3996 = vpack.c.b16 %v3982, %v3981
    %v3997 = vpack.c.b16 %v3984, %v3983
    %v3998 = vpack.c.b16 %v3986, %v3985
    %v3999 = vpack.c.b16 %v3988, %v3987
    %v4000 = vpack.c.b16 %v3990, %v3989
    %v4001 = vpack.c.b16 %v3992, %v3991
    %v4002 = vpack.c.b16 %v3994, %v3993
    %4011 = vmatpush.bf16.msra.mxu0 %v4002
    %4012 = vmatpush.bf16.msra.mxu0 %v4001
    %4013 = vmatpush.bf16.msra.mxu0 %v4000
    %4014 = vmatpush.bf16.msra.mxu0 %v3999
    %4015 = vmatpush.bf16.msra.mxu0 %v3998
    %4016 = vmatpush.bf16.msra.mxu0 %v3997
    %4017 = vmatpush.bf16.msra.mxu0 %v3996
    %4018 = vmatpush.bf16.msra.mxu0 %v3995
    %4019 = vmatmul.bf16.gmra.mxu0 %v3923
    %v4020 = vpop.f32.mrf.mxu0
    %v4021 = vadd.f32 0.0, %v4020
    %v4022 = vpop.f32.mrf.mxu0
    %v4023 = vadd.f32 0.0, %v4022
    %4024 = vmatmul.bf16.gmra.mxu0 %v3924
    %v4025 = vpop.f32.mrf.mxu0
    %v4026 = vadd.f32 0.0, %v4025
    %v4027 = vpop.f32.mrf.mxu0
    %v4028 = vadd.f32 0.0, %v4027
    %4029 = vmatmul.bf16.gmra.mxu0 %v3925
    %v4030 = vpop.f32.mrf.mxu0
    %v4031 = vadd.f32 0.0, %v4030
    %v4032 = vpop.f32.mrf.mxu0
    %v4033 = vadd.f32 0.0, %v4032
    %4034 = vmatmul.bf16.gmra.mxu0 %v3926
    %v4035 = vpop.f32.mrf.mxu0
    %v4036 = vadd.f32 0.0, %v4035
    %v4037 = vpop.f32.mrf.mxu0
    %v4038 = vadd.f32 0.0, %v4037
    %4039 = vmatmul.bf16.gmra.mxu0 %v3927
    %v4040 = vpop.f32.mrf.mxu0
    %v4041 = vadd.f32 0.0, %v4040
    %v4042 = vpop.f32.mrf.mxu0
    %v4043 = vadd.f32 0.0, %v4042
    %4044 = vmatmul.bf16.gmra.mxu0 %v3928
    %v4045 = vpop.f32.mrf.mxu0
    %v4046 = vadd.f32 0.0, %v4045
    %v4047 = vpop.f32.mrf.mxu0
    %v4048 = vadd.f32 0.0, %v4047
    %4049 = vmatmul.bf16.gmra.mxu0 %v3929
    %v4050 = vpop.f32.mrf.mxu0
    %v4051 = vadd.f32 0.0, %v4050
    %v4052 = vpop.f32.mrf.mxu0
    %v4053 = vadd.f32 0.0, %v4052
    %4054 = vmatmul.bf16.gmra.mxu0 %v3930
    %v4055 = vpop.f32.mrf.mxu0
    %v4056 = vadd.f32 0.0, %v4055
    %v4057 = vpop.f32.mrf.mxu0
    %v4058 = vadd.f32 0.0, %v4057
    %4059 = vmatmul.bf16.gmra.mxu0 %v3931
    %v4060 = vpop.f32.mrf.mxu0
    %v4061 = vadd.f32 0.0, %v4060
    %v4062 = vpop.f32.mrf.mxu0
    %v4063 = vadd.f32 0.0, %v4062
    %4064 = vmatmul.bf16.gmra.mxu0 %v3932
    %v4065 = vpop.f32.mrf.mxu0
    %v4066 = vadd.f32 0.0, %v4065
    %v4067 = vpop.f32.mrf.mxu0
    %v4068 = vadd.f32 0.0, %v4067
    %4069 = vmatmul.bf16.gmra.mxu0 %v3933
    %v4070 = vpop.f32.mrf.mxu0
    %v4071 = vadd.f32 0.0, %v4070
    %v4072 = vpop.f32.mrf.mxu0
    %v4073 = vadd.f32 0.0, %v4072
    %4074 = vmatmul.bf16.gmra.mxu0 %v3934
    %v4075 = vpop.f32.mrf.mxu0
    %v4076 = vadd.f32 0.0, %v4075
    %v4077 = vpop.f32.mrf.mxu0
    %v4078 = vadd.f32 0.0, %v4077
    %4079 = vmatmul.bf16.gmra.mxu0 %v3935
    %v4080 = vpop.f32.mrf.mxu0
    %v4081 = vadd.f32 0.0, %v4080
    %v4082 = vpop.f32.mrf.mxu0
    %v4083 = vadd.f32 0.0, %v4082
    %4084 = vmatmul.bf16.gmra.mxu0 %v3936
    %v4085 = vpop.f32.mrf.mxu0
    %v4086 = vadd.f32 0.0, %v4085
    %v4087 = vpop.f32.mrf.mxu0
    %v4088 = vadd.f32 0.0, %v4087
    %4089 = vmatmul.bf16.gmra.mxu0 %v3937
    %v4090 = vpop.f32.mrf.mxu0
    %v4091 = vadd.f32 0.0, %v4090
    %v4092 = vpop.f32.mrf.mxu0
    %v4093 = vadd.f32 0.0, %v4092
    %4094 = vmatmul.bf16.gmra.mxu0 %v3938
    %v4095 = vpop.f32.mrf.mxu0
    %v4096 = vadd.f32 0.0, %v4095
    %v4097 = vpop.f32.mrf.mxu0
    %v4098 = vadd.f32 0.0, %v4097
    %4099 = vmatmul.bf16.gmra.mxu0 %v3939
    %v4100 = vpop.f32.mrf.mxu0
    %v4101 = vadd.f32 0.0, %v4100
    %v4102 = vpop.f32.mrf.mxu0
    %v4103 = vadd.f32 0.0, %v4102
    %4104 = vmatmul.bf16.gmra.mxu0 %v3940
    %v4105 = vpop.f32.mrf.mxu0
    %v4106 = vadd.f32 0.0, %v4105
    %v4107 = vpop.f32.mrf.mxu0
    %v4108 = vadd.f32 0.0, %v4107
    %4109 = vmatmul.bf16.gmra.mxu0 %v3941
    %v4110 = vpop.f32.mrf.mxu0
    %v4111 = vadd.f32 0.0, %v4110
    %v4112 = vpop.f32.mrf.mxu0
    %v4113 = vadd.f32 0.0, %v4112
    %4114 = vmatmul.bf16.gmra.mxu0 %v3942
    %v4115 = vpop.f32.mrf.mxu0
    %v4116 = vadd.f32 0.0, %v4115
    %v4117 = vpop.f32.mrf.mxu0
    %v4118 = vadd.f32 0.0, %v4117
    %4119 = vdwg.mxu0
    %4120 = vst [vmem:[#allocation18] sm:$0xff] %v4021
    %4121 = vst [vmem:[#allocation18 + $0x8] sm:$0xff] %v4023
    %4122 = vst [vmem:[#allocation18 + $0x10] sm:$0xff] %v4026
    %4123 = vst [vmem:[#allocation18 + $0x18] sm:$0xff] %v4028
    %4124 = vst [vmem:[#allocation18 + $0x20] sm:$0xff] %v4031
    %4125 = vst [vmem:[#allocation18 + $0x28] sm:$0xff] %v4033
    %4126 = vst [vmem:[#allocation18 + $0x30] sm:$0xff] %v4036
    %4127 = vst [vmem:[#allocation18 + $0x38] sm:$0xff] %v4038
    %4128 = vst [vmem:[#allocation18 + $0x40] sm:$0xff] %v4041
    %4129 = vst [vmem:[#allocation18 + $0x48] sm:$0xff] %v4043
    %4130 = vst [vmem:[#allocation18 + $0x50] sm:$0xff] %v4046
    %4131 = vst [vmem:[#allocation18 + $0x58] sm:$0xff] %v4048
    %4132 = vst [vmem:[#allocation18 + $0x60] sm:$0xff] %v4051
    %4133 = vst [vmem:[#allocation18 + $0x68] sm:$0xff] %v4053
    %4134 = vst [vmem:[#allocation18 + $0x70] sm:$0xff] %v4056
    %4135 = vst [vmem:[#allocation18 + $0x78] sm:$0xff] %v4058
    %4136 = vst [vmem:[#allocation18 + $0x80] sm:$0xff] %v4061
    %4137 = vst [vmem:[#allocation18 + $0x88] sm:$0xff] %v4063
    %4138 = vst [vmem:[#allocation18 + $0x90] sm:$0xff] %v4066
    %4139 = vst [vmem:[#allocation18 + $0x98] sm:$0xff] %v4068
    %4140 = vst [vmem:[#allocation18 + $0xa0] sm:$0xff] %v4071
    %4141 = vst [vmem:[#allocation18 + $0xa8] sm:$0xff] %v4073
    %4142 = vst [vmem:[#allocation18 + $0xb0] sm:$0xff] %v4076
    %4143 = vst [vmem:[#allocation18 + $0xb8] sm:$0xff] %v4078
    %4144 = vst [vmem:[#allocation18 + $0xc0] sm:$0xff] %v4081
    %4145 = vst [vmem:[#allocation18 + $0xc8] sm:$0xff] %v4083
    %4146 = vst [vmem:[#allocation18 + $0xd0] sm:$0xff] %v4086
    %4147 = vst [vmem:[#allocation18 + $0xd8] sm:$0xff] %v4088
    %4148 = vst [vmem:[#allocation18 + $0xe0] sm:$0xff] %v4091
    %4149 = vst [vmem:[#allocation18 + $0xe8] sm:$0xff] %v4093
    %4150 = vst [vmem:[#allocation18 + $0xf0] sm:$0xff] %v4096
    %4151 = vst [vmem:[#allocation18 + $0xf8] sm:$0xff] %v4098
    %4152 = vst [vmem:[#allocation18 + $0x100] sm:$0xff] %v4101
    %4153 = vst [vmem:[#allocation18 + $0x108] sm:$0xff] %v4103
    %4154 = vst [vmem:[#allocation18 + $0x110] sm:$0xff] %v4106
    %4155 = vst [vmem:[#allocation18 + $0x118] sm:$0xff] %v4108
    %4156 = vst [vmem:[#allocation18 + $0x120] sm:$0xff] %v4111
    %4157 = vst [vmem:[#allocation18 + $0x128] sm:$0xff] %v4113
    %4158 = vst [vmem:[#allocation18 + $0x130] sm:$0xff] %v4116
    %4159 = vst [vmem:[#allocation18 + $0x138] sm:$0xff] %v4118
    // Predicated region
    $region42: #{tpu_custom_call.1} parent=1 // pred_check
      _
    $region43: #{tpu_custom_call.1} parent=1 // pred_check_branch
      %4161 = sbr.rel (0) target = $region45
    $region44: #{tpu_custom_call.1} parent=1 // pred_region
      %4163 = vsyncadd [#allocation12], 0
      %s4164 = sshll.u32 [#allocation18], 4
      %s4165 = int_to_ptr.vmem [resolvable:$true] %s4164
      %s4166 = sshll.u32 %s6, 4
      %s4167 = int_to_ptr.hbm [resolvable:$true] %s4166
      %4172 = dma.vmem_to_hbm [thread:$0]  %s4165, 5120, %s4167, [#allocation12], 128, 128, 8
    $region45: #{tpu_custom_call.1} parent=1 // pred_fallthru
      _
    // Predicated region
    $region46: #{tpu_custom_call.1} parent=1 // pred_check
      _
    $region47: #{tpu_custom_call.1} parent=1 // pred_check_branch
      %4174 = sbr.rel (0) target = $region49
    $region48: #{tpu_custom_call.1} parent=1 // pred_region
      %4176 = dma.done [#allocation12], 5120
    $region49: #{tpu_custom_call.1} parent=1 // pred_fallthru
      _
    %4177 = vsyncpa [#allocation11], 1
    %4178 = vsyncpa [#allocation14], 1
    %4179 = vsyncpa [#allocation17], 1
    %4180 = vsyncpa [#allocation12], 1

</llo_original>
